<compile_context>
chip_gen: v7x
topology: tpu7x:2x2x1
jax: 0.10.0
libtpu: 0.0.40
codegen_flags: <defaults>
</compile_context>

<pallas_src>
import jax
import jax.numpy as jnp
import numpy as np
from jax.experimental import pallas as pl
from jax.experimental.pallas import tpu as pltpu

# ---------------- problem sizes (small, consistent with the module) -------------
B = 2              # batch
C_IN = 3           # RGB input channels
H = W = 16         # spatial
HW = H * W         # 256
C_FEAT = 32        # args.features_dim (backbone output channels)
FC_OUT = 64        # args.fc_output_dim
FC_PAD = 128       # lane-dense padded output width
KH = KW = 3        # backbone conv kernel
HP, WP = H + 2, W + 2          # spatially zero-padded image (SAME conv): 18 x 18
IMG_PIX = HP * WP              # 324 flattened padded pixels per image
IMG_STRIDE = 384               # per-image lane stride (3 * 128, aligned -> free views)
NLANES = B * IMG_STRIDE        # 768 -- lane width of all the heavy work
XPAD = 32                      # guard lanes each side for the shifted tap windows
XLANES = NLANES + 2 * XPAD     # 832
K_SUB = 8                      # input rows: 3 channels + 1 ones(bias) + 4 zero pad
BPAD = 8                       # batch rows padded to a full sublane tile

GEM_P = 3.0
GEM_EPS = 1e-6
L2_EPS = 1e-12


# ------------------------------- Pallas kernel ----------------------------------
def geoloc_kernel(x_ref, wct_ref, mask_ref, wf_ref, bf_ref, o_ref):
    """Single invocation == whole batch (no grid).

    x_ref    : (K_SUB, XLANES)        padded/flattened image rows (+ ones bias row)
    wct_ref  : (9, C_FEAT, K_SUB)     tap-major conv weights, bias folded in tap 4
    mask_ref : (1, NLANES)            1.0 on real-pixel columns, 0.0 on padding columns
    wf_ref   : (C_FEAT, FC_PAD)       final Linear weight (transposed, lane-padded)
    bf_ref   : (1, FC_PAD)            final Linear bias (lane-padded)
    o_ref    : (B, FC_PAD)            binarized descriptor (+1 / -1), lane-dense
    """
    # --- backbone: 3x3 SAME conv as 9 shifted-window tap matmuls (fused im2col) ---
    # TODO(synk): the pretrained torchvision resnet18-conv4 trunk (many conv/BN blocks,
    # downloaded weights) has no clean in-script equivalent; it is represented by this
    # single 3x3 conv + ReLU producing features_dim channels.
    acc = None
    for t in range(KH * KW):                              # static unroll, 9 taps
        kh, kw = t // KW, t % KW
        shift = (kh - 1) * WP + (kw - 1)
        start = XPAD + shift
        xs = x_ref[:, start:start + NLANES]               # (K_SUB, NLANES) static slice
        contrib = jnp.dot(wct_ref[t], xs,
                          preferred_element_type=jnp.float32)   # (C_FEAT, NLANES)
        acc = contrib if acc is None else acc + contrib
    feat = jnp.maximum(acc, 0.0)                          # ReLU (bias already folded)

    # --- aggregation: GeM pooling (p=3, eps=1e-6) over the real spatial columns ---
    fp = jnp.maximum(feat, GEM_EPS)
    fp = fp * fp * fp                                     # x^p, p = 3
    fp = fp * mask_ref[...]                               # zero the padding columns
    cols = [jnp.sum(fp[:, b * IMG_STRIDE:(b + 1) * IMG_STRIDE],
                    axis=-1, keepdims=True)               # (C_FEAT, 1) per image
            for b in range(B)]
    cols.append(jnp.ones((C_FEAT, BPAD - B), jnp.float32))     # pad batch to 8 rows
    pooled_cb = jnp.concatenate(cols, axis=1) * (1.0 / HW)     # (C_FEAT, BPAD) mean
    pooled_cb = jnp.exp(jnp.log(pooled_cb) * (1.0 / GEM_P))    # x^(1/p), pooled > 0

    # --- L2Norm after pool (F.normalize over channels), rsqrt -> EUP ---
    pooled_bt = jnp.transpose(pooled_cb, (1, 0))               # (BPAD, C_FEAT)
    ssq = jnp.sum(pooled_bt * pooled_bt, axis=-1, keepdims=True)
    pooled_bt = pooled_bt * jax.lax.rsqrt(jnp.maximum(ssq, L2_EPS * L2_EPS))

    # --- Linear(features_dim -> fc_output_dim) on the MXU ---
    out = jnp.dot(pooled_bt, wf_ref[...],
                  preferred_element_type=jnp.float32) + bf_ref[...]   # (BPAD, FC_PAD)

    # NOTE: the module's post-Linear L2Norm and the forward-tail F.normalize are
    # positive per-row rescalings -> sign-invariant w.r.t. STE_binary, so elided.
    # --- STE_binary forward: (x >= 0) * +1 + (x < 0) * -1 ---
    o_ref[...] = jnp.where(out[:B, :] >= 0.0, 1.0, -1.0).astype(o_ref.dtype)


# ------------------------------- wrapper (glue) ----------------------------------
@jax.jit
def geolocalization_net(x_nchw, conv_w, conv_b, fc_w, fc_b):
    """x_nchw: (B, C_IN, H, W) f32.  conv_w: (C_FEAT, C_IN, 3, 3) (PyTorch layout).
    conv_b: (C_FEAT,).  fc_w: (FC_OUT, C_FEAT) (nn.Linear layout).  fc_b: (FC_OUT,).
    Returns (B, FC_OUT) in {+1, -1}."""
    f32 = jnp.float32

    # ---- input layout plumbing only (tiny, < 30 KiB total) ----
    xp = jnp.pad(x_nchw, ((0, 0), (0, 0), (1, 1), (1, 1)))             # (B,3,18,18)
    xf = jnp.transpose(xp, (1, 0, 2, 3)).reshape(C_IN, B, IMG_PIX)     # (3,B,324)
    xf = jnp.pad(xf, ((0, 0), (0, 0), (0, IMG_STRIDE - IMG_PIX)))      # (3,B,384)
    xf = xf.reshape(C_IN, NLANES)                                      # (3,768)
    rows = jnp.concatenate(
        [xf,
         jnp.ones((1, NLANES), f32),                                   # bias ones row
         jnp.zeros((K_SUB - C_IN - 1, NLANES), f32)], axis=0)          # (8,768)
    x_ext = jnp.pad(rows, ((0, 0), (XPAD, XPAD)))                      # (8,832)

    # tap-major conv weights, contraction padded to 8; conv bias folded into the
    # center tap's column C_IN (pairs with the all-ones input row).
    wct = jnp.transpose(conv_w, (2, 3, 0, 1)).reshape(KH * KW, C_FEAT, C_IN)
    wct = jnp.pad(wct, ((0, 0), (0, 0), (0, K_SUB - C_IN)))            # (9,32,8)
    wct = wct.at[(KH * KW) // 2, :, C_IN].set(conv_b)

    # constant mask of real-pixel columns in the padded/flattened lane layout
    q = jnp.arange(NLANES)
    p = q % IMG_STRIDE
    r, c = p // WP, p % WP
    real = (p < IMG_PIX) & (r >= 1) & (r <= H) & (c >= 1) & (c <= W)
    mask = real.astype(f32).reshape(1, NLANES)

    wf = jnp.pad(fc_w.T, ((0, 0), (0, FC_PAD - FC_OUT)))               # (32,128)
    bf = jnp.pad(fc_b.reshape(1, FC_OUT), ((0, 0), (0, FC_PAD - FC_OUT)))

    out_pad = pl.pallas_call(
        geoloc_kernel,
        out_shape=jax.ShapeDtypeStruct((B, FC_PAD), jnp.float32),
        in_specs=[pl.BlockSpec(memory_space=pltpu.MemorySpace.VMEM)] * 5,
        out_specs=pl.BlockSpec(memory_space=pltpu.MemorySpace.VMEM),
    )(x_ext, wct, mask, wf, bf)
    return out_pad[:, :FC_OUT]                                          # (B, 64)


# ------------------------------- pure-JAX reference ------------------------------
def reference(x_nchw, conv_w, conv_b, fc_w, fc_b):
    """PyTorch-faithful chain (keeps all three normalizations)."""
    xp = jnp.pad(x_nchw, ((0, 0), (0, 0), (1, 1), (1, 1)))
    taps = [xp[:, :, kh:kh + H, kw:kw + W] for kh in range(KH) for kw in range(KW)]
    patches = jnp.stack(taps, axis=2).reshape(B, C_IN * KH * KW, HW)    # (B,27,256)
    wc = conv_w.reshape(C_FEAT, C_IN * KH * KW)                         # same ordering
    feat = jnp.einsum('ok,bkn->bon', wc, patches) + conv_b[None, :, None]
    feat = jnp.maximum(feat, 0.0)
    fp = jnp.maximum(feat, GEM_EPS) ** GEM_P
    pooled = jnp.mean(fp, axis=-1) ** (1.0 / GEM_P)                     # (B, C_FEAT)
    pooled = pooled / jnp.maximum(
        jnp.linalg.norm(pooled, axis=-1, keepdims=True), L2_EPS)
    out = pooled @ fc_w.T + fc_b[None, :]
    out = out / jnp.maximum(jnp.linalg.norm(out, axis=-1, keepdims=True), L2_EPS)
    out = out / jnp.maximum(jnp.linalg.norm(out, axis=-1, keepdims=True), L2_EPS)
    return jnp.where(out >= 0.0, 1.0, -1.0)


# ------------------------------------ main ---------------------------------------
if __name__ == "__main__":
    key = jax.random.PRNGKey(0)
    k_x, k_cw, k_cb, k_fw, k_fb = jax.random.split(key, 5)

    x = jax.random.normal(k_x, (B, C_IN, H, W), dtype=jnp.float32)
    conv_w = 0.1 * jax.random.normal(k_cw, (C_FEAT, C_IN, KH, KW), dtype=jnp.float32)
    conv_b = 0.01 * jax.random.normal(k_cb, (C_FEAT,), dtype=jnp.float32)
    fc_w = 0.1 * jax.random.normal(k_fw, (FC_OUT, C_FEAT), dtype=jnp.float32)
    fc_b = 0.01 * jax.random.normal(k_fb, (FC_OUT,), dtype=jnp.float32)

    out = geolocalization_net(x, conv_w, conv_b, fc_w, fc_b)
    out = jax.block_until_ready(out)

    # sanity: shape, binary values, and (soft) agreement with the pure-JAX reference
    assert out.shape == (B, FC_OUT), out.shape
    assert bool(jnp.all(jnp.abs(out) == 1.0)), "output must be +/-1"
    ref = np.asarray(reference(x, conv_w, conv_b, fc_w, fc_b))
    mismatch = np.mean(np.asarray(out) != ref)
    assert mismatch <= 0.05, f"too many sign mismatches vs reference: {mismatch}"

    print("KERNEL_OK")
</pallas_src>

<mosaic_0001>
module attributes {stable_mosaic.version = 11 : i64} {
  func.func @geoloc_kernel(%arg0: memref<8x832xf32, #tpu.memory_space<vmem>>, %arg1: memref<9x32x8xf32, #tpu.memory_space<vmem>>, %arg2: memref<1x768xf32, #tpu.memory_space<vmem>>, %arg3: memref<32x128xf32, #tpu.memory_space<vmem>>, %arg4: memref<1x128xf32, #tpu.memory_space<vmem>>, %arg5: memref<2x128xf32, #tpu.memory_space<vmem>>) attributes {dimension_semantics = [], scalar_prefetch = 0 : i64, scratch_operands = 0 : i64, tpu.core_type = #tpu.core_type<tc>} {
    %c0 = arith.constant 0 : index
    %c13 = arith.constant 13 : index
    %0 = vector.load %arg0[%c0, %c13] : memref<8x832xf32, #tpu.memory_space<vmem>>, vector<8x768xf32>
    %c0_0 = arith.constant 0 : index
    %c0_1 = arith.constant 0 : index
    %c0_2 = arith.constant 0 : index
    %1 = vector.load %arg1[%c0_0, %c0_1, %c0_2] : memref<9x32x8xf32, #tpu.memory_space<vmem>>, vector<1x32x8xf32>
    %2 = vector.shape_cast %1 : vector<1x32x8xf32> to vector<32x8xf32>
    %cst = arith.constant dense<0.000000e+00> : vector<32x768xf32>
    %3 = tpu.matmul %2, %0, %cst {dimension_numbers = #tpu.dot_dimension_numbers<[1], [0], [0], [1], [0, 0, 1, 1], [], []>} : vector<32x8xf32>, vector<8x768xf32>, vector<32x768xf32> -> vector<32x768xf32>
    %c0_3 = arith.constant 0 : index
    %c14 = arith.constant 14 : index
    %4 = vector.load %arg0[%c0_3, %c14] : memref<8x832xf32, #tpu.memory_space<vmem>>, vector<8x768xf32>
    %c1 = arith.constant 1 : index
    %c0_4 = arith.constant 0 : index
    %c0_5 = arith.constant 0 : index
    %5 = vector.load %arg1[%c1, %c0_4, %c0_5] : memref<9x32x8xf32, #tpu.memory_space<vmem>>, vector<1x32x8xf32>
    %6 = vector.shape_cast %5 : vector<1x32x8xf32> to vector<32x8xf32>
    %cst_6 = arith.constant dense<0.000000e+00> : vector<32x768xf32>
    %7 = tpu.matmul %6, %4, %cst_6 {dimension_numbers = #tpu.dot_dimension_numbers<[1], [0], [0], [1], [0, 0, 1, 1], [], []>} : vector<32x8xf32>, vector<8x768xf32>, vector<32x768xf32> -> vector<32x768xf32>
    %8 = arith.addf %3, %7 : vector<32x768xf32>
    %c0_7 = arith.constant 0 : index
    %c15 = arith.constant 15 : index
    %9 = vector.load %arg0[%c0_7, %c15] : memref<8x832xf32, #tpu.memory_space<vmem>>, vector<8x768xf32>
    %c2 = arith.constant 2 : index
    %c0_8 = arith.constant 0 : index
    %c0_9 = arith.constant 0 : index
    %10 = vector.load %arg1[%c2, %c0_8, %c0_9] : memref<9x32x8xf32, #tpu.memory_space<vmem>>, vector<1x32x8xf32>
    %11 = vector.shape_cast %10 : vector<1x32x8xf32> to vector<32x8xf32>
    %cst_10 = arith.constant dense<0.000000e+00> : vector<32x768xf32>
    %12 = tpu.matmul %11, %9, %cst_10 {dimension_numbers = #tpu.dot_dimension_numbers<[1], [0], [0], [1], [0, 0, 1, 1], [], []>} : vector<32x8xf32>, vector<8x768xf32>, vector<32x768xf32> -> vector<32x768xf32>
    %13 = arith.addf %8, %12 : vector<32x768xf32>
    %c0_11 = arith.constant 0 : index
    %c31 = arith.constant 31 : index
    %14 = vector.load %arg0[%c0_11, %c31] : memref<8x832xf32, #tpu.memory_space<vmem>>, vector<8x768xf32>
    %c3 = arith.constant 3 : index
    %c0_12 = arith.constant 0 : index
    %c0_13 = arith.constant 0 : index
    %15 = vector.load %arg1[%c3, %c0_12, %c0_13] : memref<9x32x8xf32, #tpu.memory_space<vmem>>, vector<1x32x8xf32>
    %16 = vector.shape_cast %15 : vector<1x32x8xf32> to vector<32x8xf32>
    %cst_14 = arith.constant dense<0.000000e+00> : vector<32x768xf32>
    %17 = tpu.matmul %16, %14, %cst_14 {dimension_numbers = #tpu.dot_dimension_numbers<[1], [0], [0], [1], [0, 0, 1, 1], [], []>} : vector<32x8xf32>, vector<8x768xf32>, vector<32x768xf32> -> vector<32x768xf32>
    %18 = arith.addf %13, %17 : vector<32x768xf32>
    %c0_15 = arith.constant 0 : index
    %c32 = arith.constant 32 : index
    %19 = vector.load %arg0[%c0_15, %c32] : memref<8x832xf32, #tpu.memory_space<vmem>>, vector<8x768xf32>
    %c4 = arith.constant 4 : index
    %c0_16 = arith.constant 0 : index
    %c0_17 = arith.constant 0 : index
    %20 = vector.load %arg1[%c4, %c0_16, %c0_17] : memref<9x32x8xf32, #tpu.memory_space<vmem>>, vector<1x32x8xf32>
    %21 = vector.shape_cast %20 : vector<1x32x8xf32> to vector<32x8xf32>
    %cst_18 = arith.constant dense<0.000000e+00> : vector<32x768xf32>
    %22 = tpu.matmul %21, %19, %cst_18 {dimension_numbers = #tpu.dot_dimension_numbers<[1], [0], [0], [1], [0, 0, 1, 1], [], []>} : vector<32x8xf32>, vector<8x768xf32>, vector<32x768xf32> -> vector<32x768xf32>
    %23 = arith.addf %18, %22 : vector<32x768xf32>
    %c0_19 = arith.constant 0 : index
    %c33 = arith.constant 33 : index
    %24 = vector.load %arg0[%c0_19, %c33] : memref<8x832xf32, #tpu.memory_space<vmem>>, vector<8x768xf32>
    %c5 = arith.constant 5 : index
    %c0_20 = arith.constant 0 : index
    %c0_21 = arith.constant 0 : index
    %25 = vector.load %arg1[%c5, %c0_20, %c0_21] : memref<9x32x8xf32, #tpu.memory_space<vmem>>, vector<1x32x8xf32>
    %26 = vector.shape_cast %25 : vector<1x32x8xf32> to vector<32x8xf32>
    %cst_22 = arith.constant dense<0.000000e+00> : vector<32x768xf32>
    %27 = tpu.matmul %26, %24, %cst_22 {dimension_numbers = #tpu.dot_dimension_numbers<[1], [0], [0], [1], [0, 0, 1, 1], [], []>} : vector<32x8xf32>, vector<8x768xf32>, vector<32x768xf32> -> vector<32x768xf32>
    %28 = arith.addf %23, %27 : vector<32x768xf32>
    %c0_23 = arith.constant 0 : index
    %c49 = arith.constant 49 : index
    %29 = vector.load %arg0[%c0_23, %c49] : memref<8x832xf32, #tpu.memory_space<vmem>>, vector<8x768xf32>
    %c6 = arith.constant 6 : index
    %c0_24 = arith.constant 0 : index
    %c0_25 = arith.constant 0 : index
    %30 = vector.load %arg1[%c6, %c0_24, %c0_25] : memref<9x32x8xf32, #tpu.memory_space<vmem>>, vector<1x32x8xf32>
    %31 = vector.shape_cast %30 : vector<1x32x8xf32> to vector<32x8xf32>
    %cst_26 = arith.constant dense<0.000000e+00> : vector<32x768xf32>
    %32 = tpu.matmul %31, %29, %cst_26 {dimension_numbers = #tpu.dot_dimension_numbers<[1], [0], [0], [1], [0, 0, 1, 1], [], []>} : vector<32x8xf32>, vector<8x768xf32>, vector<32x768xf32> -> vector<32x768xf32>
    %33 = arith.addf %28, %32 : vector<32x768xf32>
    %c0_27 = arith.constant 0 : index
    %c50 = arith.constant 50 : index
    %34 = vector.load %arg0[%c0_27, %c50] : memref<8x832xf32, #tpu.memory_space<vmem>>, vector<8x768xf32>
    %c7 = arith.constant 7 : index
    %c0_28 = arith.constant 0 : index
    %c0_29 = arith.constant 0 : index
    %35 = vector.load %arg1[%c7, %c0_28, %c0_29] : memref<9x32x8xf32, #tpu.memory_space<vmem>>, vector<1x32x8xf32>
    %36 = vector.shape_cast %35 : vector<1x32x8xf32> to vector<32x8xf32>
    %cst_30 = arith.constant dense<0.000000e+00> : vector<32x768xf32>
    %37 = tpu.matmul %36, %34, %cst_30 {dimension_numbers = #tpu.dot_dimension_numbers<[1], [0], [0], [1], [0, 0, 1, 1], [], []>} : vector<32x8xf32>, vector<8x768xf32>, vector<32x768xf32> -> vector<32x768xf32>
    %38 = arith.addf %33, %37 : vector<32x768xf32>
    %c0_31 = arith.constant 0 : index
    %c51 = arith.constant 51 : index
    %39 = vector.load %arg0[%c0_31, %c51] : memref<8x832xf32, #tpu.memory_space<vmem>>, vector<8x768xf32>
    %c8 = arith.constant 8 : index
    %c0_32 = arith.constant 0 : index
    %c0_33 = arith.constant 0 : index
    %40 = vector.load %arg1[%c8, %c0_32, %c0_33] : memref<9x32x8xf32, #tpu.memory_space<vmem>>, vector<1x32x8xf32>
    %41 = vector.shape_cast %40 : vector<1x32x8xf32> to vector<32x8xf32>
    %cst_34 = arith.constant dense<0.000000e+00> : vector<32x768xf32>
    %42 = tpu.matmul %41, %39, %cst_34 {dimension_numbers = #tpu.dot_dimension_numbers<[1], [0], [0], [1], [0, 0, 1, 1], [], []>} : vector<32x8xf32>, vector<8x768xf32>, vector<32x768xf32> -> vector<32x768xf32>
    %43 = arith.addf %38, %42 : vector<32x768xf32>
    %cst_35 = arith.constant 0.000000e+00 : f32
    %44 = vector.broadcast %cst_35 : f32 to vector<32x768xf32>
    %45 = arith.maximumf %43, %44 : vector<32x768xf32>
    %cst_36 = arith.constant 9.99999997E-7 : f32
    %46 = vector.broadcast %cst_36 : f32 to vector<32x768xf32>
    %47 = arith.maximumf %45, %46 : vector<32x768xf32>
    %48 = arith.mulf %47, %47 : vector<32x768xf32>
    %49 = arith.mulf %48, %47 : vector<32x768xf32>
    %c0_37 = arith.constant 0 : index
    %c0_38 = arith.constant 0 : index
    %50 = vector.load %arg2[%c0_37, %c0_38] : memref<1x768xf32, #tpu.memory_space<vmem>>, vector<1x768xf32>
    %51 = vector.broadcast %50 : vector<1x768xf32> to vector<32x768xf32>
    %52 = arith.mulf %49, %51 : vector<32x768xf32>
    %53 = vector.extract_strided_slice %52 {offsets = [0, 0], sizes = [32, 384], strides = [1, 1]} : vector<32x768xf32> to vector<32x384xf32>
    %cst_39 = arith.constant dense<0.000000e+00> : vector<32xf32>
    %54 = vector.multi_reduction <add>, %53, %cst_39 [1] : vector<32x384xf32> to vector<32xf32>
    %55 = vector.shape_cast %54 : vector<32xf32> to vector<32x1xf32>
    %56 = vector.extract_strided_slice %52 {offsets = [0, 384], sizes = [32, 384], strides = [1, 1]} : vector<32x768xf32> to vector<32x384xf32>
    %cst_40 = arith.constant dense<0.000000e+00> : vector<32xf32>
    %57 = vector.multi_reduction <add>, %56, %cst_40 [1] : vector<32x384xf32> to vector<32xf32>
    %58 = vector.shape_cast %57 : vector<32xf32> to vector<32x1xf32>
    %cst_41 = arith.constant 1.000000e+00 : f32
    %59 = vector.broadcast %cst_41 : f32 to vector<32x6xf32>
    %60 = tpu.concatenate %55, %58, %59 in 1 : vector<32x1xf32>, vector<32x1xf32>, vector<32x6xf32> -> vector<32x8xf32>
    %cst_42 = arith.constant 3.906250e-03 : f32
    %61 = vector.broadcast %cst_42 : f32 to vector<32x8xf32>
    %62 = arith.mulf %60, %61 : vector<32x8xf32>
    %63 = math.log %62 : vector<32x8xf32>
    %cst_43 = arith.constant 0.333333343 : f32
    %64 = vector.broadcast %cst_43 : f32 to vector<32x8xf32>
    %65 = arith.mulf %63, %64 : vector<32x8xf32>
    %66 = math.exp %65 : vector<32x8xf32>
    %67 = tpu.transpose %66, [1, 0] : vector<32x8xf32> -> vector<8x32xf32>
    %68 = arith.mulf %67, %67 : vector<8x32xf32>
    %cst_44 = arith.constant dense<0.000000e+00> : vector<8xf32>
    %69 = vector.multi_reduction <add>, %68, %cst_44 [1] : vector<8x32xf32> to vector<8xf32>
    %70 = vector.shape_cast %69 : vector<8xf32> to vector<8x1xf32>
    %cst_45 = arith.constant 1.000000e-24 : f32
    %71 = vector.broadcast %cst_45 : f32 to vector<8x1xf32>
    %72 = arith.maximumf %70, %71 : vector<8x1xf32>
    %73 = math.rsqrt %72 : vector<8x1xf32>
    %74 = vector.broadcast %73 : vector<8x1xf32> to vector<8x32xf32>
    %75 = arith.mulf %67, %74 : vector<8x32xf32>
    %c0_46 = arith.constant 0 : index
    %c0_47 = arith.constant 0 : index
    %76 = vector.load %arg3[%c0_46, %c0_47] : memref<32x128xf32, #tpu.memory_space<vmem>>, vector<32x128xf32>
    %cst_48 = arith.constant dense<0.000000e+00> : vector<8x128xf32>
    %77 = tpu.matmul %75, %76, %cst_48 {dimension_numbers = #tpu.dot_dimension_numbers<[1], [0], [0], [1], [0, 0, 1, 1], [], []>} : vector<8x32xf32>, vector<32x128xf32>, vector<8x128xf32> -> vector<8x128xf32>
    %c0_49 = arith.constant 0 : index
    %c0_50 = arith.constant 0 : index
    %78 = vector.load %arg4[%c0_49, %c0_50] : memref<1x128xf32, #tpu.memory_space<vmem>>, vector<1x128xf32>
    %79 = vector.broadcast %78 : vector<1x128xf32> to vector<8x128xf32>
    %80 = arith.addf %77, %79 : vector<8x128xf32>
    %81 = vector.extract_strided_slice %80 {offsets = [0, 0], sizes = [2, 128], strides = [1, 1]} : vector<8x128xf32> to vector<2x128xf32>
    %cst_51 = arith.constant 0.000000e+00 : f32
    %82 = vector.broadcast %cst_51 : f32 to vector<2x128xf32>
    %83 = arith.cmpf oge, %81, %82 : vector<2x128xf32>
    %cst_52 = arith.constant 1.000000e+00 : f32
    %cst_53 = arith.constant -1.000000e+00 : f32
    %84 = vector.broadcast %cst_52 : f32 to vector<2x128xf32>
    %85 = vector.broadcast %cst_53 : f32 to vector<2x128xf32>
    %86 = arith.select %83, %84, %85 : vector<2x128xi1>, vector<2x128xf32>
    %c0_54 = arith.constant 0 : index
    %c0_55 = arith.constant 0 : index
    %87 = vector.load %arg5[%c0_54, %c0_55] : memref<2x128xf32, #tpu.memory_space<vmem>>, vector<2x128xf32>
    tpu.vector_store %arg5[%c0_54, %c0_55], %86 {strides = array<i32>} : memref<2x128xf32, #tpu.memory_space<vmem>>, vector<2x128xf32>,
    return
  }
}

</mosaic_0001>

<llo_original>
// kernel: geolocalization_net.1
$region0: #{geolocalization_net.1}
  #allocation0 [shape = 'u32[]', space=smem, size = 0x4, offset = 0x4, fixed_abs, tag = 'smem constant byte address 0x4 - core index']
  #allocation1 [shape = 'u32[144,128]{1,0:T(1,128)}', space=vmem, size = 0x12000, scoped, tag = 'internal scratch']
  %s0 = inlined_call_operand.vmem [shape: f32[8,832], index: 0, kind: input, shape index: {}]
  %s1 = inlined_call_operand.vmem [shape: f32[9,32,8], index: 1, kind: input, shape index: {}]
  %s2 = inlined_call_operand.vmem [shape: f32[1,768], index: 2, kind: input, shape index: {}]
  %s3 = inlined_call_operand.vmem [shape: f32[32,128], index: 3, kind: input, shape index: {}]
  %s4 = inlined_call_operand.vmem [shape: f32[1,128], index: 4, kind: input, shape index: {}]
  %s5 = inlined_call_operand.hbm [shape: f32[2,128], index: 5, kind: output, shape index: {}]
  %s6 = sld [smem:[#allocation0]]
  $region30: #{geolocalization_net.1} parent=0
    _
  %s8 = ssub.s32 1, %s6
  %s9 = scalar_select 0, %s8, %s6
  $region1: #{geolocalization_net.1} parent=0
    #allocation2 [shape = 'u8[1024]{0}', space=vmem, size = 0x400, scoped, tag = 'output window, operand 0, single buffered']
    #allocation3 [shape = 's32[1]{0}', space=sflag, size = 0x4, scoped, tag = 'scoped memory for geolocalization_net.1']
    %10 = vsyncpa [#allocation3], 0
    // Predicated region
    $region2: #{geolocalization_net.1} parent=1 // pred_check
      _
    $region3: #{geolocalization_net.1} parent=1 // pred_check_branch
      %12 = sbr.rel (0) target = $region5
    $region4: #{geolocalization_net.1} parent=1 // pred_region
      _
    $region5: #{geolocalization_net.1} parent=1 // pred_fallthru
      _
    // Predicated region
    $region6: #{geolocalization_net.1} parent=1 // pred_check
      _
    $region7: #{geolocalization_net.1} parent=1 // pred_check_branch
      %14 = sbr.rel (0) target = $region9
    $region8: #{geolocalization_net.1} parent=1 // pred_region
      _
    $region9: #{geolocalization_net.1} parent=1 // pred_fallthru
      _
    // Predicated region
    $region10: #{geolocalization_net.1} parent=1 // pred_check
      _
    $region11: #{geolocalization_net.1} parent=1 // pred_check_branch
      %16 = sbr.rel (0) target = $region13
    $region12: #{geolocalization_net.1} parent=1 // pred_region
      _
    $region13: #{geolocalization_net.1} parent=1 // pred_fallthru
      _
    // Predicated region
    $region14: #{geolocalization_net.1} parent=1 // pred_check
      _
    $region15: #{geolocalization_net.1} parent=1 // pred_check_branch
      %18 = sbr.rel (0) target = $region17
    $region16: #{geolocalization_net.1} parent=1 // pred_region
      _
    $region17: #{geolocalization_net.1} parent=1 // pred_fallthru
      _
    // Predicated region
    $region18: #{geolocalization_net.1} parent=1 // pred_check
      _
    $region19: #{geolocalization_net.1} parent=1 // pred_check_branch
      %20 = sbr.rel (0) target = $region21
    $region20: #{geolocalization_net.1} parent=1 // pred_region
      _
    $region21: #{geolocalization_net.1} parent=1 // pred_fallthru
      _
    %v21 = vld [vmem:[%s0] sm:$0xff]
    %v22 = vld [vmem:[%s0 + $0x8] sm:$0xff]
    %v23 = vld [vmem:[%s0 + $0x10] sm:$0xff]
    %v24 = vld [vmem:[%s0 + $0x18] sm:$0xff]
    %v25 = vld [vmem:[%s0 + $0x20] sm:$0xff]
    %v26 = vld [vmem:[%s0 + $0x28] sm:$0xff]
    %v27 = vld [vmem:[%s0 + $0x30] sm:$0xff]
    %v28 = vld [vmem:[%s1] sm:$0xff]
    %v29 = vld [vmem:[%s1 + $0x8] sm:$0xff]
    %v30 = vld [vmem:[%s1 + $0x10] sm:$0xff]
    %v31 = vld [vmem:[%s1 + $0x18] sm:$0xff]
    %s32 = scalar_lea.vmem %s1, 32
    %v33 = vld [vmem:[%s32] sm:$0xff]
    %v34 = vld [vmem:[%s32 + $0x8] sm:$0xff]
    %v35 = vld [vmem:[%s32 + $0x10] sm:$0xff]
    %v36 = vld [vmem:[%s32 + $0x18] sm:$0xff]
    %44 = vrot.lane.b32.xlu0 %v21, 114
    %v45 = vpop.permute.xlu0 %44
    %46 = vrot.lane.b32.xlu0 %v22, 114
    %v47 = vpop.permute.xlu0 %46
    %48 = vrot.lane.b32.xlu0 %v23, 114
    %v49 = vpop.permute.xlu0 %48
    %50 = vrot.lane.b32.xlu0 %v24, 114
    %v51 = vpop.permute.xlu0 %50
    %52 = vrot.lane.b32.xlu0 %v25, 114
    %v53 = vpop.permute.xlu0 %52
    %54 = vrot.lane.b32.xlu0 %v26, 114
    %v55 = vpop.permute.xlu0 %54
    %56 = vrot.lane.b32.xlu0 %v27, 114
    %v57 = vpop.permute.xlu0 %56
    %vm58 = vcmask 932864
    %v59 = vsel %vm58, %v45, %v47
    %v60 = vsel %vm58, %v47, %v49
    %v61 = vsel %vm58, %v49, %v51
    %v62 = vsel %vm58, %v51, %v53
    %v63 = vsel %vm58, %v53, %v55
    %v64 = vsel %vm58, %v55, %v57
    %vm71 = vcmask 64512
    %v73 = vsel %vm71, %v33, 0
    %v76 = vsel %vm71, %v34, 0
    %v79 = vsel %vm71, %v35, 0
    %v82 = vsel %vm71, %v36, 0
    %84 = vmatprep.subr.mxu0 %v60
    %85 = vmatpush1.msra.mxu0 %v59
    %86 = vmatprep.subr.mxu0 0.0
    %87 = vmatpush1.msra.mxu0 0.0
    %88 = vmatprep.subr.mxu0 0.0
    %89 = vmatpush1.msra.mxu0 0.0
    %90 = vmatprep.subr.mxu0 0.0
    %91 = vmatpush1.msra.mxu0 0.0
    %92 = vmatprep.subr.mxu0 0.0
    %93 = vmatpush1.msra.mxu0 0.0
    %94 = vmatprep.subr.mxu0 0.0
    %95 = vmatpush1.msra.mxu0 0.0
    %96 = vmatprep.subr.mxu0 0.0
    %97 = vmatpush1.msra.mxu0 0.0
    %98 = vmatprep.subr.mxu0 0.0
    %99 = vmatpush1.msra.mxu0 0.0
    %100 = vmatprep.subr.mxu0 0.0
    %101 = vmatpush1.msra.mxu0 0.0
    %102 = vmatprep.subr.mxu0 0.0
    %103 = vmatpush1.msra.mxu0 0.0
    %104 = vmatprep.subr.mxu0 0.0
    %105 = vmatpush1.msra.mxu0 0.0
    %106 = vmatprep.subr.mxu0 0.0
    %107 = vmatpush1.msra.mxu0 0.0
    %108 = vmatprep.subr.mxu0 0.0
    %109 = vmatpush1.msra.mxu0 0.0
    %110 = vmatprep.subr.mxu0 0.0
    %111 = vmatpush1.msra.mxu0 0.0
    %112 = vmatprep.subr.mxu0 0.0
    %113 = vmatpush1.msra.mxu0 0.0
    %114 = vmatprep.subr.mxu0 0.0
    %115 = vmatpush1.msra.mxu0 0.0
    %116 = vmatprep.subr.mxu0 0.0
    %117 = vmatpush1.msra.mxu0 0.0
    %118 = vmatprep.subr.mxu0 0.0
    %119 = vmatpush1.msra.mxu0 0.0
    %120 = vmatprep.subr.mxu0 0.0
    %121 = vmatpush1.msra.mxu0 0.0
    %122 = vmatprep.subr.mxu0 0.0
    %123 = vmatpush1.msra.mxu0 0.0
    %124 = vmatprep.subr.mxu0 0.0
    %125 = vmatpush1.msra.mxu0 0.0
    %126 = vmatprep.subr.mxu0 0.0
    %127 = vmatpush1.msra.mxu0 0.0
    %128 = vmatprep.subr.mxu0 0.0
    %129 = vmatpush1.msra.mxu0 0.0
    %130 = vmatprep.subr.mxu0 0.0
    %131 = vmatpush1.msra.mxu0 0.0
    %132 = vmatprep.subr.mxu0 0.0
    %133 = vmatpush1.msra.mxu0 0.0
    %134 = vmatprep.subr.mxu0 0.0
    %135 = vmatpush1.msra.mxu0 0.0
    %136 = vmatprep.subr.mxu0 0.0
    %137 = vmatpush1.msra.mxu0 0.0
    %138 = vmatprep.subr.mxu0 0.0
    %139 = vmatpush1.msra.mxu0 0.0
    %140 = vmatprep.subr.mxu0 0.0
    %141 = vmatpush1.msra.mxu0 0.0
    %142 = vmatprep.subr.mxu0 0.0
    %143 = vmatpush1.msra.mxu0 0.0
    %144 = vmatprep.subr.mxu0 0.0
    %145 = vmatpush1.msra.mxu0 0.0
    %146 = vmatprep.subr.mxu0 0.0
    %147 = vmatpush1.msra.mxu0 0.0
    %148 = vmatprep.mubr.f32.mxu0 0.0
    %149 = vmatmul.mubr.f32.gmra.mrb[0].mxu0 %v73
    %v150 = vpop.f32.mrb[0].mxu0
    %v151 = vadd.f32 0.0, %v150
    %v152 = vpop.f32.mrb[0].mxu0
    %v153 = vadd.f32 0.0, %v152
    %154 = vmatprep.mubr.f32.mxu0 0.0
    %155 = vmatmul.mubr.f32.gmra.mrb[0].mxu0 %v76
    %v156 = vpop.f32.mrb[0].mxu0
    %v157 = vadd.f32 0.0, %v156
    %v158 = vpop.f32.mrb[0].mxu0
    %v159 = vadd.f32 0.0, %v158
    %160 = vmatprep.mubr.f32.mxu0 0.0
    %161 = vmatmul.mubr.f32.gmra.mrb[0].mxu0 %v79
    %v162 = vpop.f32.mrb[0].mxu0
    %v163 = vadd.f32 0.0, %v162
    %v164 = vpop.f32.mrb[0].mxu0
    %v165 = vadd.f32 0.0, %v164
    %166 = vmatprep.mubr.f32.mxu0 0.0
    %167 = vmatmul.mubr.f32.gmra.mrb[0].mxu0 %v82
    %v168 = vpop.f32.mrb[0].mxu0
    %v169 = vadd.f32 0.0, %v168
    %v170 = vpop.f32.mrb[0].mxu0
    %v171 = vadd.f32 0.0, %v170
    %172 = vdwg.mxu0
    %173 = vmatprep.subr.mxu0 %v62
    %174 = vmatpush1.msra.mxu0 %v61
    %175 = vmatprep.subr.mxu0 0.0
    %176 = vmatpush1.msra.mxu0 0.0
    %177 = vmatprep.subr.mxu0 0.0
    %178 = vmatpush1.msra.mxu0 0.0
    %179 = vmatprep.subr.mxu0 0.0
    %180 = vmatpush1.msra.mxu0 0.0
    %181 = vmatprep.subr.mxu0 0.0
    %182 = vmatpush1.msra.mxu0 0.0
    %183 = vmatprep.subr.mxu0 0.0
    %184 = vmatpush1.msra.mxu0 0.0
    %185 = vmatprep.subr.mxu0 0.0
    %186 = vmatpush1.msra.mxu0 0.0
    %187 = vmatprep.subr.mxu0 0.0
    %188 = vmatpush1.msra.mxu0 0.0
    %189 = vmatprep.subr.mxu0 0.0
    %190 = vmatpush1.msra.mxu0 0.0
    %191 = vmatprep.subr.mxu0 0.0
    %192 = vmatpush1.msra.mxu0 0.0
    %193 = vmatprep.subr.mxu0 0.0
    %194 = vmatpush1.msra.mxu0 0.0
    %195 = vmatprep.subr.mxu0 0.0
    %196 = vmatpush1.msra.mxu0 0.0
    %197 = vmatprep.subr.mxu0 0.0
    %198 = vmatpush1.msra.mxu0 0.0
    %199 = vmatprep.subr.mxu0 0.0
    %200 = vmatpush1.msra.mxu0 0.0
    %201 = vmatprep.subr.mxu0 0.0
    %202 = vmatpush1.msra.mxu0 0.0
    %203 = vmatprep.subr.mxu0 0.0
    %204 = vmatpush1.msra.mxu0 0.0
    %205 = vmatprep.subr.mxu0 0.0
    %206 = vmatpush1.msra.mxu0 0.0
    %207 = vmatprep.subr.mxu0 0.0
    %208 = vmatpush1.msra.mxu0 0.0
    %209 = vmatprep.subr.mxu0 0.0
    %210 = vmatpush1.msra.mxu0 0.0
    %211 = vmatprep.subr.mxu0 0.0
    %212 = vmatpush1.msra.mxu0 0.0
    %213 = vmatprep.subr.mxu0 0.0
    %214 = vmatpush1.msra.mxu0 0.0
    %215 = vmatprep.subr.mxu0 0.0
    %216 = vmatpush1.msra.mxu0 0.0
    %217 = vmatprep.subr.mxu0 0.0
    %218 = vmatpush1.msra.mxu0 0.0
    %219 = vmatprep.subr.mxu0 0.0
    %220 = vmatpush1.msra.mxu0 0.0
    %221 = vmatprep.subr.mxu0 0.0
    %222 = vmatpush1.msra.mxu0 0.0
    %223 = vmatprep.subr.mxu0 0.0
    %224 = vmatpush1.msra.mxu0 0.0
    %225 = vmatprep.subr.mxu0 0.0
    %226 = vmatpush1.msra.mxu0 0.0
    %227 = vmatprep.subr.mxu0 0.0
    %228 = vmatpush1.msra.mxu0 0.0
    %229 = vmatprep.subr.mxu0 0.0
    %230 = vmatpush1.msra.mxu0 0.0
    %231 = vmatprep.subr.mxu0 0.0
    %232 = vmatpush1.msra.mxu0 0.0
    %233 = vmatprep.subr.mxu0 0.0
    %234 = vmatpush1.msra.mxu0 0.0
    %235 = vmatprep.subr.mxu0 0.0
    %236 = vmatpush1.msra.mxu0 0.0
    %237 = vmatprep.mubr.f32.mxu0 0.0
    %238 = vmatmul.mubr.f32.gmra.mrb[0].mxu0 %v73
    %v239 = vpop.f32.mrb[0].mxu0
    %v240 = vadd.f32 0.0, %v239
    %v241 = vpop.f32.mrb[0].mxu0
    %v242 = vadd.f32 0.0, %v241
    %243 = vmatprep.mubr.f32.mxu0 0.0
    %244 = vmatmul.mubr.f32.gmra.mrb[0].mxu0 %v76
    %v245 = vpop.f32.mrb[0].mxu0
    %v246 = vadd.f32 0.0, %v245
    %v247 = vpop.f32.mrb[0].mxu0
    %v248 = vadd.f32 0.0, %v247
    %249 = vmatprep.mubr.f32.mxu0 0.0
    %250 = vmatmul.mubr.f32.gmra.mrb[0].mxu0 %v79
    %v251 = vpop.f32.mrb[0].mxu0
    %v252 = vadd.f32 0.0, %v251
    %v253 = vpop.f32.mrb[0].mxu0
    %v254 = vadd.f32 0.0, %v253
    %255 = vmatprep.mubr.f32.mxu0 0.0
    %256 = vmatmul.mubr.f32.gmra.mrb[0].mxu0 %v82
    %v257 = vpop.f32.mrb[0].mxu0
    %v258 = vadd.f32 0.0, %v257
    %v259 = vpop.f32.mrb[0].mxu0
    %v260 = vadd.f32 0.0, %v259
    %261 = vdwg.mxu0
    %262 = vmatprep.subr.mxu0 %v64
    %263 = vmatpush1.msra.mxu0 %v63
    %264 = vmatprep.subr.mxu0 0.0
    %265 = vmatpush1.msra.mxu0 0.0
    %266 = vmatprep.subr.mxu0 0.0
    %267 = vmatpush1.msra.mxu0 0.0
    %268 = vmatprep.subr.mxu0 0.0
    %269 = vmatpush1.msra.mxu0 0.0
    %270 = vmatprep.subr.mxu0 0.0
    %271 = vmatpush1.msra.mxu0 0.0
    %272 = vmatprep.subr.mxu0 0.0
    %273 = vmatpush1.msra.mxu0 0.0
    %274 = vmatprep.subr.mxu0 0.0
    %275 = vmatpush1.msra.mxu0 0.0
    %276 = vmatprep.subr.mxu0 0.0
    %277 = vmatpush1.msra.mxu0 0.0
    %278 = vmatprep.subr.mxu0 0.0
    %279 = vmatpush1.msra.mxu0 0.0
    %280 = vmatprep.subr.mxu0 0.0
    %281 = vmatpush1.msra.mxu0 0.0
    %282 = vmatprep.subr.mxu0 0.0
    %283 = vmatpush1.msra.mxu0 0.0
    %284 = vmatprep.subr.mxu0 0.0
    %285 = vmatpush1.msra.mxu0 0.0
    %286 = vmatprep.subr.mxu0 0.0
    %287 = vmatpush1.msra.mxu0 0.0
    %288 = vmatprep.subr.mxu0 0.0
    %289 = vmatpush1.msra.mxu0 0.0
    %290 = vmatprep.subr.mxu0 0.0
    %291 = vmatpush1.msra.mxu0 0.0
    %292 = vmatprep.subr.mxu0 0.0
    %293 = vmatpush1.msra.mxu0 0.0
    %294 = vmatprep.subr.mxu0 0.0
    %295 = vmatpush1.msra.mxu0 0.0
    %296 = vmatprep.subr.mxu0 0.0
    %297 = vmatpush1.msra.mxu0 0.0
    %298 = vmatprep.subr.mxu0 0.0
    %299 = vmatpush1.msra.mxu0 0.0
    %300 = vmatprep.subr.mxu0 0.0
    %301 = vmatpush1.msra.mxu0 0.0
    %302 = vmatprep.subr.mxu0 0.0
    %303 = vmatpush1.msra.mxu0 0.0
    %304 = vmatprep.subr.mxu0 0.0
    %305 = vmatpush1.msra.mxu0 0.0
    %306 = vmatprep.subr.mxu0 0.0
    %307 = vmatpush1.msra.mxu0 0.0
    %308 = vmatprep.subr.mxu0 0.0
    %309 = vmatpush1.msra.mxu0 0.0
    %310 = vmatprep.subr.mxu0 0.0
    %311 = vmatpush1.msra.mxu0 0.0
    %312 = vmatprep.subr.mxu0 0.0
    %313 = vmatpush1.msra.mxu0 0.0
    %314 = vmatprep.subr.mxu0 0.0
    %315 = vmatpush1.msra.mxu0 0.0
    %316 = vmatprep.subr.mxu0 0.0
    %317 = vmatpush1.msra.mxu0 0.0
    %318 = vmatprep.subr.mxu0 0.0
    %319 = vmatpush1.msra.mxu0 0.0
    %320 = vmatprep.subr.mxu0 0.0
    %321 = vmatpush1.msra.mxu0 0.0
    %322 = vmatprep.subr.mxu0 0.0
    %323 = vmatpush1.msra.mxu0 0.0
    %324 = vmatprep.subr.mxu0 0.0
    %325 = vmatpush1.msra.mxu0 0.0
    %326 = vmatprep.mubr.f32.mxu0 0.0
    %327 = vmatmul.mubr.f32.gmra.mrb[0].mxu0 %v73
    %v328 = vpop.f32.mrb[0].mxu0
    %v329 = vadd.f32 0.0, %v328
    %v330 = vpop.f32.mrb[0].mxu0
    %v331 = vadd.f32 0.0, %v330
    %332 = vmatprep.mubr.f32.mxu0 0.0
    %333 = vmatmul.mubr.f32.gmra.mrb[0].mxu0 %v76
    %v334 = vpop.f32.mrb[0].mxu0
    %v335 = vadd.f32 0.0, %v334
    %v336 = vpop.f32.mrb[0].mxu0
    %v337 = vadd.f32 0.0, %v336
    %338 = vmatprep.mubr.f32.mxu0 0.0
    %339 = vmatmul.mubr.f32.gmra.mrb[0].mxu0 %v79
    %v340 = vpop.f32.mrb[0].mxu0
    %v341 = vadd.f32 0.0, %v340
    %v342 = vpop.f32.mrb[0].mxu0
    %v343 = vadd.f32 0.0, %v342
    %344 = vmatprep.mubr.f32.mxu0 0.0
    %345 = vmatmul.mubr.f32.gmra.mrb[0].mxu0 %v82
    %v346 = vpop.f32.mrb[0].mxu0
    %v347 = vadd.f32 0.0, %v346
    %v348 = vpop.f32.mrb[0].mxu0
    %v349 = vadd.f32 0.0, %v348
    %350 = vdwg.mxu0
    %351 = vrot.lane.b32.xlu0 %v21, 115
    %v352 = vpop.permute.xlu0 %351
    %353 = vrot.lane.b32.xlu0 %v22, 115
    %v354 = vpop.permute.xlu0 %353
    %355 = vrot.lane.b32.xlu0 %v23, 115
    %v356 = vpop.permute.xlu0 %355
    %357 = vrot.lane.b32.xlu0 %v24, 115
    %v358 = vpop.permute.xlu0 %357
    %359 = vrot.lane.b32.xlu0 %v25, 115
    %v360 = vpop.permute.xlu0 %359
    %361 = vrot.lane.b32.xlu0 %v26, 115
    %v362 = vpop.permute.xlu0 %361
    %363 = vrot.lane.b32.xlu0 %v27, 115
    %v364 = vpop.permute.xlu0 %363
    %vm365 = vcmask 941056
    %v366 = vsel %vm365, %v352, %v354
    %v367 = vsel %vm365, %v354, %v356
    %v368 = vsel %vm365, %v356, %v358
    %v369 = vsel %vm365, %v358, %v360
    %v370 = vsel %vm365, %v360, %v362
    %v371 = vsel %vm365, %v362, %v364
    %v379 = vsel %vm71, %v28, 0
    %v382 = vsel %vm71, %v29, 0
    %v385 = vsel %vm71, %v30, 0
    %v388 = vsel %vm71, %v31, 0
    %390 = vmatprep.subr.mxu0 %v367
    %391 = vmatpush1.msra.mxu0 %v366
    %392 = vmatprep.subr.mxu0 0.0
    %393 = vmatpush1.msra.mxu0 0.0
    %394 = vmatprep.subr.mxu0 0.0
    %395 = vmatpush1.msra.mxu0 0.0
    %396 = vmatprep.subr.mxu0 0.0
    %397 = vmatpush1.msra.mxu0 0.0
    %398 = vmatprep.subr.mxu0 0.0
    %399 = vmatpush1.msra.mxu0 0.0
    %400 = vmatprep.subr.mxu0 0.0
    %401 = vmatpush1.msra.mxu0 0.0
    %402 = vmatprep.subr.mxu0 0.0
    %403 = vmatpush1.msra.mxu0 0.0
    %404 = vmatprep.subr.mxu0 0.0
    %405 = vmatpush1.msra.mxu0 0.0
    %406 = vmatprep.subr.mxu0 0.0
    %407 = vmatpush1.msra.mxu0 0.0
    %408 = vmatprep.subr.mxu0 0.0
    %409 = vmatpush1.msra.mxu0 0.0
    %410 = vmatprep.subr.mxu0 0.0
    %411 = vmatpush1.msra.mxu0 0.0
    %412 = vmatprep.subr.mxu0 0.0
    %413 = vmatpush1.msra.mxu0 0.0
    %414 = vmatprep.subr.mxu0 0.0
    %415 = vmatpush1.msra.mxu0 0.0
    %416 = vmatprep.subr.mxu0 0.0
    %417 = vmatpush1.msra.mxu0 0.0
    %418 = vmatprep.subr.mxu0 0.0
    %419 = vmatpush1.msra.mxu0 0.0
    %420 = vmatprep.subr.mxu0 0.0
    %421 = vmatpush1.msra.mxu0 0.0
    %422 = vmatprep.subr.mxu0 0.0
    %423 = vmatpush1.msra.mxu0 0.0
    %424 = vmatprep.subr.mxu0 0.0
    %425 = vmatpush1.msra.mxu0 0.0
    %426 = vmatprep.subr.mxu0 0.0
    %427 = vmatpush1.msra.mxu0 0.0
    %428 = vmatprep.subr.mxu0 0.0
    %429 = vmatpush1.msra.mxu0 0.0
    %430 = vmatprep.subr.mxu0 0.0
    %431 = vmatpush1.msra.mxu0 0.0
    %432 = vmatprep.subr.mxu0 0.0
    %433 = vmatpush1.msra.mxu0 0.0
    %434 = vmatprep.subr.mxu0 0.0
    %435 = vmatpush1.msra.mxu0 0.0
    %436 = vmatprep.subr.mxu0 0.0
    %437 = vmatpush1.msra.mxu0 0.0
    %438 = vmatprep.subr.mxu0 0.0
    %439 = vmatpush1.msra.mxu0 0.0
    %440 = vmatprep.subr.mxu0 0.0
    %441 = vmatpush1.msra.mxu0 0.0
    %442 = vmatprep.subr.mxu0 0.0
    %443 = vmatpush1.msra.mxu0 0.0
    %444 = vmatprep.subr.mxu0 0.0
    %445 = vmatpush1.msra.mxu0 0.0
    %446 = vmatprep.subr.mxu0 0.0
    %447 = vmatpush1.msra.mxu0 0.0
    %448 = vmatprep.subr.mxu0 0.0
    %449 = vmatpush1.msra.mxu0 0.0
    %450 = vmatprep.subr.mxu0 0.0
    %451 = vmatpush1.msra.mxu0 0.0
    %452 = vmatprep.subr.mxu0 0.0
    %453 = vmatpush1.msra.mxu0 0.0
    %454 = vmatprep.mubr.f32.mxu0 0.0
    %455 = vmatmul.mubr.f32.gmra.mrb[0].mxu0 %v379
    %v456 = vpop.f32.mrb[0].mxu0
    %v457 = vadd.f32 %v151, %v456
    %v458 = vpop.f32.mrb[0].mxu0
    %v459 = vadd.f32 %v153, %v458
    %460 = vmatprep.mubr.f32.mxu0 0.0
    %461 = vmatmul.mubr.f32.gmra.mrb[0].mxu0 %v382
    %v462 = vpop.f32.mrb[0].mxu0
    %v463 = vadd.f32 %v157, %v462
    %v464 = vpop.f32.mrb[0].mxu0
    %v465 = vadd.f32 %v159, %v464
    %466 = vmatprep.mubr.f32.mxu0 0.0
    %467 = vmatmul.mubr.f32.gmra.mrb[0].mxu0 %v385
    %v468 = vpop.f32.mrb[0].mxu0
    %v469 = vadd.f32 %v163, %v468
    %v470 = vpop.f32.mrb[0].mxu0
    %v471 = vadd.f32 %v165, %v470
    %472 = vmatprep.mubr.f32.mxu0 0.0
    %473 = vmatmul.mubr.f32.gmra.mrb[0].mxu0 %v388
    %v474 = vpop.f32.mrb[0].mxu0
    %v475 = vadd.f32 %v169, %v474
    %v476 = vpop.f32.mrb[0].mxu0
    %v477 = vadd.f32 %v171, %v476
    %478 = vdwg.mxu0
    %479 = vmatprep.subr.mxu0 %v369
    %480 = vmatpush1.msra.mxu0 %v368
    %481 = vmatprep.subr.mxu0 0.0
    %482 = vmatpush1.msra.mxu0 0.0
    %483 = vmatprep.subr.mxu0 0.0
    %484 = vmatpush1.msra.mxu0 0.0
    %485 = vmatprep.subr.mxu0 0.0
    %486 = vmatpush1.msra.mxu0 0.0
    %487 = vmatprep.subr.mxu0 0.0
    %488 = vmatpush1.msra.mxu0 0.0
    %489 = vmatprep.subr.mxu0 0.0
    %490 = vmatpush1.msra.mxu0 0.0
    %491 = vmatprep.subr.mxu0 0.0
    %492 = vmatpush1.msra.mxu0 0.0
    %493 = vmatprep.subr.mxu0 0.0
    %494 = vmatpush1.msra.mxu0 0.0
    %495 = vmatprep.subr.mxu0 0.0
    %496 = vmatpush1.msra.mxu0 0.0
    %497 = vmatprep.subr.mxu0 0.0
    %498 = vmatpush1.msra.mxu0 0.0
    %499 = vmatprep.subr.mxu0 0.0
    %500 = vmatpush1.msra.mxu0 0.0
    %501 = vmatprep.subr.mxu0 0.0
    %502 = vmatpush1.msra.mxu0 0.0
    %503 = vmatprep.subr.mxu0 0.0
    %504 = vmatpush1.msra.mxu0 0.0
    %505 = vmatprep.subr.mxu0 0.0
    %506 = vmatpush1.msra.mxu0 0.0
    %507 = vmatprep.subr.mxu0 0.0
    %508 = vmatpush1.msra.mxu0 0.0
    %509 = vmatprep.subr.mxu0 0.0
    %510 = vmatpush1.msra.mxu0 0.0
    %511 = vmatprep.subr.mxu0 0.0
    %512 = vmatpush1.msra.mxu0 0.0
    %513 = vmatprep.subr.mxu0 0.0
    %514 = vmatpush1.msra.mxu0 0.0
    %515 = vmatprep.subr.mxu0 0.0
    %516 = vmatpush1.msra.mxu0 0.0
    %517 = vmatprep.subr.mxu0 0.0
    %518 = vmatpush1.msra.mxu0 0.0
    %519 = vmatprep.subr.mxu0 0.0
    %520 = vmatpush1.msra.mxu0 0.0
    %521 = vmatprep.subr.mxu0 0.0
    %522 = vmatpush1.msra.mxu0 0.0
    %523 = vmatprep.subr.mxu0 0.0
    %524 = vmatpush1.msra.mxu0 0.0
    %525 = vmatprep.subr.mxu0 0.0
    %526 = vmatpush1.msra.mxu0 0.0
    %527 = vmatprep.subr.mxu0 0.0
    %528 = vmatpush1.msra.mxu0 0.0
    %529 = vmatprep.subr.mxu0 0.0
    %530 = vmatpush1.msra.mxu0 0.0
    %531 = vmatprep.subr.mxu0 0.0
    %532 = vmatpush1.msra.mxu0 0.0
    %533 = vmatprep.subr.mxu0 0.0
    %534 = vmatpush1.msra.mxu0 0.0
    %535 = vmatprep.subr.mxu0 0.0
    %536 = vmatpush1.msra.mxu0 0.0
    %537 = vmatprep.subr.mxu0 0.0
    %538 = vmatpush1.msra.mxu0 0.0
    %539 = vmatprep.subr.mxu0 0.0
    %540 = vmatpush1.msra.mxu0 0.0
    %541 = vmatprep.subr.mxu0 0.0
    %542 = vmatpush1.msra.mxu0 0.0
    %543 = vmatprep.mubr.f32.mxu0 0.0
    %544 = vmatmul.mubr.f32.gmra.mrb[0].mxu0 %v379
    %v545 = vpop.f32.mrb[0].mxu0
    %v546 = vadd.f32 %v240, %v545
    %v547 = vpop.f32.mrb[0].mxu0
    %v548 = vadd.f32 %v242, %v547
    %549 = vmatprep.mubr.f32.mxu0 0.0
    %550 = vmatmul.mubr.f32.gmra.mrb[0].mxu0 %v382
    %v551 = vpop.f32.mrb[0].mxu0
    %v552 = vadd.f32 %v246, %v551
    %v553 = vpop.f32.mrb[0].mxu0
    %v554 = vadd.f32 %v248, %v553
    %555 = vmatprep.mubr.f32.mxu0 0.0
    %556 = vmatmul.mubr.f32.gmra.mrb[0].mxu0 %v385
    %v557 = vpop.f32.mrb[0].mxu0
    %v558 = vadd.f32 %v252, %v557
    %v559 = vpop.f32.mrb[0].mxu0
    %v560 = vadd.f32 %v254, %v559
    %561 = vmatprep.mubr.f32.mxu0 0.0
    %562 = vmatmul.mubr.f32.gmra.mrb[0].mxu0 %v388
    %v563 = vpop.f32.mrb[0].mxu0
    %v564 = vadd.f32 %v258, %v563
    %v565 = vpop.f32.mrb[0].mxu0
    %v566 = vadd.f32 %v260, %v565
    %567 = vdwg.mxu0
    %568 = vmatprep.subr.mxu0 %v371
    %569 = vmatpush1.msra.mxu0 %v370
    %570 = vmatprep.subr.mxu0 0.0
    %571 = vmatpush1.msra.mxu0 0.0
    %572 = vmatprep.subr.mxu0 0.0
    %573 = vmatpush1.msra.mxu0 0.0
    %574 = vmatprep.subr.mxu0 0.0
    %575 = vmatpush1.msra.mxu0 0.0
    %576 = vmatprep.subr.mxu0 0.0
    %577 = vmatpush1.msra.mxu0 0.0
    %578 = vmatprep.subr.mxu0 0.0
    %579 = vmatpush1.msra.mxu0 0.0
    %580 = vmatprep.subr.mxu0 0.0
    %581 = vmatpush1.msra.mxu0 0.0
    %582 = vmatprep.subr.mxu0 0.0
    %583 = vmatpush1.msra.mxu0 0.0
    %584 = vmatprep.subr.mxu0 0.0
    %585 = vmatpush1.msra.mxu0 0.0
    %586 = vmatprep.subr.mxu0 0.0
    %587 = vmatpush1.msra.mxu0 0.0
    %588 = vmatprep.subr.mxu0 0.0
    %589 = vmatpush1.msra.mxu0 0.0
    %590 = vmatprep.subr.mxu0 0.0
    %591 = vmatpush1.msra.mxu0 0.0
    %592 = vmatprep.subr.mxu0 0.0
    %593 = vmatpush1.msra.mxu0 0.0
    %594 = vmatprep.subr.mxu0 0.0
    %595 = vmatpush1.msra.mxu0 0.0
    %596 = vmatprep.subr.mxu0 0.0
    %597 = vmatpush1.msra.mxu0 0.0
    %598 = vmatprep.subr.mxu0 0.0
    %599 = vmatpush1.msra.mxu0 0.0
    %600 = vmatprep.subr.mxu0 0.0
    %601 = vmatpush1.msra.mxu0 0.0
    %602 = vmatprep.subr.mxu0 0.0
    %603 = vmatpush1.msra.mxu0 0.0
    %604 = vmatprep.subr.mxu0 0.0
    %605 = vmatpush1.msra.mxu0 0.0
    %606 = vmatprep.subr.mxu0 0.0
    %607 = vmatpush1.msra.mxu0 0.0
    %608 = vmatprep.subr.mxu0 0.0
    %609 = vmatpush1.msra.mxu0 0.0
    %610 = vmatprep.subr.mxu0 0.0
    %611 = vmatpush1.msra.mxu0 0.0
    %612 = vmatprep.subr.mxu0 0.0
    %613 = vmatpush1.msra.mxu0 0.0
    %614 = vmatprep.subr.mxu0 0.0
    %615 = vmatpush1.msra.mxu0 0.0
    %616 = vmatprep.subr.mxu0 0.0
    %617 = vmatpush1.msra.mxu0 0.0
    %618 = vmatprep.subr.mxu0 0.0
    %619 = vmatpush1.msra.mxu0 0.0
    %620 = vmatprep.subr.mxu0 0.0
    %621 = vmatpush1.msra.mxu0 0.0
    %622 = vmatprep.subr.mxu0 0.0
    %623 = vmatpush1.msra.mxu0 0.0
    %624 = vmatprep.subr.mxu0 0.0
    %625 = vmatpush1.msra.mxu0 0.0
    %626 = vmatprep.subr.mxu0 0.0
    %627 = vmatpush1.msra.mxu0 0.0
    %628 = vmatprep.subr.mxu0 0.0
    %629 = vmatpush1.msra.mxu0 0.0
    %630 = vmatprep.subr.mxu0 0.0
    %631 = vmatpush1.msra.mxu0 0.0
    %632 = vmatprep.mubr.f32.mxu0 0.0
    %633 = vmatmul.mubr.f32.gmra.mrb[0].mxu0 %v379
    %v634 = vpop.f32.mrb[0].mxu0
    %v635 = vadd.f32 %v329, %v634
    %v636 = vpop.f32.mrb[0].mxu0
    %v637 = vadd.f32 %v331, %v636
    %638 = vmatprep.mubr.f32.mxu0 0.0
    %639 = vmatmul.mubr.f32.gmra.mrb[0].mxu0 %v382
    %v640 = vpop.f32.mrb[0].mxu0
    %v641 = vadd.f32 %v335, %v640
    %v642 = vpop.f32.mrb[0].mxu0
    %v643 = vadd.f32 %v337, %v642
    %644 = vmatprep.mubr.f32.mxu0 0.0
    %645 = vmatmul.mubr.f32.gmra.mrb[0].mxu0 %v385
    %v646 = vpop.f32.mrb[0].mxu0
    %v647 = vadd.f32 %v341, %v646
    %v648 = vpop.f32.mrb[0].mxu0
    %v649 = vadd.f32 %v343, %v648
    %650 = vmatprep.mubr.f32.mxu0 0.0
    %651 = vmatmul.mubr.f32.gmra.mrb[0].mxu0 %v388
    %v652 = vpop.f32.mrb[0].mxu0
    %v653 = vadd.f32 %v347, %v652
    %v654 = vpop.f32.mrb[0].mxu0
    %v655 = vadd.f32 %v349, %v654
    %656 = vdwg.mxu0
    %s657 = scalar_lea.vmem %s1, 64
    %v658 = vld [vmem:[%s657] sm:$0xff]
    %v659 = vld [vmem:[%s657 + $0x8] sm:$0xff]
    %v660 = vld [vmem:[%s657 + $0x10] sm:$0xff]
    %v661 = vld [vmem:[%s657 + $0x18] sm:$0xff]
    %662 = vrot.lane.b32.xlu0 %v21, 113
    %v663 = vpop.permute.xlu0 %662
    %664 = vrot.lane.b32.xlu0 %v22, 113
    %v665 = vpop.permute.xlu0 %664
    %666 = vrot.lane.b32.xlu0 %v23, 113
    %v667 = vpop.permute.xlu0 %666
    %668 = vrot.lane.b32.xlu0 %v24, 113
    %v669 = vpop.permute.xlu0 %668
    %670 = vrot.lane.b32.xlu0 %v25, 113
    %v671 = vpop.permute.xlu0 %670
    %672 = vrot.lane.b32.xlu0 %v26, 113
    %v673 = vpop.permute.xlu0 %672
    %674 = vrot.lane.b32.xlu0 %v27, 113
    %v675 = vpop.permute.xlu0 %674
    %vm676 = vcmask 924672
    %v677 = vsel %vm676, %v663, %v665
    %v678 = vsel %vm676, %v665, %v667
    %v679 = vsel %vm676, %v667, %v669
    %v680 = vsel %vm676, %v669, %v671
    %v681 = vsel %vm676, %v671, %v673
    %v682 = vsel %vm676, %v673, %v675
    %v690 = vsel %vm71, %v658, 0
    %v693 = vsel %vm71, %v659, 0
    %v696 = vsel %vm71, %v660, 0
    %v699 = vsel %vm71, %v661, 0
    %701 = vmatprep.subr.mxu0 %v678
    %702 = vmatpush1.msra.mxu0 %v677
    %703 = vmatprep.subr.mxu0 0.0
    %704 = vmatpush1.msra.mxu0 0.0
    %705 = vmatprep.subr.mxu0 0.0
    %706 = vmatpush1.msra.mxu0 0.0
    %707 = vmatprep.subr.mxu0 0.0
    %708 = vmatpush1.msra.mxu0 0.0
    %709 = vmatprep.subr.mxu0 0.0
    %710 = vmatpush1.msra.mxu0 0.0
    %711 = vmatprep.subr.mxu0 0.0
    %712 = vmatpush1.msra.mxu0 0.0
    %713 = vmatprep.subr.mxu0 0.0
    %714 = vmatpush1.msra.mxu0 0.0
    %715 = vmatprep.subr.mxu0 0.0
    %716 = vmatpush1.msra.mxu0 0.0
    %717 = vmatprep.subr.mxu0 0.0
    %718 = vmatpush1.msra.mxu0 0.0
    %719 = vmatprep.subr.mxu0 0.0
    %720 = vmatpush1.msra.mxu0 0.0
    %721 = vmatprep.subr.mxu0 0.0
    %722 = vmatpush1.msra.mxu0 0.0
    %723 = vmatprep.subr.mxu0 0.0
    %724 = vmatpush1.msra.mxu0 0.0
    %725 = vmatprep.subr.mxu0 0.0
    %726 = vmatpush1.msra.mxu0 0.0
    %727 = vmatprep.subr.mxu0 0.0
    %728 = vmatpush1.msra.mxu0 0.0
    %729 = vmatprep.subr.mxu0 0.0
    %730 = vmatpush1.msra.mxu0 0.0
    %731 = vmatprep.subr.mxu0 0.0
    %732 = vmatpush1.msra.mxu0 0.0
    %733 = vmatprep.subr.mxu0 0.0
    %734 = vmatpush1.msra.mxu0 0.0
    %735 = vmatprep.subr.mxu0 0.0
    %736 = vmatpush1.msra.mxu0 0.0
    %737 = vmatprep.subr.mxu0 0.0
    %738 = vmatpush1.msra.mxu0 0.0
    %739 = vmatprep.subr.mxu0 0.0
    %740 = vmatpush1.msra.mxu0 0.0
    %741 = vmatprep.subr.mxu0 0.0
    %742 = vmatpush1.msra.mxu0 0.0
    %743 = vmatprep.subr.mxu0 0.0
    %744 = vmatpush1.msra.mxu0 0.0
    %745 = vmatprep.subr.mxu0 0.0
    %746 = vmatpush1.msra.mxu0 0.0
    %747 = vmatprep.subr.mxu0 0.0
    %748 = vmatpush1.msra.mxu0 0.0
    %749 = vmatprep.subr.mxu0 0.0
    %750 = vmatpush1.msra.mxu0 0.0
    %751 = vmatprep.subr.mxu0 0.0
    %752 = vmatpush1.msra.mxu0 0.0
    %753 = vmatprep.subr.mxu0 0.0
    %754 = vmatpush1.msra.mxu0 0.0
    %755 = vmatprep.subr.mxu0 0.0
    %756 = vmatpush1.msra.mxu0 0.0
    %757 = vmatprep.subr.mxu0 0.0
    %758 = vmatpush1.msra.mxu0 0.0
    %759 = vmatprep.subr.mxu0 0.0
    %760 = vmatpush1.msra.mxu0 0.0
    %761 = vmatprep.subr.mxu0 0.0
    %762 = vmatpush1.msra.mxu0 0.0
    %763 = vmatprep.subr.mxu0 0.0
    %764 = vmatpush1.msra.mxu0 0.0
    %765 = vmatprep.mubr.f32.mxu0 0.0
    %766 = vmatmul.mubr.f32.gmra.mrb[0].mxu0 %v690
    %v767 = vpop.f32.mrb[0].mxu0
    %v768 = vadd.f32 0.0, %v767
    %v769 = vpop.f32.mrb[0].mxu0
    %v770 = vadd.f32 0.0, %v769
    %771 = vmatprep.mubr.f32.mxu0 0.0
    %772 = vmatmul.mubr.f32.gmra.mrb[0].mxu0 %v693
    %v773 = vpop.f32.mrb[0].mxu0
    %v774 = vadd.f32 0.0, %v773
    %v775 = vpop.f32.mrb[0].mxu0
    %v776 = vadd.f32 0.0, %v775
    %777 = vmatprep.mubr.f32.mxu0 0.0
    %778 = vmatmul.mubr.f32.gmra.mrb[0].mxu0 %v696
    %v779 = vpop.f32.mrb[0].mxu0
    %v780 = vadd.f32 0.0, %v779
    %v781 = vpop.f32.mrb[0].mxu0
    %v782 = vadd.f32 0.0, %v781
    %783 = vmatprep.mubr.f32.mxu0 0.0
    %784 = vmatmul.mubr.f32.gmra.mrb[0].mxu0 %v699
    %v785 = vpop.f32.mrb[0].mxu0
    %v786 = vadd.f32 0.0, %v785
    %v787 = vpop.f32.mrb[0].mxu0
    %v788 = vadd.f32 0.0, %v787
    %789 = vdwg.mxu0
    %790 = vmatprep.subr.mxu0 %v680
    %791 = vmatpush1.msra.mxu0 %v679
    %792 = vmatprep.subr.mxu0 0.0
    %793 = vmatpush1.msra.mxu0 0.0
    %794 = vmatprep.subr.mxu0 0.0
    %795 = vmatpush1.msra.mxu0 0.0
    %796 = vmatprep.subr.mxu0 0.0
    %797 = vmatpush1.msra.mxu0 0.0
    %798 = vmatprep.subr.mxu0 0.0
    %799 = vmatpush1.msra.mxu0 0.0
    %800 = vmatprep.subr.mxu0 0.0
    %801 = vmatpush1.msra.mxu0 0.0
    %802 = vmatprep.subr.mxu0 0.0
    %803 = vmatpush1.msra.mxu0 0.0
    %804 = vmatprep.subr.mxu0 0.0
    %805 = vmatpush1.msra.mxu0 0.0
    %806 = vmatprep.subr.mxu0 0.0
    %807 = vmatpush1.msra.mxu0 0.0
    %808 = vmatprep.subr.mxu0 0.0
    %809 = vmatpush1.msra.mxu0 0.0
    %810 = vmatprep.subr.mxu0 0.0
    %811 = vmatpush1.msra.mxu0 0.0
    %812 = vmatprep.subr.mxu0 0.0
    %813 = vmatpush1.msra.mxu0 0.0
    %814 = vmatprep.subr.mxu0 0.0
    %815 = vmatpush1.msra.mxu0 0.0
    %816 = vmatprep.subr.mxu0 0.0
    %817 = vmatpush1.msra.mxu0 0.0
    %818 = vmatprep.subr.mxu0 0.0
    %819 = vmatpush1.msra.mxu0 0.0
    %820 = vmatprep.subr.mxu0 0.0
    %821 = vmatpush1.msra.mxu0 0.0
    %822 = vmatprep.subr.mxu0 0.0
    %823 = vmatpush1.msra.mxu0 0.0
    %824 = vmatprep.subr.mxu0 0.0
    %825 = vmatpush1.msra.mxu0 0.0
    %826 = vmatprep.subr.mxu0 0.0
    %827 = vmatpush1.msra.mxu0 0.0
    %828 = vmatprep.subr.mxu0 0.0
    %829 = vmatpush1.msra.mxu0 0.0
    %830 = vmatprep.subr.mxu0 0.0
    %831 = vmatpush1.msra.mxu0 0.0
    %832 = vmatprep.subr.mxu0 0.0
    %833 = vmatpush1.msra.mxu0 0.0
    %834 = vmatprep.subr.mxu0 0.0
    %835 = vmatpush1.msra.mxu0 0.0
    %836 = vmatprep.subr.mxu0 0.0
    %837 = vmatpush1.msra.mxu0 0.0
    %838 = vmatprep.subr.mxu0 0.0
    %839 = vmatpush1.msra.mxu0 0.0
    %840 = vmatprep.subr.mxu0 0.0
    %841 = vmatpush1.msra.mxu0 0.0
    %842 = vmatprep.subr.mxu0 0.0
    %843 = vmatpush1.msra.mxu0 0.0
    %844 = vmatprep.subr.mxu0 0.0
    %845 = vmatpush1.msra.mxu0 0.0
    %846 = vmatprep.subr.mxu0 0.0
    %847 = vmatpush1.msra.mxu0 0.0
    %848 = vmatprep.subr.mxu0 0.0
    %849 = vmatpush1.msra.mxu0 0.0
    %850 = vmatprep.subr.mxu0 0.0
    %851 = vmatpush1.msra.mxu0 0.0
    %852 = vmatprep.subr.mxu0 0.0
    %853 = vmatpush1.msra.mxu0 0.0
    %854 = vmatprep.mubr.f32.mxu0 0.0
    %855 = vmatmul.mubr.f32.gmra.mrb[0].mxu0 %v690
    %v856 = vpop.f32.mrb[0].mxu0
    %v857 = vadd.f32 0.0, %v856
    %v858 = vpop.f32.mrb[0].mxu0
    %v859 = vadd.f32 0.0, %v858
    %860 = vmatprep.mubr.f32.mxu0 0.0
    %861 = vmatmul.mubr.f32.gmra.mrb[0].mxu0 %v693
    %v862 = vpop.f32.mrb[0].mxu0
    %v863 = vadd.f32 0.0, %v862
    %v864 = vpop.f32.mrb[0].mxu0
    %v865 = vadd.f32 0.0, %v864
    %866 = vmatprep.mubr.f32.mxu0 0.0
    %867 = vmatmul.mubr.f32.gmra.mrb[0].mxu0 %v696
    %v868 = vpop.f32.mrb[0].mxu0
    %v869 = vadd.f32 0.0, %v868
    %v870 = vpop.f32.mrb[0].mxu0
    %v871 = vadd.f32 0.0, %v870
    %872 = vmatprep.mubr.f32.mxu0 0.0
    %873 = vmatmul.mubr.f32.gmra.mrb[0].mxu0 %v699
    %v874 = vpop.f32.mrb[0].mxu0
    %v875 = vadd.f32 0.0, %v874
    %v876 = vpop.f32.mrb[0].mxu0
    %v877 = vadd.f32 0.0, %v876
    %878 = vdwg.mxu0
    %879 = vmatprep.subr.mxu0 %v682
    %880 = vmatpush1.msra.mxu0 %v681
    %881 = vmatprep.subr.mxu0 0.0
    %882 = vmatpush1.msra.mxu0 0.0
    %883 = vmatprep.subr.mxu0 0.0
    %884 = vmatpush1.msra.mxu0 0.0
    %885 = vmatprep.subr.mxu0 0.0
    %886 = vmatpush1.msra.mxu0 0.0
    %887 = vmatprep.subr.mxu0 0.0
    %888 = vmatpush1.msra.mxu0 0.0
    %889 = vmatprep.subr.mxu0 0.0
    %890 = vmatpush1.msra.mxu0 0.0
    %891 = vmatprep.subr.mxu0 0.0
    %892 = vmatpush1.msra.mxu0 0.0
    %893 = vmatprep.subr.mxu0 0.0
    %894 = vmatpush1.msra.mxu0 0.0
    %895 = vmatprep.subr.mxu0 0.0
    %896 = vmatpush1.msra.mxu0 0.0
    %897 = vmatprep.subr.mxu0 0.0
    %898 = vmatpush1.msra.mxu0 0.0
    %899 = vmatprep.subr.mxu0 0.0
    %900 = vmatpush1.msra.mxu0 0.0
    %901 = vmatprep.subr.mxu0 0.0
    %902 = vmatpush1.msra.mxu0 0.0
    %903 = vmatprep.subr.mxu0 0.0
    %904 = vmatpush1.msra.mxu0 0.0
    %905 = vmatprep.subr.mxu0 0.0
    %906 = vmatpush1.msra.mxu0 0.0
    %907 = vmatprep.subr.mxu0 0.0
    %908 = vmatpush1.msra.mxu0 0.0
    %909 = vmatprep.subr.mxu0 0.0
    %910 = vmatpush1.msra.mxu0 0.0
    %911 = vmatprep.subr.mxu0 0.0
    %912 = vmatpush1.msra.mxu0 0.0
    %913 = vmatprep.subr.mxu0 0.0
    %914 = vmatpush1.msra.mxu0 0.0
    %915 = vmatprep.subr.mxu0 0.0
    %916 = vmatpush1.msra.mxu0 0.0
    %917 = vmatprep.subr.mxu0 0.0
    %918 = vmatpush1.msra.mxu0 0.0
    %919 = vmatprep.subr.mxu0 0.0
    %920 = vmatpush1.msra.mxu0 0.0
    %921 = vmatprep.subr.mxu0 0.0
    %922 = vmatpush1.msra.mxu0 0.0
    %923 = vmatprep.subr.mxu0 0.0
    %924 = vmatpush1.msra.mxu0 0.0
    %925 = vmatprep.subr.mxu0 0.0
    %926 = vmatpush1.msra.mxu0 0.0
    %927 = vmatprep.subr.mxu0 0.0
    %928 = vmatpush1.msra.mxu0 0.0
    %929 = vmatprep.subr.mxu0 0.0
    %930 = vmatpush1.msra.mxu0 0.0
    %931 = vmatprep.subr.mxu0 0.0
    %932 = vmatpush1.msra.mxu0 0.0
    %933 = vmatprep.subr.mxu0 0.0
    %934 = vmatpush1.msra.mxu0 0.0
    %935 = vmatprep.subr.mxu0 0.0
    %936 = vmatpush1.msra.mxu0 0.0
    %937 = vmatprep.subr.mxu0 0.0
    %938 = vmatpush1.msra.mxu0 0.0
    %939 = vmatprep.subr.mxu0 0.0
    %940 = vmatpush1.msra.mxu0 0.0
    %941 = vmatprep.subr.mxu0 0.0
    %942 = vmatpush1.msra.mxu0 0.0
    %943 = vmatprep.mubr.f32.mxu0 0.0
    %944 = vmatmul.mubr.f32.gmra.mrb[0].mxu0 %v690
    %v945 = vpop.f32.mrb[0].mxu0
    %v946 = vadd.f32 0.0, %v945
    %v947 = vpop.f32.mrb[0].mxu0
    %v948 = vadd.f32 0.0, %v947
    %949 = vmatprep.mubr.f32.mxu0 0.0
    %950 = vmatmul.mubr.f32.gmra.mrb[0].mxu0 %v693
    %v951 = vpop.f32.mrb[0].mxu0
    %v952 = vadd.f32 0.0, %v951
    %v953 = vpop.f32.mrb[0].mxu0
    %v954 = vadd.f32 0.0, %v953
    %955 = vmatprep.mubr.f32.mxu0 0.0
    %956 = vmatmul.mubr.f32.gmra.mrb[0].mxu0 %v696
    %v957 = vpop.f32.mrb[0].mxu0
    %v958 = vadd.f32 0.0, %v957
    %v959 = vpop.f32.mrb[0].mxu0
    %v960 = vadd.f32 0.0, %v959
    %961 = vmatprep.mubr.f32.mxu0 0.0
    %962 = vmatmul.mubr.f32.gmra.mrb[0].mxu0 %v699
    %v963 = vpop.f32.mrb[0].mxu0
    %v964 = vadd.f32 0.0, %v963
    %v965 = vpop.f32.mrb[0].mxu0
    %v966 = vadd.f32 0.0, %v965
    %967 = vdwg.mxu0
    %v968 = vadd.f32 %v457, %v768
    %v969 = vadd.f32 %v459, %v770
    %v970 = vadd.f32 %v546, %v857
    %v971 = vadd.f32 %v548, %v859
    %v972 = vadd.f32 %v635, %v946
    %v973 = vadd.f32 %v637, %v948
    %v974 = vadd.f32 %v463, %v774
    %v975 = vadd.f32 %v465, %v776
    %v976 = vadd.f32 %v552, %v863
    %v977 = vadd.f32 %v554, %v865
    %v978 = vadd.f32 %v641, %v952
    %v979 = vadd.f32 %v643, %v954
    %v980 = vadd.f32 %v469, %v780
    %v981 = vadd.f32 %v471, %v782
    %v982 = vadd.f32 %v558, %v869
    %v983 = vadd.f32 %v560, %v871
    %v984 = vadd.f32 %v647, %v958
    %v985 = vadd.f32 %v649, %v960
    %v986 = vadd.f32 %v475, %v786
    %v987 = vadd.f32 %v477, %v788
    %v988 = vadd.f32 %v564, %v875
    %v989 = vadd.f32 %v566, %v877
    %v990 = vadd.f32 %v653, %v964
    %v991 = vadd.f32 %v655, %v966
    %s992 = scalar_lea.vmem %s1, 96
    %v993 = vld [vmem:[%s992] sm:$0xff]
    %v994 = vld [vmem:[%s992 + $0x8] sm:$0xff]
    %v995 = vld [vmem:[%s992 + $0x10] sm:$0xff]
    %v996 = vld [vmem:[%s992 + $0x18] sm:$0xff]
    %997 = vrot.lane.b32.xlu0 %v21, 97
    %v998 = vpop.permute.xlu0 %997
    %999 = vrot.lane.b32.xlu0 %v22, 97
    %v1000 = vpop.permute.xlu0 %999
    %1001 = vrot.lane.b32.xlu0 %v23, 97
    %v1002 = vpop.permute.xlu0 %1001
    %1003 = vrot.lane.b32.xlu0 %v24, 97
    %v1004 = vpop.permute.xlu0 %1003
    %1005 = vrot.lane.b32.xlu0 %v25, 97
    %v1006 = vpop.permute.xlu0 %1005
    %1007 = vrot.lane.b32.xlu0 %v26, 97
    %v1008 = vpop.permute.xlu0 %1007
    %1009 = vrot.lane.b32.xlu0 %v27, 97
    %v1010 = vpop.permute.xlu0 %1009
    %vm1011 = vcmask 793600
    %v1012 = vsel %vm1011, %v998, %v1000
    %v1013 = vsel %vm1011, %v1000, %v1002
    %v1014 = vsel %vm1011, %v1002, %v1004
    %v1015 = vsel %vm1011, %v1004, %v1006
    %v1016 = vsel %vm1011, %v1006, %v1008
    %v1017 = vsel %vm1011, %v1008, %v1010
    %v1025 = vsel %vm71, %v993, 0
    %v1028 = vsel %vm71, %v994, 0
    %v1031 = vsel %vm71, %v995, 0
    %v1034 = vsel %vm71, %v996, 0
    %1036 = vmatprep.subr.mxu0 %v1013
    %1037 = vmatpush1.msra.mxu0 %v1012
    %1038 = vmatprep.subr.mxu0 0.0
    %1039 = vmatpush1.msra.mxu0 0.0
    %1040 = vmatprep.subr.mxu0 0.0
    %1041 = vmatpush1.msra.mxu0 0.0
    %1042 = vmatprep.subr.mxu0 0.0
    %1043 = vmatpush1.msra.mxu0 0.0
    %1044 = vmatprep.subr.mxu0 0.0
    %1045 = vmatpush1.msra.mxu0 0.0
    %1046 = vmatprep.subr.mxu0 0.0
    %1047 = vmatpush1.msra.mxu0 0.0
    %1048 = vmatprep.subr.mxu0 0.0
    %1049 = vmatpush1.msra.mxu0 0.0
    %1050 = vmatprep.subr.mxu0 0.0
    %1051 = vmatpush1.msra.mxu0 0.0
    %1052 = vmatprep.subr.mxu0 0.0
    %1053 = vmatpush1.msra.mxu0 0.0
    %1054 = vmatprep.subr.mxu0 0.0
    %1055 = vmatpush1.msra.mxu0 0.0
    %1056 = vmatprep.subr.mxu0 0.0
    %1057 = vmatpush1.msra.mxu0 0.0
    %1058 = vmatprep.subr.mxu0 0.0
    %1059 = vmatpush1.msra.mxu0 0.0
    %1060 = vmatprep.subr.mxu0 0.0
    %1061 = vmatpush1.msra.mxu0 0.0
    %1062 = vmatprep.subr.mxu0 0.0
    %1063 = vmatpush1.msra.mxu0 0.0
    %1064 = vmatprep.subr.mxu0 0.0
    %1065 = vmatpush1.msra.mxu0 0.0
    %1066 = vmatprep.subr.mxu0 0.0
    %1067 = vmatpush1.msra.mxu0 0.0
    %1068 = vmatprep.subr.mxu0 0.0
    %1069 = vmatpush1.msra.mxu0 0.0
    %1070 = vmatprep.subr.mxu0 0.0
    %1071 = vmatpush1.msra.mxu0 0.0
    %1072 = vmatprep.subr.mxu0 0.0
    %1073 = vmatpush1.msra.mxu0 0.0
    %1074 = vmatprep.subr.mxu0 0.0
    %1075 = vmatpush1.msra.mxu0 0.0
    %1076 = vmatprep.subr.mxu0 0.0
    %1077 = vmatpush1.msra.mxu0 0.0
    %1078 = vmatprep.subr.mxu0 0.0
    %1079 = vmatpush1.msra.mxu0 0.0
    %1080 = vmatprep.subr.mxu0 0.0
    %1081 = vmatpush1.msra.mxu0 0.0
    %1082 = vmatprep.subr.mxu0 0.0
    %1083 = vmatpush1.msra.mxu0 0.0
    %1084 = vmatprep.subr.mxu0 0.0
    %1085 = vmatpush1.msra.mxu0 0.0
    %1086 = vmatprep.subr.mxu0 0.0
    %1087 = vmatpush1.msra.mxu0 0.0
    %1088 = vmatprep.subr.mxu0 0.0
    %1089 = vmatpush1.msra.mxu0 0.0
    %1090 = vmatprep.subr.mxu0 0.0
    %1091 = vmatpush1.msra.mxu0 0.0
    %1092 = vmatprep.subr.mxu0 0.0
    %1093 = vmatpush1.msra.mxu0 0.0
    %1094 = vmatprep.subr.mxu0 0.0
    %1095 = vmatpush1.msra.mxu0 0.0
    %1096 = vmatprep.subr.mxu0 0.0
    %1097 = vmatpush1.msra.mxu0 0.0
    %1098 = vmatprep.subr.mxu0 0.0
    %1099 = vmatpush1.msra.mxu0 0.0
    %1100 = vmatprep.mubr.f32.mxu0 0.0
    %1101 = vmatmul.mubr.f32.gmra.mrb[0].mxu0 %v1025
    %v1102 = vpop.f32.mrb[0].mxu0
    %v1103 = vadd.f32 0.0, %v1102
    %v1104 = vpop.f32.mrb[0].mxu0
    %v1105 = vadd.f32 0.0, %v1104
    %1106 = vmatprep.mubr.f32.mxu0 0.0
    %1107 = vmatmul.mubr.f32.gmra.mrb[0].mxu0 %v1028
    %v1108 = vpop.f32.mrb[0].mxu0
    %v1109 = vadd.f32 0.0, %v1108
    %v1110 = vpop.f32.mrb[0].mxu0
    %v1111 = vadd.f32 0.0, %v1110
    %1112 = vmatprep.mubr.f32.mxu0 0.0
    %1113 = vmatmul.mubr.f32.gmra.mrb[0].mxu0 %v1031
    %v1114 = vpop.f32.mrb[0].mxu0
    %v1115 = vadd.f32 0.0, %v1114
    %v1116 = vpop.f32.mrb[0].mxu0
    %v1117 = vadd.f32 0.0, %v1116
    %1118 = vmatprep.mubr.f32.mxu0 0.0
    %1119 = vmatmul.mubr.f32.gmra.mrb[0].mxu0 %v1034
    %v1120 = vpop.f32.mrb[0].mxu0
    %v1121 = vadd.f32 0.0, %v1120
    %v1122 = vpop.f32.mrb[0].mxu0
    %v1123 = vadd.f32 0.0, %v1122
    %1124 = vdwg.mxu0
    %1125 = vmatprep.subr.mxu0 %v1015
    %1126 = vmatpush1.msra.mxu0 %v1014
    %1127 = vmatprep.subr.mxu0 0.0
    %1128 = vmatpush1.msra.mxu0 0.0
    %1129 = vmatprep.subr.mxu0 0.0
    %1130 = vmatpush1.msra.mxu0 0.0
    %1131 = vmatprep.subr.mxu0 0.0
    %1132 = vmatpush1.msra.mxu0 0.0
    %1133 = vmatprep.subr.mxu0 0.0
    %1134 = vmatpush1.msra.mxu0 0.0
    %1135 = vmatprep.subr.mxu0 0.0
    %1136 = vmatpush1.msra.mxu0 0.0
    %1137 = vmatprep.subr.mxu0 0.0
    %1138 = vmatpush1.msra.mxu0 0.0
    %1139 = vmatprep.subr.mxu0 0.0
    %1140 = vmatpush1.msra.mxu0 0.0
    %1141 = vmatprep.subr.mxu0 0.0
    %1142 = vmatpush1.msra.mxu0 0.0
    %1143 = vmatprep.subr.mxu0 0.0
    %1144 = vmatpush1.msra.mxu0 0.0
    %1145 = vmatprep.subr.mxu0 0.0
    %1146 = vmatpush1.msra.mxu0 0.0
    %1147 = vmatprep.subr.mxu0 0.0
    %1148 = vmatpush1.msra.mxu0 0.0
    %1149 = vmatprep.subr.mxu0 0.0
    %1150 = vmatpush1.msra.mxu0 0.0
    %1151 = vmatprep.subr.mxu0 0.0
    %1152 = vmatpush1.msra.mxu0 0.0
    %1153 = vmatprep.subr.mxu0 0.0
    %1154 = vmatpush1.msra.mxu0 0.0
    %1155 = vmatprep.subr.mxu0 0.0
    %1156 = vmatpush1.msra.mxu0 0.0
    %1157 = vmatprep.subr.mxu0 0.0
    %1158 = vmatpush1.msra.mxu0 0.0
    %1159 = vmatprep.subr.mxu0 0.0
    %1160 = vmatpush1.msra.mxu0 0.0
    %1161 = vmatprep.subr.mxu0 0.0
    %1162 = vmatpush1.msra.mxu0 0.0
    %1163 = vmatprep.subr.mxu0 0.0
    %1164 = vmatpush1.msra.mxu0 0.0
    %1165 = vmatprep.subr.mxu0 0.0
    %1166 = vmatpush1.msra.mxu0 0.0
    %1167 = vmatprep.subr.mxu0 0.0
    %1168 = vmatpush1.msra.mxu0 0.0
    %1169 = vmatprep.subr.mxu0 0.0
    %1170 = vmatpush1.msra.mxu0 0.0
    %1171 = vmatprep.subr.mxu0 0.0
    %1172 = vmatpush1.msra.mxu0 0.0
    %1173 = vmatprep.subr.mxu0 0.0
    %1174 = vmatpush1.msra.mxu0 0.0
    %1175 = vmatprep.subr.mxu0 0.0
    %1176 = vmatpush1.msra.mxu0 0.0
    %1177 = vmatprep.subr.mxu0 0.0
    %1178 = vmatpush1.msra.mxu0 0.0
    %1179 = vmatprep.subr.mxu0 0.0
    %1180 = vmatpush1.msra.mxu0 0.0
    %1181 = vmatprep.subr.mxu0 0.0
    %1182 = vmatpush1.msra.mxu0 0.0
    %1183 = vmatprep.subr.mxu0 0.0
    %1184 = vmatpush1.msra.mxu0 0.0
    %1185 = vmatprep.subr.mxu0 0.0
    %1186 = vmatpush1.msra.mxu0 0.0
    %1187 = vmatprep.subr.mxu0 0.0
    %1188 = vmatpush1.msra.mxu0 0.0
    %1189 = vmatprep.mubr.f32.mxu0 0.0
    %1190 = vmatmul.mubr.f32.gmra.mrb[0].mxu0 %v1025
    %v1191 = vpop.f32.mrb[0].mxu0
    %v1192 = vadd.f32 0.0, %v1191
    %v1193 = vpop.f32.mrb[0].mxu0
    %v1194 = vadd.f32 0.0, %v1193
    %1195 = vmatprep.mubr.f32.mxu0 0.0
    %1196 = vmatmul.mubr.f32.gmra.mrb[0].mxu0 %v1028
    %v1197 = vpop.f32.mrb[0].mxu0
    %v1198 = vadd.f32 0.0, %v1197
    %v1199 = vpop.f32.mrb[0].mxu0
    %v1200 = vadd.f32 0.0, %v1199
    %1201 = vmatprep.mubr.f32.mxu0 0.0
    %1202 = vmatmul.mubr.f32.gmra.mrb[0].mxu0 %v1031
    %v1203 = vpop.f32.mrb[0].mxu0
    %v1204 = vadd.f32 0.0, %v1203
    %v1205 = vpop.f32.mrb[0].mxu0
    %v1206 = vadd.f32 0.0, %v1205
    %1207 = vmatprep.mubr.f32.mxu0 0.0
    %1208 = vmatmul.mubr.f32.gmra.mrb[0].mxu0 %v1034
    %v1209 = vpop.f32.mrb[0].mxu0
    %v1210 = vadd.f32 0.0, %v1209
    %v1211 = vpop.f32.mrb[0].mxu0
    %v1212 = vadd.f32 0.0, %v1211
    %1213 = vdwg.mxu0
    %1214 = vmatprep.subr.mxu0 %v1017
    %1215 = vmatpush1.msra.mxu0 %v1016
    %1216 = vmatprep.subr.mxu0 0.0
    %1217 = vmatpush1.msra.mxu0 0.0
    %1218 = vmatprep.subr.mxu0 0.0
    %1219 = vmatpush1.msra.mxu0 0.0
    %1220 = vmatprep.subr.mxu0 0.0
    %1221 = vmatpush1.msra.mxu0 0.0
    %1222 = vmatprep.subr.mxu0 0.0
    %1223 = vmatpush1.msra.mxu0 0.0
    %1224 = vmatprep.subr.mxu0 0.0
    %1225 = vmatpush1.msra.mxu0 0.0
    %1226 = vmatprep.subr.mxu0 0.0
    %1227 = vmatpush1.msra.mxu0 0.0
    %1228 = vmatprep.subr.mxu0 0.0
    %1229 = vmatpush1.msra.mxu0 0.0
    %1230 = vmatprep.subr.mxu0 0.0
    %1231 = vmatpush1.msra.mxu0 0.0
    %1232 = vmatprep.subr.mxu0 0.0
    %1233 = vmatpush1.msra.mxu0 0.0
    %1234 = vmatprep.subr.mxu0 0.0
    %1235 = vmatpush1.msra.mxu0 0.0
    %1236 = vmatprep.subr.mxu0 0.0
    %1237 = vmatpush1.msra.mxu0 0.0
    %1238 = vmatprep.subr.mxu0 0.0
    %1239 = vmatpush1.msra.mxu0 0.0
    %1240 = vmatprep.subr.mxu0 0.0
    %1241 = vmatpush1.msra.mxu0 0.0
    %1242 = vmatprep.subr.mxu0 0.0
    %1243 = vmatpush1.msra.mxu0 0.0
    %1244 = vmatprep.subr.mxu0 0.0
    %1245 = vmatpush1.msra.mxu0 0.0
    %1246 = vmatprep.subr.mxu0 0.0
    %1247 = vmatpush1.msra.mxu0 0.0
    %1248 = vmatprep.subr.mxu0 0.0
    %1249 = vmatpush1.msra.mxu0 0.0
    %1250 = vmatprep.subr.mxu0 0.0
    %1251 = vmatpush1.msra.mxu0 0.0
    %1252 = vmatprep.subr.mxu0 0.0
    %1253 = vmatpush1.msra.mxu0 0.0
    %1254 = vmatprep.subr.mxu0 0.0
    %1255 = vmatpush1.msra.mxu0 0.0
    %1256 = vmatprep.subr.mxu0 0.0
    %1257 = vmatpush1.msra.mxu0 0.0
    %1258 = vmatprep.subr.mxu0 0.0
    %1259 = vmatpush1.msra.mxu0 0.0
    %1260 = vmatprep.subr.mxu0 0.0
    %1261 = vmatpush1.msra.mxu0 0.0
    %1262 = vmatprep.subr.mxu0 0.0
    %1263 = vmatpush1.msra.mxu0 0.0
    %1264 = vmatprep.subr.mxu0 0.0
    %1265 = vmatpush1.msra.mxu0 0.0
    %1266 = vmatprep.subr.mxu0 0.0
    %1267 = vmatpush1.msra.mxu0 0.0
    %1268 = vmatprep.subr.mxu0 0.0
    %1269 = vmatpush1.msra.mxu0 0.0
    %1270 = vmatprep.subr.mxu0 0.0
    %1271 = vmatpush1.msra.mxu0 0.0
    %1272 = vmatprep.subr.mxu0 0.0
    %1273 = vmatpush1.msra.mxu0 0.0
    %1274 = vmatprep.subr.mxu0 0.0
    %1275 = vmatpush1.msra.mxu0 0.0
    %1276 = vmatprep.subr.mxu0 0.0
    %1277 = vmatpush1.msra.mxu0 0.0
    %1278 = vmatprep.mubr.f32.mxu0 0.0
    %1279 = vmatmul.mubr.f32.gmra.mrb[0].mxu0 %v1025
    %v1280 = vpop.f32.mrb[0].mxu0
    %v1281 = vadd.f32 0.0, %v1280
    %v1282 = vpop.f32.mrb[0].mxu0
    %v1283 = vadd.f32 0.0, %v1282
    %1284 = vmatprep.mubr.f32.mxu0 0.0
    %1285 = vmatmul.mubr.f32.gmra.mrb[0].mxu0 %v1028
    %v1286 = vpop.f32.mrb[0].mxu0
    %v1287 = vadd.f32 0.0, %v1286
    %v1288 = vpop.f32.mrb[0].mxu0
    %v1289 = vadd.f32 0.0, %v1288
    %1290 = vmatprep.mubr.f32.mxu0 0.0
    %1291 = vmatmul.mubr.f32.gmra.mrb[0].mxu0 %v1031
    %v1292 = vpop.f32.mrb[0].mxu0
    %v1293 = vadd.f32 0.0, %v1292
    %v1294 = vpop.f32.mrb[0].mxu0
    %v1295 = vadd.f32 0.0, %v1294
    %1296 = vmatprep.mubr.f32.mxu0 0.0
    %1297 = vmatmul.mubr.f32.gmra.mrb[0].mxu0 %v1034
    %v1298 = vpop.f32.mrb[0].mxu0
    %v1299 = vadd.f32 0.0, %v1298
    %v1300 = vpop.f32.mrb[0].mxu0
    %v1301 = vadd.f32 0.0, %v1300
    %1302 = vdwg.mxu0
    %v1303 = vadd.f32 %v968, %v1103
    %v1304 = vadd.f32 %v969, %v1105
    %v1305 = vadd.f32 %v970, %v1192
    %v1306 = vadd.f32 %v971, %v1194
    %v1307 = vadd.f32 %v972, %v1281
    %v1308 = vadd.f32 %v973, %v1283
    %v1309 = vadd.f32 %v974, %v1109
    %v1310 = vadd.f32 %v975, %v1111
    %v1311 = vadd.f32 %v976, %v1198
    %v1312 = vadd.f32 %v977, %v1200
    %v1313 = vadd.f32 %v978, %v1287
    %v1314 = vadd.f32 %v979, %v1289
    %v1315 = vadd.f32 %v980, %v1115
    %v1316 = vadd.f32 %v981, %v1117
    %v1317 = vadd.f32 %v982, %v1204
    %v1318 = vadd.f32 %v983, %v1206
    %v1319 = vadd.f32 %v984, %v1293
    %v1320 = vadd.f32 %v985, %v1295
    %v1321 = vadd.f32 %v986, %v1121
    %v1322 = vadd.f32 %v987, %v1123
    %v1323 = vadd.f32 %v988, %v1210
    %v1324 = vadd.f32 %v989, %v1212
    %v1325 = vadd.f32 %v990, %v1299
    %v1326 = vadd.f32 %v991, %v1301
    %s1327 = scalar_lea.vmem %s1, 128
    %v1328 = vld [vmem:[%s1327] sm:$0xff]
    %v1329 = vld [vmem:[%s1327 + $0x8] sm:$0xff]
    %v1330 = vld [vmem:[%s1327 + $0x10] sm:$0xff]
    %v1331 = vld [vmem:[%s1327 + $0x18] sm:$0xff]
    %1332 = vrot.lane.b32.xlu0 %v21, 96
    %v1333 = vpop.permute.xlu0 %1332
    %1334 = vrot.lane.b32.xlu0 %v22, 96
    %v1335 = vpop.permute.xlu0 %1334
    %1336 = vrot.lane.b32.xlu0 %v23, 96
    %v1337 = vpop.permute.xlu0 %1336
    %1338 = vrot.lane.b32.xlu0 %v24, 96
    %v1339 = vpop.permute.xlu0 %1338
    %1340 = vrot.lane.b32.xlu0 %v25, 96
    %v1341 = vpop.permute.xlu0 %1340
    %1342 = vrot.lane.b32.xlu0 %v26, 96
    %v1343 = vpop.permute.xlu0 %1342
    %1344 = vrot.lane.b32.xlu0 %v27, 96
    %v1345 = vpop.permute.xlu0 %1344
    %vm1346 = vcmask 785408
    %v1347 = vsel %vm1346, %v1333, %v1335
    %v1348 = vsel %vm1346, %v1335, %v1337
    %v1349 = vsel %vm1346, %v1337, %v1339
    %v1350 = vsel %vm1346, %v1339, %v1341
    %v1351 = vsel %vm1346, %v1341, %v1343
    %v1352 = vsel %vm1346, %v1343, %v1345
    %v1360 = vsel %vm71, %v1328, 0
    %v1363 = vsel %vm71, %v1329, 0
    %v1366 = vsel %vm71, %v1330, 0
    %v1369 = vsel %vm71, %v1331, 0
    %1371 = vmatprep.subr.mxu0 %v1348
    %1372 = vmatpush1.msra.mxu0 %v1347
    %1373 = vmatprep.subr.mxu0 0.0
    %1374 = vmatpush1.msra.mxu0 0.0
    %1375 = vmatprep.subr.mxu0 0.0
    %1376 = vmatpush1.msra.mxu0 0.0
    %1377 = vmatprep.subr.mxu0 0.0
    %1378 = vmatpush1.msra.mxu0 0.0
    %1379 = vmatprep.subr.mxu0 0.0
    %1380 = vmatpush1.msra.mxu0 0.0
    %1381 = vmatprep.subr.mxu0 0.0
    %1382 = vmatpush1.msra.mxu0 0.0
    %1383 = vmatprep.subr.mxu0 0.0
    %1384 = vmatpush1.msra.mxu0 0.0
    %1385 = vmatprep.subr.mxu0 0.0
    %1386 = vmatpush1.msra.mxu0 0.0
    %1387 = vmatprep.subr.mxu0 0.0
    %1388 = vmatpush1.msra.mxu0 0.0
    %1389 = vmatprep.subr.mxu0 0.0
    %1390 = vmatpush1.msra.mxu0 0.0
    %1391 = vmatprep.subr.mxu0 0.0
    %1392 = vmatpush1.msra.mxu0 0.0
    %1393 = vmatprep.subr.mxu0 0.0
    %1394 = vmatpush1.msra.mxu0 0.0
    %1395 = vmatprep.subr.mxu0 0.0
    %1396 = vmatpush1.msra.mxu0 0.0
    %1397 = vmatprep.subr.mxu0 0.0
    %1398 = vmatpush1.msra.mxu0 0.0
    %1399 = vmatprep.subr.mxu0 0.0
    %1400 = vmatpush1.msra.mxu0 0.0
    %1401 = vmatprep.subr.mxu0 0.0
    %1402 = vmatpush1.msra.mxu0 0.0
    %1403 = vmatprep.subr.mxu0 0.0
    %1404 = vmatpush1.msra.mxu0 0.0
    %1405 = vmatprep.subr.mxu0 0.0
    %1406 = vmatpush1.msra.mxu0 0.0
    %1407 = vmatprep.subr.mxu0 0.0
    %1408 = vmatpush1.msra.mxu0 0.0
    %1409 = vmatprep.subr.mxu0 0.0
    %1410 = vmatpush1.msra.mxu0 0.0
    %1411 = vmatprep.subr.mxu0 0.0
    %1412 = vmatpush1.msra.mxu0 0.0
    %1413 = vmatprep.subr.mxu0 0.0
    %1414 = vmatpush1.msra.mxu0 0.0
    %1415 = vmatprep.subr.mxu0 0.0
    %1416 = vmatpush1.msra.mxu0 0.0
    %1417 = vmatprep.subr.mxu0 0.0
    %1418 = vmatpush1.msra.mxu0 0.0
    %1419 = vmatprep.subr.mxu0 0.0
    %1420 = vmatpush1.msra.mxu0 0.0
    %1421 = vmatprep.subr.mxu0 0.0
    %1422 = vmatpush1.msra.mxu0 0.0
    %1423 = vmatprep.subr.mxu0 0.0
    %1424 = vmatpush1.msra.mxu0 0.0
    %1425 = vmatprep.subr.mxu0 0.0
    %1426 = vmatpush1.msra.mxu0 0.0
    %1427 = vmatprep.subr.mxu0 0.0
    %1428 = vmatpush1.msra.mxu0 0.0
    %1429 = vmatprep.subr.mxu0 0.0
    %1430 = vmatpush1.msra.mxu0 0.0
    %1431 = vmatprep.subr.mxu0 0.0
    %1432 = vmatpush1.msra.mxu0 0.0
    %1433 = vmatprep.subr.mxu0 0.0
    %1434 = vmatpush1.msra.mxu0 0.0
    %1435 = vmatprep.mubr.f32.mxu0 0.0
    %1436 = vmatmul.mubr.f32.gmra.mrb[0].mxu0 %v1360
    %v1437 = vpop.f32.mrb[0].mxu0
    %v1438 = vadd.f32 0.0, %v1437
    %v1439 = vpop.f32.mrb[0].mxu0
    %v1440 = vadd.f32 0.0, %v1439
    %1441 = vmatprep.mubr.f32.mxu0 0.0
    %1442 = vmatmul.mubr.f32.gmra.mrb[0].mxu0 %v1363
    %v1443 = vpop.f32.mrb[0].mxu0
    %v1444 = vadd.f32 0.0, %v1443
    %v1445 = vpop.f32.mrb[0].mxu0
    %v1446 = vadd.f32 0.0, %v1445
    %1447 = vmatprep.mubr.f32.mxu0 0.0
    %1448 = vmatmul.mubr.f32.gmra.mrb[0].mxu0 %v1366
    %v1449 = vpop.f32.mrb[0].mxu0
    %v1450 = vadd.f32 0.0, %v1449
    %v1451 = vpop.f32.mrb[0].mxu0
    %v1452 = vadd.f32 0.0, %v1451
    %1453 = vmatprep.mubr.f32.mxu0 0.0
    %1454 = vmatmul.mubr.f32.gmra.mrb[0].mxu0 %v1369
    %v1455 = vpop.f32.mrb[0].mxu0
    %v1456 = vadd.f32 0.0, %v1455
    %v1457 = vpop.f32.mrb[0].mxu0
    %v1458 = vadd.f32 0.0, %v1457
    %1459 = vdwg.mxu0
    %1460 = vmatprep.subr.mxu0 %v1350
    %1461 = vmatpush1.msra.mxu0 %v1349
    %1462 = vmatprep.subr.mxu0 0.0
    %1463 = vmatpush1.msra.mxu0 0.0
    %1464 = vmatprep.subr.mxu0 0.0
    %1465 = vmatpush1.msra.mxu0 0.0
    %1466 = vmatprep.subr.mxu0 0.0
    %1467 = vmatpush1.msra.mxu0 0.0
    %1468 = vmatprep.subr.mxu0 0.0
    %1469 = vmatpush1.msra.mxu0 0.0
    %1470 = vmatprep.subr.mxu0 0.0
    %1471 = vmatpush1.msra.mxu0 0.0
    %1472 = vmatprep.subr.mxu0 0.0
    %1473 = vmatpush1.msra.mxu0 0.0
    %1474 = vmatprep.subr.mxu0 0.0
    %1475 = vmatpush1.msra.mxu0 0.0
    %1476 = vmatprep.subr.mxu0 0.0
    %1477 = vmatpush1.msra.mxu0 0.0
    %1478 = vmatprep.subr.mxu0 0.0
    %1479 = vmatpush1.msra.mxu0 0.0
    %1480 = vmatprep.subr.mxu0 0.0
    %1481 = vmatpush1.msra.mxu0 0.0
    %1482 = vmatprep.subr.mxu0 0.0
    %1483 = vmatpush1.msra.mxu0 0.0
    %1484 = vmatprep.subr.mxu0 0.0
    %1485 = vmatpush1.msra.mxu0 0.0
    %1486 = vmatprep.subr.mxu0 0.0
    %1487 = vmatpush1.msra.mxu0 0.0
    %1488 = vmatprep.subr.mxu0 0.0
    %1489 = vmatpush1.msra.mxu0 0.0
    %1490 = vmatprep.subr.mxu0 0.0
    %1491 = vmatpush1.msra.mxu0 0.0
    %1492 = vmatprep.subr.mxu0 0.0
    %1493 = vmatpush1.msra.mxu0 0.0
    %1494 = vmatprep.subr.mxu0 0.0
    %1495 = vmatpush1.msra.mxu0 0.0
    %1496 = vmatprep.subr.mxu0 0.0
    %1497 = vmatpush1.msra.mxu0 0.0
    %1498 = vmatprep.subr.mxu0 0.0
    %1499 = vmatpush1.msra.mxu0 0.0
    %1500 = vmatprep.subr.mxu0 0.0
    %1501 = vmatpush1.msra.mxu0 0.0
    %1502 = vmatprep.subr.mxu0 0.0
    %1503 = vmatpush1.msra.mxu0 0.0
    %1504 = vmatprep.subr.mxu0 0.0
    %1505 = vmatpush1.msra.mxu0 0.0
    %1506 = vmatprep.subr.mxu0 0.0
    %1507 = vmatpush1.msra.mxu0 0.0
    %1508 = vmatprep.subr.mxu0 0.0
    %1509 = vmatpush1.msra.mxu0 0.0
    %1510 = vmatprep.subr.mxu0 0.0
    %1511 = vmatpush1.msra.mxu0 0.0
    %1512 = vmatprep.subr.mxu0 0.0
    %1513 = vmatpush1.msra.mxu0 0.0
    %1514 = vmatprep.subr.mxu0 0.0
    %1515 = vmatpush1.msra.mxu0 0.0
    %1516 = vmatprep.subr.mxu0 0.0
    %1517 = vmatpush1.msra.mxu0 0.0
    %1518 = vmatprep.subr.mxu0 0.0
    %1519 = vmatpush1.msra.mxu0 0.0
    %1520 = vmatprep.subr.mxu0 0.0
    %1521 = vmatpush1.msra.mxu0 0.0
    %1522 = vmatprep.subr.mxu0 0.0
    %1523 = vmatpush1.msra.mxu0 0.0
    %1524 = vmatprep.mubr.f32.mxu0 0.0
    %1525 = vmatmul.mubr.f32.gmra.mrb[0].mxu0 %v1360
    %v1526 = vpop.f32.mrb[0].mxu0
    %v1527 = vadd.f32 0.0, %v1526
    %v1528 = vpop.f32.mrb[0].mxu0
    %v1529 = vadd.f32 0.0, %v1528
    %1530 = vmatprep.mubr.f32.mxu0 0.0
    %1531 = vmatmul.mubr.f32.gmra.mrb[0].mxu0 %v1363
    %v1532 = vpop.f32.mrb[0].mxu0
    %v1533 = vadd.f32 0.0, %v1532
    %v1534 = vpop.f32.mrb[0].mxu0
    %v1535 = vadd.f32 0.0, %v1534
    %1536 = vmatprep.mubr.f32.mxu0 0.0
    %1537 = vmatmul.mubr.f32.gmra.mrb[0].mxu0 %v1366
    %v1538 = vpop.f32.mrb[0].mxu0
    %v1539 = vadd.f32 0.0, %v1538
    %v1540 = vpop.f32.mrb[0].mxu0
    %v1541 = vadd.f32 0.0, %v1540
    %1542 = vmatprep.mubr.f32.mxu0 0.0
    %1543 = vmatmul.mubr.f32.gmra.mrb[0].mxu0 %v1369
    %v1544 = vpop.f32.mrb[0].mxu0
    %v1545 = vadd.f32 0.0, %v1544
    %v1546 = vpop.f32.mrb[0].mxu0
    %v1547 = vadd.f32 0.0, %v1546
    %1548 = vdwg.mxu0
    %1549 = vmatprep.subr.mxu0 %v1352
    %1550 = vmatpush1.msra.mxu0 %v1351
    %1551 = vmatprep.subr.mxu0 0.0
    %1552 = vmatpush1.msra.mxu0 0.0
    %1553 = vmatprep.subr.mxu0 0.0
    %1554 = vmatpush1.msra.mxu0 0.0
    %1555 = vmatprep.subr.mxu0 0.0
    %1556 = vmatpush1.msra.mxu0 0.0
    %1557 = vmatprep.subr.mxu0 0.0
    %1558 = vmatpush1.msra.mxu0 0.0
    %1559 = vmatprep.subr.mxu0 0.0
    %1560 = vmatpush1.msra.mxu0 0.0
    %1561 = vmatprep.subr.mxu0 0.0
    %1562 = vmatpush1.msra.mxu0 0.0
    %1563 = vmatprep.subr.mxu0 0.0
    %1564 = vmatpush1.msra.mxu0 0.0
    %1565 = vmatprep.subr.mxu0 0.0
    %1566 = vmatpush1.msra.mxu0 0.0
    %1567 = vmatprep.subr.mxu0 0.0
    %1568 = vmatpush1.msra.mxu0 0.0
    %1569 = vmatprep.subr.mxu0 0.0
    %1570 = vmatpush1.msra.mxu0 0.0
    %1571 = vmatprep.subr.mxu0 0.0
    %1572 = vmatpush1.msra.mxu0 0.0
    %1573 = vmatprep.subr.mxu0 0.0
    %1574 = vmatpush1.msra.mxu0 0.0
    %1575 = vmatprep.subr.mxu0 0.0
    %1576 = vmatpush1.msra.mxu0 0.0
    %1577 = vmatprep.subr.mxu0 0.0
    %1578 = vmatpush1.msra.mxu0 0.0
    %1579 = vmatprep.subr.mxu0 0.0
    %1580 = vmatpush1.msra.mxu0 0.0
    %1581 = vmatprep.subr.mxu0 0.0
    %1582 = vmatpush1.msra.mxu0 0.0
    %1583 = vmatprep.subr.mxu0 0.0
    %1584 = vmatpush1.msra.mxu0 0.0
    %1585 = vmatprep.subr.mxu0 0.0
    %1586 = vmatpush1.msra.mxu0 0.0
    %1587 = vmatprep.subr.mxu0 0.0
    %1588 = vmatpush1.msra.mxu0 0.0
    %1589 = vmatprep.subr.mxu0 0.0
    %1590 = vmatpush1.msra.mxu0 0.0
    %1591 = vmatprep.subr.mxu0 0.0
    %1592 = vmatpush1.msra.mxu0 0.0
    %1593 = vmatprep.subr.mxu0 0.0
    %1594 = vmatpush1.msra.mxu0 0.0
    %1595 = vmatprep.subr.mxu0 0.0
    %1596 = vmatpush1.msra.mxu0 0.0
    %1597 = vmatprep.subr.mxu0 0.0
    %1598 = vmatpush1.msra.mxu0 0.0
    %1599 = vmatprep.subr.mxu0 0.0
    %1600 = vmatpush1.msra.mxu0 0.0
    %1601 = vmatprep.subr.mxu0 0.0
    %1602 = vmatpush1.msra.mxu0 0.0
    %1603 = vmatprep.subr.mxu0 0.0
    %1604 = vmatpush1.msra.mxu0 0.0
    %1605 = vmatprep.subr.mxu0 0.0
    %1606 = vmatpush1.msra.mxu0 0.0
    %1607 = vmatprep.subr.mxu0 0.0
    %1608 = vmatpush1.msra.mxu0 0.0
    %1609 = vmatprep.subr.mxu0 0.0
    %1610 = vmatpush1.msra.mxu0 0.0
    %1611 = vmatprep.subr.mxu0 0.0
    %1612 = vmatpush1.msra.mxu0 0.0
    %1613 = vmatprep.mubr.f32.mxu0 0.0
    %1614 = vmatmul.mubr.f32.gmra.mrb[0].mxu0 %v1360
    %v1615 = vpop.f32.mrb[0].mxu0
    %v1616 = vadd.f32 0.0, %v1615
    %v1617 = vpop.f32.mrb[0].mxu0
    %v1618 = vadd.f32 0.0, %v1617
    %1619 = vmatprep.mubr.f32.mxu0 0.0
    %1620 = vmatmul.mubr.f32.gmra.mrb[0].mxu0 %v1363
    %v1621 = vpop.f32.mrb[0].mxu0
    %v1622 = vadd.f32 0.0, %v1621
    %v1623 = vpop.f32.mrb[0].mxu0
    %v1624 = vadd.f32 0.0, %v1623
    %1625 = vmatprep.mubr.f32.mxu0 0.0
    %1626 = vmatmul.mubr.f32.gmra.mrb[0].mxu0 %v1366
    %v1627 = vpop.f32.mrb[0].mxu0
    %v1628 = vadd.f32 0.0, %v1627
    %v1629 = vpop.f32.mrb[0].mxu0
    %v1630 = vadd.f32 0.0, %v1629
    %1631 = vmatprep.mubr.f32.mxu0 0.0
    %1632 = vmatmul.mubr.f32.gmra.mrb[0].mxu0 %v1369
    %v1633 = vpop.f32.mrb[0].mxu0
    %v1634 = vadd.f32 0.0, %v1633
    %v1635 = vpop.f32.mrb[0].mxu0
    %v1636 = vadd.f32 0.0, %v1635
    %1637 = vdwg.mxu0
    %v1638 = vadd.f32 %v1303, %v1438
    %v1639 = vadd.f32 %v1304, %v1440
    %v1640 = vadd.f32 %v1305, %v1527
    %v1641 = vadd.f32 %v1306, %v1529
    %v1642 = vadd.f32 %v1307, %v1616
    %v1643 = vadd.f32 %v1308, %v1618
    %v1644 = vadd.f32 %v1309, %v1444
    %v1645 = vadd.f32 %v1310, %v1446
    %v1646 = vadd.f32 %v1311, %v1533
    %v1647 = vadd.f32 %v1312, %v1535
    %v1648 = vadd.f32 %v1313, %v1622
    %v1649 = vadd.f32 %v1314, %v1624
    %v1650 = vadd.f32 %v1315, %v1450
    %v1651 = vadd.f32 %v1316, %v1452
    %v1652 = vadd.f32 %v1317, %v1539
    %v1653 = vadd.f32 %v1318, %v1541
    %v1654 = vadd.f32 %v1319, %v1628
    %v1655 = vadd.f32 %v1320, %v1630
    %v1656 = vadd.f32 %v1321, %v1456
    %v1657 = vadd.f32 %v1322, %v1458
    %v1658 = vadd.f32 %v1323, %v1545
    %v1659 = vadd.f32 %v1324, %v1547
    %v1660 = vadd.f32 %v1325, %v1634
    %v1661 = vadd.f32 %v1326, %v1636
    %s1662 = scalar_lea.vmem %s1, 160
    %v1663 = vld [vmem:[%s1662] sm:$0xff]
    %v1664 = vld [vmem:[%s1662 + $0x8] sm:$0xff]
    %v1665 = vld [vmem:[%s1662 + $0x10] sm:$0xff]
    %v1666 = vld [vmem:[%s1662 + $0x18] sm:$0xff]
    %1667 = vrot.lane.b32.xlu0 %v21, 95
    %v1668 = vpop.permute.xlu0 %1667
    %1669 = vrot.lane.b32.xlu0 %v22, 95
    %v1670 = vpop.permute.xlu0 %1669
    %1671 = vrot.lane.b32.xlu0 %v23, 95
    %v1672 = vpop.permute.xlu0 %1671
    %1673 = vrot.lane.b32.xlu0 %v24, 95
    %v1674 = vpop.permute.xlu0 %1673
    %1675 = vrot.lane.b32.xlu0 %v25, 95
    %v1676 = vpop.permute.xlu0 %1675
    %1677 = vrot.lane.b32.xlu0 %v26, 95
    %v1678 = vpop.permute.xlu0 %1677
    %1679 = vrot.lane.b32.xlu0 %v27, 95
    %v1680 = vpop.permute.xlu0 %1679
    %vm1681 = vcmask 777216
    %v1682 = vsel %vm1681, %v1668, %v1670
    %v1683 = vsel %vm1681, %v1670, %v1672
    %v1684 = vsel %vm1681, %v1672, %v1674
    %v1685 = vsel %vm1681, %v1674, %v1676
    %v1686 = vsel %vm1681, %v1676, %v1678
    %v1687 = vsel %vm1681, %v1678, %v1680
    %v1695 = vsel %vm71, %v1663, 0
    %v1698 = vsel %vm71, %v1664, 0
    %v1701 = vsel %vm71, %v1665, 0
    %v1704 = vsel %vm71, %v1666, 0
    %1706 = vmatprep.subr.mxu0 %v1683
    %1707 = vmatpush1.msra.mxu0 %v1682
    %1708 = vmatprep.subr.mxu0 0.0
    %1709 = vmatpush1.msra.mxu0 0.0
    %1710 = vmatprep.subr.mxu0 0.0
    %1711 = vmatpush1.msra.mxu0 0.0
    %1712 = vmatprep.subr.mxu0 0.0
    %1713 = vmatpush1.msra.mxu0 0.0
    %1714 = vmatprep.subr.mxu0 0.0
    %1715 = vmatpush1.msra.mxu0 0.0
    %1716 = vmatprep.subr.mxu0 0.0
    %1717 = vmatpush1.msra.mxu0 0.0
    %1718 = vmatprep.subr.mxu0 0.0
    %1719 = vmatpush1.msra.mxu0 0.0
    %1720 = vmatprep.subr.mxu0 0.0
    %1721 = vmatpush1.msra.mxu0 0.0
    %1722 = vmatprep.subr.mxu0 0.0
    %1723 = vmatpush1.msra.mxu0 0.0
    %1724 = vmatprep.subr.mxu0 0.0
    %1725 = vmatpush1.msra.mxu0 0.0
    %1726 = vmatprep.subr.mxu0 0.0
    %1727 = vmatpush1.msra.mxu0 0.0
    %1728 = vmatprep.subr.mxu0 0.0
    %1729 = vmatpush1.msra.mxu0 0.0
    %1730 = vmatprep.subr.mxu0 0.0
    %1731 = vmatpush1.msra.mxu0 0.0
    %1732 = vmatprep.subr.mxu0 0.0
    %1733 = vmatpush1.msra.mxu0 0.0
    %1734 = vmatprep.subr.mxu0 0.0
    %1735 = vmatpush1.msra.mxu0 0.0
    %1736 = vmatprep.subr.mxu0 0.0
    %1737 = vmatpush1.msra.mxu0 0.0
    %1738 = vmatprep.subr.mxu0 0.0
    %1739 = vmatpush1.msra.mxu0 0.0
    %1740 = vmatprep.subr.mxu0 0.0
    %1741 = vmatpush1.msra.mxu0 0.0
    %1742 = vmatprep.subr.mxu0 0.0
    %1743 = vmatpush1.msra.mxu0 0.0
    %1744 = vmatprep.subr.mxu0 0.0
    %1745 = vmatpush1.msra.mxu0 0.0
    %1746 = vmatprep.subr.mxu0 0.0
    %1747 = vmatpush1.msra.mxu0 0.0
    %1748 = vmatprep.subr.mxu0 0.0
    %1749 = vmatpush1.msra.mxu0 0.0
    %1750 = vmatprep.subr.mxu0 0.0
    %1751 = vmatpush1.msra.mxu0 0.0
    %1752 = vmatprep.subr.mxu0 0.0
    %1753 = vmatpush1.msra.mxu0 0.0
    %1754 = vmatprep.subr.mxu0 0.0
    %1755 = vmatpush1.msra.mxu0 0.0
    %1756 = vmatprep.subr.mxu0 0.0
    %1757 = vmatpush1.msra.mxu0 0.0
    %1758 = vmatprep.subr.mxu0 0.0
    %1759 = vmatpush1.msra.mxu0 0.0
    %1760 = vmatprep.subr.mxu0 0.0
    %1761 = vmatpush1.msra.mxu0 0.0
    %1762 = vmatprep.subr.mxu0 0.0
    %1763 = vmatpush1.msra.mxu0 0.0
    %1764 = vmatprep.subr.mxu0 0.0
    %1765 = vmatpush1.msra.mxu0 0.0
    %1766 = vmatprep.subr.mxu0 0.0
    %1767 = vmatpush1.msra.mxu0 0.0
    %1768 = vmatprep.subr.mxu0 0.0
    %1769 = vmatpush1.msra.mxu0 0.0
    %1770 = vmatprep.mubr.f32.mxu0 0.0
    %1771 = vmatmul.mubr.f32.gmra.mrb[0].mxu0 %v1695
    %v1772 = vpop.f32.mrb[0].mxu0
    %v1773 = vadd.f32 0.0, %v1772
    %v1774 = vpop.f32.mrb[0].mxu0
    %v1775 = vadd.f32 0.0, %v1774
    %1776 = vmatprep.mubr.f32.mxu0 0.0
    %1777 = vmatmul.mubr.f32.gmra.mrb[0].mxu0 %v1698
    %v1778 = vpop.f32.mrb[0].mxu0
    %v1779 = vadd.f32 0.0, %v1778
    %v1780 = vpop.f32.mrb[0].mxu0
    %v1781 = vadd.f32 0.0, %v1780
    %1782 = vmatprep.mubr.f32.mxu0 0.0
    %1783 = vmatmul.mubr.f32.gmra.mrb[0].mxu0 %v1701
    %v1784 = vpop.f32.mrb[0].mxu0
    %v1785 = vadd.f32 0.0, %v1784
    %v1786 = vpop.f32.mrb[0].mxu0
    %v1787 = vadd.f32 0.0, %v1786
    %1788 = vmatprep.mubr.f32.mxu0 0.0
    %1789 = vmatmul.mubr.f32.gmra.mrb[0].mxu0 %v1704
    %v1790 = vpop.f32.mrb[0].mxu0
    %v1791 = vadd.f32 0.0, %v1790
    %v1792 = vpop.f32.mrb[0].mxu0
    %v1793 = vadd.f32 0.0, %v1792
    %1794 = vdwg.mxu0
    %1795 = vmatprep.subr.mxu0 %v1685
    %1796 = vmatpush1.msra.mxu0 %v1684
    %1797 = vmatprep.subr.mxu0 0.0
    %1798 = vmatpush1.msra.mxu0 0.0
    %1799 = vmatprep.subr.mxu0 0.0
    %1800 = vmatpush1.msra.mxu0 0.0
    %1801 = vmatprep.subr.mxu0 0.0
    %1802 = vmatpush1.msra.mxu0 0.0
    %1803 = vmatprep.subr.mxu0 0.0
    %1804 = vmatpush1.msra.mxu0 0.0
    %1805 = vmatprep.subr.mxu0 0.0
    %1806 = vmatpush1.msra.mxu0 0.0
    %1807 = vmatprep.subr.mxu0 0.0
    %1808 = vmatpush1.msra.mxu0 0.0
    %1809 = vmatprep.subr.mxu0 0.0
    %1810 = vmatpush1.msra.mxu0 0.0
    %1811 = vmatprep.subr.mxu0 0.0
    %1812 = vmatpush1.msra.mxu0 0.0
    %1813 = vmatprep.subr.mxu0 0.0
    %1814 = vmatpush1.msra.mxu0 0.0
    %1815 = vmatprep.subr.mxu0 0.0
    %1816 = vmatpush1.msra.mxu0 0.0
    %1817 = vmatprep.subr.mxu0 0.0
    %1818 = vmatpush1.msra.mxu0 0.0
    %1819 = vmatprep.subr.mxu0 0.0
    %1820 = vmatpush1.msra.mxu0 0.0
    %1821 = vmatprep.subr.mxu0 0.0
    %1822 = vmatpush1.msra.mxu0 0.0
    %1823 = vmatprep.subr.mxu0 0.0
    %1824 = vmatpush1.msra.mxu0 0.0
    %1825 = vmatprep.subr.mxu0 0.0
    %1826 = vmatpush1.msra.mxu0 0.0
    %1827 = vmatprep.subr.mxu0 0.0
    %1828 = vmatpush1.msra.mxu0 0.0
    %1829 = vmatprep.subr.mxu0 0.0
    %1830 = vmatpush1.msra.mxu0 0.0
    %1831 = vmatprep.subr.mxu0 0.0
    %1832 = vmatpush1.msra.mxu0 0.0
    %1833 = vmatprep.subr.mxu0 0.0
    %1834 = vmatpush1.msra.mxu0 0.0
    %1835 = vmatprep.subr.mxu0 0.0
    %1836 = vmatpush1.msra.mxu0 0.0
    %1837 = vmatprep.subr.mxu0 0.0
    %1838 = vmatpush1.msra.mxu0 0.0
    %1839 = vmatprep.subr.mxu0 0.0
    %1840 = vmatpush1.msra.mxu0 0.0
    %1841 = vmatprep.subr.mxu0 0.0
    %1842 = vmatpush1.msra.mxu0 0.0
    %1843 = vmatprep.subr.mxu0 0.0
    %1844 = vmatpush1.msra.mxu0 0.0
    %1845 = vmatprep.subr.mxu0 0.0
    %1846 = vmatpush1.msra.mxu0 0.0
    %1847 = vmatprep.subr.mxu0 0.0
    %1848 = vmatpush1.msra.mxu0 0.0
    %1849 = vmatprep.subr.mxu0 0.0
    %1850 = vmatpush1.msra.mxu0 0.0
    %1851 = vmatprep.subr.mxu0 0.0
    %1852 = vmatpush1.msra.mxu0 0.0
    %1853 = vmatprep.subr.mxu0 0.0
    %1854 = vmatpush1.msra.mxu0 0.0
    %1855 = vmatprep.subr.mxu0 0.0
    %1856 = vmatpush1.msra.mxu0 0.0
    %1857 = vmatprep.subr.mxu0 0.0
    %1858 = vmatpush1.msra.mxu0 0.0
    %1859 = vmatprep.mubr.f32.mxu0 0.0
    %1860 = vmatmul.mubr.f32.gmra.mrb[0].mxu0 %v1695
    %v1861 = vpop.f32.mrb[0].mxu0
    %v1862 = vadd.f32 0.0, %v1861
    %v1863 = vpop.f32.mrb[0].mxu0
    %v1864 = vadd.f32 0.0, %v1863
    %1865 = vmatprep.mubr.f32.mxu0 0.0
    %1866 = vmatmul.mubr.f32.gmra.mrb[0].mxu0 %v1698
    %v1867 = vpop.f32.mrb[0].mxu0
    %v1868 = vadd.f32 0.0, %v1867
    %v1869 = vpop.f32.mrb[0].mxu0
    %v1870 = vadd.f32 0.0, %v1869
    %1871 = vmatprep.mubr.f32.mxu0 0.0
    %1872 = vmatmul.mubr.f32.gmra.mrb[0].mxu0 %v1701
    %v1873 = vpop.f32.mrb[0].mxu0
    %v1874 = vadd.f32 0.0, %v1873
    %v1875 = vpop.f32.mrb[0].mxu0
    %v1876 = vadd.f32 0.0, %v1875
    %1877 = vmatprep.mubr.f32.mxu0 0.0
    %1878 = vmatmul.mubr.f32.gmra.mrb[0].mxu0 %v1704
    %v1879 = vpop.f32.mrb[0].mxu0
    %v1880 = vadd.f32 0.0, %v1879
    %v1881 = vpop.f32.mrb[0].mxu0
    %v1882 = vadd.f32 0.0, %v1881
    %1883 = vdwg.mxu0
    %1884 = vmatprep.subr.mxu0 %v1687
    %1885 = vmatpush1.msra.mxu0 %v1686
    %1886 = vmatprep.subr.mxu0 0.0
    %1887 = vmatpush1.msra.mxu0 0.0
    %1888 = vmatprep.subr.mxu0 0.0
    %1889 = vmatpush1.msra.mxu0 0.0
    %1890 = vmatprep.subr.mxu0 0.0
    %1891 = vmatpush1.msra.mxu0 0.0
    %1892 = vmatprep.subr.mxu0 0.0
    %1893 = vmatpush1.msra.mxu0 0.0
    %1894 = vmatprep.subr.mxu0 0.0
    %1895 = vmatpush1.msra.mxu0 0.0
    %1896 = vmatprep.subr.mxu0 0.0
    %1897 = vmatpush1.msra.mxu0 0.0
    %1898 = vmatprep.subr.mxu0 0.0
    %1899 = vmatpush1.msra.mxu0 0.0
    %1900 = vmatprep.subr.mxu0 0.0
    %1901 = vmatpush1.msra.mxu0 0.0
    %1902 = vmatprep.subr.mxu0 0.0
    %1903 = vmatpush1.msra.mxu0 0.0
    %1904 = vmatprep.subr.mxu0 0.0
    %1905 = vmatpush1.msra.mxu0 0.0
    %1906 = vmatprep.subr.mxu0 0.0
    %1907 = vmatpush1.msra.mxu0 0.0
    %1908 = vmatprep.subr.mxu0 0.0
    %1909 = vmatpush1.msra.mxu0 0.0
    %1910 = vmatprep.subr.mxu0 0.0
    %1911 = vmatpush1.msra.mxu0 0.0
    %1912 = vmatprep.subr.mxu0 0.0
    %1913 = vmatpush1.msra.mxu0 0.0
    %1914 = vmatprep.subr.mxu0 0.0
    %1915 = vmatpush1.msra.mxu0 0.0
    %1916 = vmatprep.subr.mxu0 0.0
    %1917 = vmatpush1.msra.mxu0 0.0
    %1918 = vmatprep.subr.mxu0 0.0
    %1919 = vmatpush1.msra.mxu0 0.0
    %1920 = vmatprep.subr.mxu0 0.0
    %1921 = vmatpush1.msra.mxu0 0.0
    %1922 = vmatprep.subr.mxu0 0.0
    %1923 = vmatpush1.msra.mxu0 0.0
    %1924 = vmatprep.subr.mxu0 0.0
    %1925 = vmatpush1.msra.mxu0 0.0
    %1926 = vmatprep.subr.mxu0 0.0
    %1927 = vmatpush1.msra.mxu0 0.0
    %1928 = vmatprep.subr.mxu0 0.0
    %1929 = vmatpush1.msra.mxu0 0.0
    %1930 = vmatprep.subr.mxu0 0.0
    %1931 = vmatpush1.msra.mxu0 0.0
    %1932 = vmatprep.subr.mxu0 0.0
    %1933 = vmatpush1.msra.mxu0 0.0
    %1934 = vmatprep.subr.mxu0 0.0
    %1935 = vmatpush1.msra.mxu0 0.0
    %1936 = vmatprep.subr.mxu0 0.0
    %1937 = vmatpush1.msra.mxu0 0.0
    %1938 = vmatprep.subr.mxu0 0.0
    %1939 = vmatpush1.msra.mxu0 0.0
    %1940 = vmatprep.subr.mxu0 0.0
    %1941 = vmatpush1.msra.mxu0 0.0
    %1942 = vmatprep.subr.mxu0 0.0
    %1943 = vmatpush1.msra.mxu0 0.0
    %1944 = vmatprep.subr.mxu0 0.0
    %1945 = vmatpush1.msra.mxu0 0.0
    %1946 = vmatprep.subr.mxu0 0.0
    %1947 = vmatpush1.msra.mxu0 0.0
    %1948 = vmatprep.mubr.f32.mxu0 0.0
    %1949 = vmatmul.mubr.f32.gmra.mrb[0].mxu0 %v1695
    %v1950 = vpop.f32.mrb[0].mxu0
    %v1951 = vadd.f32 0.0, %v1950
    %v1952 = vpop.f32.mrb[0].mxu0
    %v1953 = vadd.f32 0.0, %v1952
    %1954 = vmatprep.mubr.f32.mxu0 0.0
    %1955 = vmatmul.mubr.f32.gmra.mrb[0].mxu0 %v1698
    %v1956 = vpop.f32.mrb[0].mxu0
    %v1957 = vadd.f32 0.0, %v1956
    %v1958 = vpop.f32.mrb[0].mxu0
    %v1959 = vadd.f32 0.0, %v1958
    %1960 = vmatprep.mubr.f32.mxu0 0.0
    %1961 = vmatmul.mubr.f32.gmra.mrb[0].mxu0 %v1701
    %v1962 = vpop.f32.mrb[0].mxu0
    %v1963 = vadd.f32 0.0, %v1962
    %v1964 = vpop.f32.mrb[0].mxu0
    %v1965 = vadd.f32 0.0, %v1964
    %1966 = vmatprep.mubr.f32.mxu0 0.0
    %1967 = vmatmul.mubr.f32.gmra.mrb[0].mxu0 %v1704
    %v1968 = vpop.f32.mrb[0].mxu0
    %v1969 = vadd.f32 0.0, %v1968
    %v1970 = vpop.f32.mrb[0].mxu0
    %v1971 = vadd.f32 0.0, %v1970
    %1972 = vdwg.mxu0
    %v1973 = vadd.f32 %v1638, %v1773
    %v1974 = vadd.f32 %v1639, %v1775
    %v1975 = vadd.f32 %v1640, %v1862
    %v1976 = vadd.f32 %v1641, %v1864
    %v1977 = vadd.f32 %v1642, %v1951
    %v1978 = vadd.f32 %v1643, %v1953
    %v1979 = vadd.f32 %v1644, %v1779
    %v1980 = vadd.f32 %v1645, %v1781
    %v1981 = vadd.f32 %v1646, %v1868
    %v1982 = vadd.f32 %v1647, %v1870
    %v1983 = vadd.f32 %v1648, %v1957
    %v1984 = vadd.f32 %v1649, %v1959
    %v1985 = vadd.f32 %v1650, %v1785
    %v1986 = vadd.f32 %v1651, %v1787
    %v1987 = vadd.f32 %v1652, %v1874
    %v1988 = vadd.f32 %v1653, %v1876
    %v1989 = vadd.f32 %v1654, %v1963
    %v1990 = vadd.f32 %v1655, %v1965
    %v1991 = vadd.f32 %v1656, %v1791
    %v1992 = vadd.f32 %v1657, %v1793
    %v1993 = vadd.f32 %v1658, %v1880
    %v1994 = vadd.f32 %v1659, %v1882
    %v1995 = vadd.f32 %v1660, %v1969
    %v1996 = vadd.f32 %v1661, %v1971
    %s1997 = scalar_lea.vmem %s1, 192
    %v1998 = vld [vmem:[%s1997] sm:$0xff]
    %v1999 = vld [vmem:[%s1997 + $0x8] sm:$0xff]
    %v2000 = vld [vmem:[%s1997 + $0x10] sm:$0xff]
    %v2001 = vld [vmem:[%s1997 + $0x18] sm:$0xff]
    %2002 = vrot.lane.b32.xlu0 %v21, 79
    %v2003 = vpop.permute.xlu0 %2002
    %2004 = vrot.lane.b32.xlu0 %v22, 79
    %v2005 = vpop.permute.xlu0 %2004
    %2006 = vrot.lane.b32.xlu0 %v23, 79
    %v2007 = vpop.permute.xlu0 %2006
    %2008 = vrot.lane.b32.xlu0 %v24, 79
    %v2009 = vpop.permute.xlu0 %2008
    %2010 = vrot.lane.b32.xlu0 %v25, 79
    %v2011 = vpop.permute.xlu0 %2010
    %2012 = vrot.lane.b32.xlu0 %v26, 79
    %v2013 = vpop.permute.xlu0 %2012
    %2014 = vrot.lane.b32.xlu0 %v27, 79
    %v2015 = vpop.permute.xlu0 %2014
    %vm2016 = vcmask 646144
    %v2017 = vsel %vm2016, %v2003, %v2005
    %v2018 = vsel %vm2016, %v2005, %v2007
    %v2019 = vsel %vm2016, %v2007, %v2009
    %v2020 = vsel %vm2016, %v2009, %v2011
    %v2021 = vsel %vm2016, %v2011, %v2013
    %v2022 = vsel %vm2016, %v2013, %v2015
    %v2030 = vsel %vm71, %v1998, 0
    %v2033 = vsel %vm71, %v1999, 0
    %v2036 = vsel %vm71, %v2000, 0
    %v2039 = vsel %vm71, %v2001, 0
    %2041 = vmatprep.subr.mxu0 %v2018
    %2042 = vmatpush1.msra.mxu0 %v2017
    %2043 = vmatprep.subr.mxu0 0.0
    %2044 = vmatpush1.msra.mxu0 0.0
    %2045 = vmatprep.subr.mxu0 0.0
    %2046 = vmatpush1.msra.mxu0 0.0
    %2047 = vmatprep.subr.mxu0 0.0
    %2048 = vmatpush1.msra.mxu0 0.0
    %2049 = vmatprep.subr.mxu0 0.0
    %2050 = vmatpush1.msra.mxu0 0.0
    %2051 = vmatprep.subr.mxu0 0.0
    %2052 = vmatpush1.msra.mxu0 0.0
    %2053 = vmatprep.subr.mxu0 0.0
    %2054 = vmatpush1.msra.mxu0 0.0
    %2055 = vmatprep.subr.mxu0 0.0
    %2056 = vmatpush1.msra.mxu0 0.0
    %2057 = vmatprep.subr.mxu0 0.0
    %2058 = vmatpush1.msra.mxu0 0.0
    %2059 = vmatprep.subr.mxu0 0.0
    %2060 = vmatpush1.msra.mxu0 0.0
    %2061 = vmatprep.subr.mxu0 0.0
    %2062 = vmatpush1.msra.mxu0 0.0
    %2063 = vmatprep.subr.mxu0 0.0
    %2064 = vmatpush1.msra.mxu0 0.0
    %2065 = vmatprep.subr.mxu0 0.0
    %2066 = vmatpush1.msra.mxu0 0.0
    %2067 = vmatprep.subr.mxu0 0.0
    %2068 = vmatpush1.msra.mxu0 0.0
    %2069 = vmatprep.subr.mxu0 0.0
    %2070 = vmatpush1.msra.mxu0 0.0
    %2071 = vmatprep.subr.mxu0 0.0
    %2072 = vmatpush1.msra.mxu0 0.0
    %2073 = vmatprep.subr.mxu0 0.0
    %2074 = vmatpush1.msra.mxu0 0.0
    %2075 = vmatprep.subr.mxu0 0.0
    %2076 = vmatpush1.msra.mxu0 0.0
    %2077 = vmatprep.subr.mxu0 0.0
    %2078 = vmatpush1.msra.mxu0 0.0
    %2079 = vmatprep.subr.mxu0 0.0
    %2080 = vmatpush1.msra.mxu0 0.0
    %2081 = vmatprep.subr.mxu0 0.0
    %2082 = vmatpush1.msra.mxu0 0.0
    %2083 = vmatprep.subr.mxu0 0.0
    %2084 = vmatpush1.msra.mxu0 0.0
    %2085 = vmatprep.subr.mxu0 0.0
    %2086 = vmatpush1.msra.mxu0 0.0
    %2087 = vmatprep.subr.mxu0 0.0
    %2088 = vmatpush1.msra.mxu0 0.0
    %2089 = vmatprep.subr.mxu0 0.0
    %2090 = vmatpush1.msra.mxu0 0.0
    %2091 = vmatprep.subr.mxu0 0.0
    %2092 = vmatpush1.msra.mxu0 0.0
    %2093 = vmatprep.subr.mxu0 0.0
    %2094 = vmatpush1.msra.mxu0 0.0
    %2095 = vmatprep.subr.mxu0 0.0
    %2096 = vmatpush1.msra.mxu0 0.0
    %2097 = vmatprep.subr.mxu0 0.0
    %2098 = vmatpush1.msra.mxu0 0.0
    %2099 = vmatprep.subr.mxu0 0.0
    %2100 = vmatpush1.msra.mxu0 0.0
    %2101 = vmatprep.subr.mxu0 0.0
    %2102 = vmatpush1.msra.mxu0 0.0
    %2103 = vmatprep.subr.mxu0 0.0
    %2104 = vmatpush1.msra.mxu0 0.0
    %2105 = vmatprep.mubr.f32.mxu0 0.0
    %2106 = vmatmul.mubr.f32.gmra.mrb[0].mxu0 %v2030
    %v2107 = vpop.f32.mrb[0].mxu0
    %v2108 = vadd.f32 0.0, %v2107
    %v2109 = vpop.f32.mrb[0].mxu0
    %v2110 = vadd.f32 0.0, %v2109
    %2111 = vmatprep.mubr.f32.mxu0 0.0
    %2112 = vmatmul.mubr.f32.gmra.mrb[0].mxu0 %v2033
    %v2113 = vpop.f32.mrb[0].mxu0
    %v2114 = vadd.f32 0.0, %v2113
    %v2115 = vpop.f32.mrb[0].mxu0
    %v2116 = vadd.f32 0.0, %v2115
    %2117 = vmatprep.mubr.f32.mxu0 0.0
    %2118 = vmatmul.mubr.f32.gmra.mrb[0].mxu0 %v2036
    %v2119 = vpop.f32.mrb[0].mxu0
    %v2120 = vadd.f32 0.0, %v2119
    %v2121 = vpop.f32.mrb[0].mxu0
    %v2122 = vadd.f32 0.0, %v2121
    %2123 = vmatprep.mubr.f32.mxu0 0.0
    %2124 = vmatmul.mubr.f32.gmra.mrb[0].mxu0 %v2039
    %v2125 = vpop.f32.mrb[0].mxu0
    %v2126 = vadd.f32 0.0, %v2125
    %v2127 = vpop.f32.mrb[0].mxu0
    %v2128 = vadd.f32 0.0, %v2127
    %2129 = vdwg.mxu0
    %2130 = vmatprep.subr.mxu0 %v2020
    %2131 = vmatpush1.msra.mxu0 %v2019
    %2132 = vmatprep.subr.mxu0 0.0
    %2133 = vmatpush1.msra.mxu0 0.0
    %2134 = vmatprep.subr.mxu0 0.0
    %2135 = vmatpush1.msra.mxu0 0.0
    %2136 = vmatprep.subr.mxu0 0.0
    %2137 = vmatpush1.msra.mxu0 0.0
    %2138 = vmatprep.subr.mxu0 0.0
    %2139 = vmatpush1.msra.mxu0 0.0
    %2140 = vmatprep.subr.mxu0 0.0
    %2141 = vmatpush1.msra.mxu0 0.0
    %2142 = vmatprep.subr.mxu0 0.0
    %2143 = vmatpush1.msra.mxu0 0.0
    %2144 = vmatprep.subr.mxu0 0.0
    %2145 = vmatpush1.msra.mxu0 0.0
    %2146 = vmatprep.subr.mxu0 0.0
    %2147 = vmatpush1.msra.mxu0 0.0
    %2148 = vmatprep.subr.mxu0 0.0
    %2149 = vmatpush1.msra.mxu0 0.0
    %2150 = vmatprep.subr.mxu0 0.0
    %2151 = vmatpush1.msra.mxu0 0.0
    %2152 = vmatprep.subr.mxu0 0.0
    %2153 = vmatpush1.msra.mxu0 0.0
    %2154 = vmatprep.subr.mxu0 0.0
    %2155 = vmatpush1.msra.mxu0 0.0
    %2156 = vmatprep.subr.mxu0 0.0
    %2157 = vmatpush1.msra.mxu0 0.0
    %2158 = vmatprep.subr.mxu0 0.0
    %2159 = vmatpush1.msra.mxu0 0.0
    %2160 = vmatprep.subr.mxu0 0.0
    %2161 = vmatpush1.msra.mxu0 0.0
    %2162 = vmatprep.subr.mxu0 0.0
    %2163 = vmatpush1.msra.mxu0 0.0
    %2164 = vmatprep.subr.mxu0 0.0
    %2165 = vmatpush1.msra.mxu0 0.0
    %2166 = vmatprep.subr.mxu0 0.0
    %2167 = vmatpush1.msra.mxu0 0.0
    %2168 = vmatprep.subr.mxu0 0.0
    %2169 = vmatpush1.msra.mxu0 0.0
    %2170 = vmatprep.subr.mxu0 0.0
    %2171 = vmatpush1.msra.mxu0 0.0
    %2172 = vmatprep.subr.mxu0 0.0
    %2173 = vmatpush1.msra.mxu0 0.0
    %2174 = vmatprep.subr.mxu0 0.0
    %2175 = vmatpush1.msra.mxu0 0.0
    %2176 = vmatprep.subr.mxu0 0.0
    %2177 = vmatpush1.msra.mxu0 0.0
    %2178 = vmatprep.subr.mxu0 0.0
    %2179 = vmatpush1.msra.mxu0 0.0
    %2180 = vmatprep.subr.mxu0 0.0
    %2181 = vmatpush1.msra.mxu0 0.0
    %2182 = vmatprep.subr.mxu0 0.0
    %2183 = vmatpush1.msra.mxu0 0.0
    %2184 = vmatprep.subr.mxu0 0.0
    %2185 = vmatpush1.msra.mxu0 0.0
    %2186 = vmatprep.subr.mxu0 0.0
    %2187 = vmatpush1.msra.mxu0 0.0
    %2188 = vmatprep.subr.mxu0 0.0
    %2189 = vmatpush1.msra.mxu0 0.0
    %2190 = vmatprep.subr.mxu0 0.0
    %2191 = vmatpush1.msra.mxu0 0.0
    %2192 = vmatprep.subr.mxu0 0.0
    %2193 = vmatpush1.msra.mxu0 0.0
    %2194 = vmatprep.mubr.f32.mxu0 0.0
    %2195 = vmatmul.mubr.f32.gmra.mrb[0].mxu0 %v2030
    %v2196 = vpop.f32.mrb[0].mxu0
    %v2197 = vadd.f32 0.0, %v2196
    %v2198 = vpop.f32.mrb[0].mxu0
    %v2199 = vadd.f32 0.0, %v2198
    %2200 = vmatprep.mubr.f32.mxu0 0.0
    %2201 = vmatmul.mubr.f32.gmra.mrb[0].mxu0 %v2033
    %v2202 = vpop.f32.mrb[0].mxu0
    %v2203 = vadd.f32 0.0, %v2202
    %v2204 = vpop.f32.mrb[0].mxu0
    %v2205 = vadd.f32 0.0, %v2204
    %2206 = vmatprep.mubr.f32.mxu0 0.0
    %2207 = vmatmul.mubr.f32.gmra.mrb[0].mxu0 %v2036
    %v2208 = vpop.f32.mrb[0].mxu0
    %v2209 = vadd.f32 0.0, %v2208
    %v2210 = vpop.f32.mrb[0].mxu0
    %v2211 = vadd.f32 0.0, %v2210
    %2212 = vmatprep.mubr.f32.mxu0 0.0
    %2213 = vmatmul.mubr.f32.gmra.mrb[0].mxu0 %v2039
    %v2214 = vpop.f32.mrb[0].mxu0
    %v2215 = vadd.f32 0.0, %v2214
    %v2216 = vpop.f32.mrb[0].mxu0
    %v2217 = vadd.f32 0.0, %v2216
    %2218 = vdwg.mxu0
    %2219 = vmatprep.subr.mxu0 %v2022
    %2220 = vmatpush1.msra.mxu0 %v2021
    %2221 = vmatprep.subr.mxu0 0.0
    %2222 = vmatpush1.msra.mxu0 0.0
    %2223 = vmatprep.subr.mxu0 0.0
    %2224 = vmatpush1.msra.mxu0 0.0
    %2225 = vmatprep.subr.mxu0 0.0
    %2226 = vmatpush1.msra.mxu0 0.0
    %2227 = vmatprep.subr.mxu0 0.0
    %2228 = vmatpush1.msra.mxu0 0.0
    %2229 = vmatprep.subr.mxu0 0.0
    %2230 = vmatpush1.msra.mxu0 0.0
    %2231 = vmatprep.subr.mxu0 0.0
    %2232 = vmatpush1.msra.mxu0 0.0
    %2233 = vmatprep.subr.mxu0 0.0
    %2234 = vmatpush1.msra.mxu0 0.0
    %2235 = vmatprep.subr.mxu0 0.0
    %2236 = vmatpush1.msra.mxu0 0.0
    %2237 = vmatprep.subr.mxu0 0.0
    %2238 = vmatpush1.msra.mxu0 0.0
    %2239 = vmatprep.subr.mxu0 0.0
    %2240 = vmatpush1.msra.mxu0 0.0
    %2241 = vmatprep.subr.mxu0 0.0
    %2242 = vmatpush1.msra.mxu0 0.0
    %2243 = vmatprep.subr.mxu0 0.0
    %2244 = vmatpush1.msra.mxu0 0.0
    %2245 = vmatprep.subr.mxu0 0.0
    %2246 = vmatpush1.msra.mxu0 0.0
    %2247 = vmatprep.subr.mxu0 0.0
    %2248 = vmatpush1.msra.mxu0 0.0
    %2249 = vmatprep.subr.mxu0 0.0
    %2250 = vmatpush1.msra.mxu0 0.0
    %2251 = vmatprep.subr.mxu0 0.0
    %2252 = vmatpush1.msra.mxu0 0.0
    %2253 = vmatprep.subr.mxu0 0.0
    %2254 = vmatpush1.msra.mxu0 0.0
    %2255 = vmatprep.subr.mxu0 0.0
    %2256 = vmatpush1.msra.mxu0 0.0
    %2257 = vmatprep.subr.mxu0 0.0
    %2258 = vmatpush1.msra.mxu0 0.0
    %2259 = vmatprep.subr.mxu0 0.0
    %2260 = vmatpush1.msra.mxu0 0.0
    %2261 = vmatprep.subr.mxu0 0.0
    %2262 = vmatpush1.msra.mxu0 0.0
    %2263 = vmatprep.subr.mxu0 0.0
    %2264 = vmatpush1.msra.mxu0 0.0
    %2265 = vmatprep.subr.mxu0 0.0
    %2266 = vmatpush1.msra.mxu0 0.0
    %2267 = vmatprep.subr.mxu0 0.0
    %2268 = vmatpush1.msra.mxu0 0.0
    %2269 = vmatprep.subr.mxu0 0.0
    %2270 = vmatpush1.msra.mxu0 0.0
    %2271 = vmatprep.subr.mxu0 0.0
    %2272 = vmatpush1.msra.mxu0 0.0
    %2273 = vmatprep.subr.mxu0 0.0
    %2274 = vmatpush1.msra.mxu0 0.0
    %2275 = vmatprep.subr.mxu0 0.0
    %2276 = vmatpush1.msra.mxu0 0.0
    %2277 = vmatprep.subr.mxu0 0.0
    %2278 = vmatpush1.msra.mxu0 0.0
    %2279 = vmatprep.subr.mxu0 0.0
    %2280 = vmatpush1.msra.mxu0 0.0
    %2281 = vmatprep.subr.mxu0 0.0
    %2282 = vmatpush1.msra.mxu0 0.0
    %2283 = vmatprep.mubr.f32.mxu0 0.0
    %2284 = vmatmul.mubr.f32.gmra.mrb[0].mxu0 %v2030
    %v2285 = vpop.f32.mrb[0].mxu0
    %v2286 = vadd.f32 0.0, %v2285
    %v2287 = vpop.f32.mrb[0].mxu0
    %v2288 = vadd.f32 0.0, %v2287
    %2289 = vmatprep.mubr.f32.mxu0 0.0
    %2290 = vmatmul.mubr.f32.gmra.mrb[0].mxu0 %v2033
    %v2291 = vpop.f32.mrb[0].mxu0
    %v2292 = vadd.f32 0.0, %v2291
    %v2293 = vpop.f32.mrb[0].mxu0
    %v2294 = vadd.f32 0.0, %v2293
    %2295 = vmatprep.mubr.f32.mxu0 0.0
    %2296 = vmatmul.mubr.f32.gmra.mrb[0].mxu0 %v2036
    %v2297 = vpop.f32.mrb[0].mxu0
    %v2298 = vadd.f32 0.0, %v2297
    %v2299 = vpop.f32.mrb[0].mxu0
    %v2300 = vadd.f32 0.0, %v2299
    %2301 = vmatprep.mubr.f32.mxu0 0.0
    %2302 = vmatmul.mubr.f32.gmra.mrb[0].mxu0 %v2039
    %v2303 = vpop.f32.mrb[0].mxu0
    %v2304 = vadd.f32 0.0, %v2303
    %v2305 = vpop.f32.mrb[0].mxu0
    %v2306 = vadd.f32 0.0, %v2305
    %2307 = vdwg.mxu0
    %v2308 = vadd.f32 %v1973, %v2108
    %v2309 = vadd.f32 %v1974, %v2110
    %v2310 = vadd.f32 %v1975, %v2197
    %v2311 = vadd.f32 %v1976, %v2199
    %v2312 = vadd.f32 %v1977, %v2286
    %v2313 = vadd.f32 %v1978, %v2288
    %v2314 = vadd.f32 %v1979, %v2114
    %v2315 = vadd.f32 %v1980, %v2116
    %v2316 = vadd.f32 %v1981, %v2203
    %v2317 = vadd.f32 %v1982, %v2205
    %v2318 = vadd.f32 %v1983, %v2292
    %v2319 = vadd.f32 %v1984, %v2294
    %v2320 = vadd.f32 %v1985, %v2120
    %v2321 = vadd.f32 %v1986, %v2122
    %v2322 = vadd.f32 %v1987, %v2209
    %v2323 = vadd.f32 %v1988, %v2211
    %v2324 = vadd.f32 %v1989, %v2298
    %v2325 = vadd.f32 %v1990, %v2300
    %v2326 = vadd.f32 %v1991, %v2126
    %v2327 = vadd.f32 %v1992, %v2128
    %v2328 = vadd.f32 %v1993, %v2215
    %v2329 = vadd.f32 %v1994, %v2217
    %v2330 = vadd.f32 %v1995, %v2304
    %v2331 = vadd.f32 %v1996, %v2306
    %s2332 = scalar_lea.vmem %s1, 224
    %v2333 = vld [vmem:[%s2332] sm:$0xff]
    %v2334 = vld [vmem:[%s2332 + $0x8] sm:$0xff]
    %v2335 = vld [vmem:[%s2332 + $0x10] sm:$0xff]
    %v2336 = vld [vmem:[%s2332 + $0x18] sm:$0xff]
    %2337 = vrot.lane.b32.xlu0 %v21, 78
    %v2338 = vpop.permute.xlu0 %2337
    %2339 = vrot.lane.b32.xlu0 %v22, 78
    %v2340 = vpop.permute.xlu0 %2339
    %2341 = vrot.lane.b32.xlu0 %v23, 78
    %v2342 = vpop.permute.xlu0 %2341
    %2343 = vrot.lane.b32.xlu0 %v24, 78
    %v2344 = vpop.permute.xlu0 %2343
    %2345 = vrot.lane.b32.xlu0 %v25, 78
    %v2346 = vpop.permute.xlu0 %2345
    %2347 = vrot.lane.b32.xlu0 %v26, 78
    %v2348 = vpop.permute.xlu0 %2347
    %2349 = vrot.lane.b32.xlu0 %v27, 78
    %v2350 = vpop.permute.xlu0 %2349
    %vm2351 = vcmask 637952
    %v2352 = vsel %vm2351, %v2338, %v2340
    %v2353 = vsel %vm2351, %v2340, %v2342
    %v2354 = vsel %vm2351, %v2342, %v2344
    %v2355 = vsel %vm2351, %v2344, %v2346
    %v2356 = vsel %vm2351, %v2346, %v2348
    %v2357 = vsel %vm2351, %v2348, %v2350
    %v2365 = vsel %vm71, %v2333, 0
    %v2368 = vsel %vm71, %v2334, 0
    %v2371 = vsel %vm71, %v2335, 0
    %v2374 = vsel %vm71, %v2336, 0
    %2376 = vmatprep.subr.mxu0 %v2353
    %2377 = vmatpush1.msra.mxu0 %v2352
    %2378 = vmatprep.subr.mxu0 0.0
    %2379 = vmatpush1.msra.mxu0 0.0
    %2380 = vmatprep.subr.mxu0 0.0
    %2381 = vmatpush1.msra.mxu0 0.0
    %2382 = vmatprep.subr.mxu0 0.0
    %2383 = vmatpush1.msra.mxu0 0.0
    %2384 = vmatprep.subr.mxu0 0.0
    %2385 = vmatpush1.msra.mxu0 0.0
    %2386 = vmatprep.subr.mxu0 0.0
    %2387 = vmatpush1.msra.mxu0 0.0
    %2388 = vmatprep.subr.mxu0 0.0
    %2389 = vmatpush1.msra.mxu0 0.0
    %2390 = vmatprep.subr.mxu0 0.0
    %2391 = vmatpush1.msra.mxu0 0.0
    %2392 = vmatprep.subr.mxu0 0.0
    %2393 = vmatpush1.msra.mxu0 0.0
    %2394 = vmatprep.subr.mxu0 0.0
    %2395 = vmatpush1.msra.mxu0 0.0
    %2396 = vmatprep.subr.mxu0 0.0
    %2397 = vmatpush1.msra.mxu0 0.0
    %2398 = vmatprep.subr.mxu0 0.0
    %2399 = vmatpush1.msra.mxu0 0.0
    %2400 = vmatprep.subr.mxu0 0.0
    %2401 = vmatpush1.msra.mxu0 0.0
    %2402 = vmatprep.subr.mxu0 0.0
    %2403 = vmatpush1.msra.mxu0 0.0
    %2404 = vmatprep.subr.mxu0 0.0
    %2405 = vmatpush1.msra.mxu0 0.0
    %2406 = vmatprep.subr.mxu0 0.0
    %2407 = vmatpush1.msra.mxu0 0.0
    %2408 = vmatprep.subr.mxu0 0.0
    %2409 = vmatpush1.msra.mxu0 0.0
    %2410 = vmatprep.subr.mxu0 0.0
    %2411 = vmatpush1.msra.mxu0 0.0
    %2412 = vmatprep.subr.mxu0 0.0
    %2413 = vmatpush1.msra.mxu0 0.0
    %2414 = vmatprep.subr.mxu0 0.0
    %2415 = vmatpush1.msra.mxu0 0.0
    %2416 = vmatprep.subr.mxu0 0.0
    %2417 = vmatpush1.msra.mxu0 0.0
    %2418 = vmatprep.subr.mxu0 0.0
    %2419 = vmatpush1.msra.mxu0 0.0
    %2420 = vmatprep.subr.mxu0 0.0
    %2421 = vmatpush1.msra.mxu0 0.0
    %2422 = vmatprep.subr.mxu0 0.0
    %2423 = vmatpush1.msra.mxu0 0.0
    %2424 = vmatprep.subr.mxu0 0.0
    %2425 = vmatpush1.msra.mxu0 0.0
    %2426 = vmatprep.subr.mxu0 0.0
    %2427 = vmatpush1.msra.mxu0 0.0
    %2428 = vmatprep.subr.mxu0 0.0
    %2429 = vmatpush1.msra.mxu0 0.0
    %2430 = vmatprep.subr.mxu0 0.0
    %2431 = vmatpush1.msra.mxu0 0.0
    %2432 = vmatprep.subr.mxu0 0.0
    %2433 = vmatpush1.msra.mxu0 0.0
    %2434 = vmatprep.subr.mxu0 0.0
    %2435 = vmatpush1.msra.mxu0 0.0
    %2436 = vmatprep.subr.mxu0 0.0
    %2437 = vmatpush1.msra.mxu0 0.0
    %2438 = vmatprep.subr.mxu0 0.0
    %2439 = vmatpush1.msra.mxu0 0.0
    %2440 = vmatprep.mubr.f32.mxu0 0.0
    %2441 = vmatmul.mubr.f32.gmra.mrb[0].mxu0 %v2365
    %v2442 = vpop.f32.mrb[0].mxu0
    %v2443 = vadd.f32 0.0, %v2442
    %v2444 = vpop.f32.mrb[0].mxu0
    %v2445 = vadd.f32 0.0, %v2444
    %2446 = vmatprep.mubr.f32.mxu0 0.0
    %2447 = vmatmul.mubr.f32.gmra.mrb[0].mxu0 %v2368
    %v2448 = vpop.f32.mrb[0].mxu0
    %v2449 = vadd.f32 0.0, %v2448
    %v2450 = vpop.f32.mrb[0].mxu0
    %v2451 = vadd.f32 0.0, %v2450
    %2452 = vmatprep.mubr.f32.mxu0 0.0
    %2453 = vmatmul.mubr.f32.gmra.mrb[0].mxu0 %v2371
    %v2454 = vpop.f32.mrb[0].mxu0
    %v2455 = vadd.f32 0.0, %v2454
    %v2456 = vpop.f32.mrb[0].mxu0
    %v2457 = vadd.f32 0.0, %v2456
    %2458 = vmatprep.mubr.f32.mxu0 0.0
    %2459 = vmatmul.mubr.f32.gmra.mrb[0].mxu0 %v2374
    %v2460 = vpop.f32.mrb[0].mxu0
    %v2461 = vadd.f32 0.0, %v2460
    %v2462 = vpop.f32.mrb[0].mxu0
    %v2463 = vadd.f32 0.0, %v2462
    %2464 = vdwg.mxu0
    %2465 = vmatprep.subr.mxu0 %v2355
    %2466 = vmatpush1.msra.mxu0 %v2354
    %2467 = vmatprep.subr.mxu0 0.0
    %2468 = vmatpush1.msra.mxu0 0.0
    %2469 = vmatprep.subr.mxu0 0.0
    %2470 = vmatpush1.msra.mxu0 0.0
    %2471 = vmatprep.subr.mxu0 0.0
    %2472 = vmatpush1.msra.mxu0 0.0
    %2473 = vmatprep.subr.mxu0 0.0
    %2474 = vmatpush1.msra.mxu0 0.0
    %2475 = vmatprep.subr.mxu0 0.0
    %2476 = vmatpush1.msra.mxu0 0.0
    %2477 = vmatprep.subr.mxu0 0.0
    %2478 = vmatpush1.msra.mxu0 0.0
    %2479 = vmatprep.subr.mxu0 0.0
    %2480 = vmatpush1.msra.mxu0 0.0
    %2481 = vmatprep.subr.mxu0 0.0
    %2482 = vmatpush1.msra.mxu0 0.0
    %2483 = vmatprep.subr.mxu0 0.0
    %2484 = vmatpush1.msra.mxu0 0.0
    %2485 = vmatprep.subr.mxu0 0.0
    %2486 = vmatpush1.msra.mxu0 0.0
    %2487 = vmatprep.subr.mxu0 0.0
    %2488 = vmatpush1.msra.mxu0 0.0
    %2489 = vmatprep.subr.mxu0 0.0
    %2490 = vmatpush1.msra.mxu0 0.0
    %2491 = vmatprep.subr.mxu0 0.0
    %2492 = vmatpush1.msra.mxu0 0.0
    %2493 = vmatprep.subr.mxu0 0.0
    %2494 = vmatpush1.msra.mxu0 0.0
    %2495 = vmatprep.subr.mxu0 0.0
    %2496 = vmatpush1.msra.mxu0 0.0
    %2497 = vmatprep.subr.mxu0 0.0
    %2498 = vmatpush1.msra.mxu0 0.0
    %2499 = vmatprep.subr.mxu0 0.0
    %2500 = vmatpush1.msra.mxu0 0.0
    %2501 = vmatprep.subr.mxu0 0.0
    %2502 = vmatpush1.msra.mxu0 0.0
    %2503 = vmatprep.subr.mxu0 0.0
    %2504 = vmatpush1.msra.mxu0 0.0
    %2505 = vmatprep.subr.mxu0 0.0
    %2506 = vmatpush1.msra.mxu0 0.0
    %2507 = vmatprep.subr.mxu0 0.0
    %2508 = vmatpush1.msra.mxu0 0.0
    %2509 = vmatprep.subr.mxu0 0.0
    %2510 = vmatpush1.msra.mxu0 0.0
    %2511 = vmatprep.subr.mxu0 0.0
    %2512 = vmatpush1.msra.mxu0 0.0
    %2513 = vmatprep.subr.mxu0 0.0
    %2514 = vmatpush1.msra.mxu0 0.0
    %2515 = vmatprep.subr.mxu0 0.0
    %2516 = vmatpush1.msra.mxu0 0.0
    %2517 = vmatprep.subr.mxu0 0.0
    %2518 = vmatpush1.msra.mxu0 0.0
    %2519 = vmatprep.subr.mxu0 0.0
    %2520 = vmatpush1.msra.mxu0 0.0
    %2521 = vmatprep.subr.mxu0 0.0
    %2522 = vmatpush1.msra.mxu0 0.0
    %2523 = vmatprep.subr.mxu0 0.0
    %2524 = vmatpush1.msra.mxu0 0.0
    %2525 = vmatprep.subr.mxu0 0.0
    %2526 = vmatpush1.msra.mxu0 0.0
    %2527 = vmatprep.subr.mxu0 0.0
    %2528 = vmatpush1.msra.mxu0 0.0
    %2529 = vmatprep.mubr.f32.mxu0 0.0
    %2530 = vmatmul.mubr.f32.gmra.mrb[0].mxu0 %v2365
    %v2531 = vpop.f32.mrb[0].mxu0
    %v2532 = vadd.f32 0.0, %v2531
    %v2533 = vpop.f32.mrb[0].mxu0
    %v2534 = vadd.f32 0.0, %v2533
    %2535 = vmatprep.mubr.f32.mxu0 0.0
    %2536 = vmatmul.mubr.f32.gmra.mrb[0].mxu0 %v2368
    %v2537 = vpop.f32.mrb[0].mxu0
    %v2538 = vadd.f32 0.0, %v2537
    %v2539 = vpop.f32.mrb[0].mxu0
    %v2540 = vadd.f32 0.0, %v2539
    %2541 = vmatprep.mubr.f32.mxu0 0.0
    %2542 = vmatmul.mubr.f32.gmra.mrb[0].mxu0 %v2371
    %v2543 = vpop.f32.mrb[0].mxu0
    %v2544 = vadd.f32 0.0, %v2543
    %v2545 = vpop.f32.mrb[0].mxu0
    %v2546 = vadd.f32 0.0, %v2545
    %2547 = vmatprep.mubr.f32.mxu0 0.0
    %2548 = vmatmul.mubr.f32.gmra.mrb[0].mxu0 %v2374
    %v2549 = vpop.f32.mrb[0].mxu0
    %v2550 = vadd.f32 0.0, %v2549
    %v2551 = vpop.f32.mrb[0].mxu0
    %v2552 = vadd.f32 0.0, %v2551
    %2553 = vdwg.mxu0
    %2554 = vmatprep.subr.mxu0 %v2357
    %2555 = vmatpush1.msra.mxu0 %v2356
    %2556 = vmatprep.subr.mxu0 0.0
    %2557 = vmatpush1.msra.mxu0 0.0
    %2558 = vmatprep.subr.mxu0 0.0
    %2559 = vmatpush1.msra.mxu0 0.0
    %2560 = vmatprep.subr.mxu0 0.0
    %2561 = vmatpush1.msra.mxu0 0.0
    %2562 = vmatprep.subr.mxu0 0.0
    %2563 = vmatpush1.msra.mxu0 0.0
    %2564 = vmatprep.subr.mxu0 0.0
    %2565 = vmatpush1.msra.mxu0 0.0
    %2566 = vmatprep.subr.mxu0 0.0
    %2567 = vmatpush1.msra.mxu0 0.0
    %2568 = vmatprep.subr.mxu0 0.0
    %2569 = vmatpush1.msra.mxu0 0.0
    %2570 = vmatprep.subr.mxu0 0.0
    %2571 = vmatpush1.msra.mxu0 0.0
    %2572 = vmatprep.subr.mxu0 0.0
    %2573 = vmatpush1.msra.mxu0 0.0
    %2574 = vmatprep.subr.mxu0 0.0
    %2575 = vmatpush1.msra.mxu0 0.0
    %2576 = vmatprep.subr.mxu0 0.0
    %2577 = vmatpush1.msra.mxu0 0.0
    %2578 = vmatprep.subr.mxu0 0.0
    %2579 = vmatpush1.msra.mxu0 0.0
    %2580 = vmatprep.subr.mxu0 0.0
    %2581 = vmatpush1.msra.mxu0 0.0
    %2582 = vmatprep.subr.mxu0 0.0
    %2583 = vmatpush1.msra.mxu0 0.0
    %2584 = vmatprep.subr.mxu0 0.0
    %2585 = vmatpush1.msra.mxu0 0.0
    %2586 = vmatprep.subr.mxu0 0.0
    %2587 = vmatpush1.msra.mxu0 0.0
    %2588 = vmatprep.subr.mxu0 0.0
    %2589 = vmatpush1.msra.mxu0 0.0
    %2590 = vmatprep.subr.mxu0 0.0
    %2591 = vmatpush1.msra.mxu0 0.0
    %2592 = vmatprep.subr.mxu0 0.0
    %2593 = vmatpush1.msra.mxu0 0.0
    %2594 = vmatprep.subr.mxu0 0.0
    %2595 = vmatpush1.msra.mxu0 0.0
    %2596 = vmatprep.subr.mxu0 0.0
    %2597 = vmatpush1.msra.mxu0 0.0
    %2598 = vmatprep.subr.mxu0 0.0
    %2599 = vmatpush1.msra.mxu0 0.0
    %2600 = vmatprep.subr.mxu0 0.0
    %2601 = vmatpush1.msra.mxu0 0.0
    %2602 = vmatprep.subr.mxu0 0.0
    %2603 = vmatpush1.msra.mxu0 0.0
    %2604 = vmatprep.subr.mxu0 0.0
    %2605 = vmatpush1.msra.mxu0 0.0
    %2606 = vmatprep.subr.mxu0 0.0
    %2607 = vmatpush1.msra.mxu0 0.0
    %2608 = vmatprep.subr.mxu0 0.0
    %2609 = vmatpush1.msra.mxu0 0.0
    %2610 = vmatprep.subr.mxu0 0.0
    %2611 = vmatpush1.msra.mxu0 0.0
    %2612 = vmatprep.subr.mxu0 0.0
    %2613 = vmatpush1.msra.mxu0 0.0
    %2614 = vmatprep.subr.mxu0 0.0
    %2615 = vmatpush1.msra.mxu0 0.0
    %2616 = vmatprep.subr.mxu0 0.0
    %2617 = vmatpush1.msra.mxu0 0.0
    %2618 = vmatprep.mubr.f32.mxu0 0.0
    %2619 = vmatmul.mubr.f32.gmra.mrb[0].mxu0 %v2365
    %v2620 = vpop.f32.mrb[0].mxu0
    %v2621 = vadd.f32 0.0, %v2620
    %v2622 = vpop.f32.mrb[0].mxu0
    %v2623 = vadd.f32 0.0, %v2622
    %2624 = vmatprep.mubr.f32.mxu0 0.0
    %2625 = vmatmul.mubr.f32.gmra.mrb[0].mxu0 %v2368
    %v2626 = vpop.f32.mrb[0].mxu0
    %v2627 = vadd.f32 0.0, %v2626
    %v2628 = vpop.f32.mrb[0].mxu0
    %v2629 = vadd.f32 0.0, %v2628
    %2630 = vmatprep.mubr.f32.mxu0 0.0
    %2631 = vmatmul.mubr.f32.gmra.mrb[0].mxu0 %v2371
    %v2632 = vpop.f32.mrb[0].mxu0
    %v2633 = vadd.f32 0.0, %v2632
    %v2634 = vpop.f32.mrb[0].mxu0
    %v2635 = vadd.f32 0.0, %v2634
    %2636 = vmatprep.mubr.f32.mxu0 0.0
    %2637 = vmatmul.mubr.f32.gmra.mrb[0].mxu0 %v2374
    %v2638 = vpop.f32.mrb[0].mxu0
    %v2639 = vadd.f32 0.0, %v2638
    %v2640 = vpop.f32.mrb[0].mxu0
    %v2641 = vadd.f32 0.0, %v2640
    %2642 = vdwg.mxu0
    %v2643 = vadd.f32 %v2308, %v2443
    %v2644 = vadd.f32 %v2309, %v2445
    %v2645 = vadd.f32 %v2310, %v2532
    %v2646 = vadd.f32 %v2311, %v2534
    %v2647 = vadd.f32 %v2312, %v2621
    %v2648 = vadd.f32 %v2313, %v2623
    %v2649 = vadd.f32 %v2314, %v2449
    %v2650 = vadd.f32 %v2315, %v2451
    %v2651 = vadd.f32 %v2316, %v2538
    %v2652 = vadd.f32 %v2317, %v2540
    %v2653 = vadd.f32 %v2318, %v2627
    %v2654 = vadd.f32 %v2319, %v2629
    %v2655 = vadd.f32 %v2320, %v2455
    %v2656 = vadd.f32 %v2321, %v2457
    %v2657 = vadd.f32 %v2322, %v2544
    %v2658 = vadd.f32 %v2323, %v2546
    %v2659 = vadd.f32 %v2324, %v2633
    %v2660 = vadd.f32 %v2325, %v2635
    %v2661 = vadd.f32 %v2326, %v2461
    %v2662 = vadd.f32 %v2327, %v2463
    %v2663 = vadd.f32 %v2328, %v2550
    %v2664 = vadd.f32 %v2329, %v2552
    %v2665 = vadd.f32 %v2330, %v2639
    %v2666 = vadd.f32 %v2331, %v2641
    %s2667 = scalar_lea.vmem %s1, 256
    %v2668 = vld [vmem:[%s2667] sm:$0xff]
    %v2669 = vld [vmem:[%s2667 + $0x8] sm:$0xff]
    %v2670 = vld [vmem:[%s2667 + $0x10] sm:$0xff]
    %v2671 = vld [vmem:[%s2667 + $0x18] sm:$0xff]
    %2672 = vrot.lane.b32.xlu0 %v21, 77
    %v2673 = vpop.permute.xlu0 %2672
    %2674 = vrot.lane.b32.xlu0 %v22, 77
    %v2675 = vpop.permute.xlu0 %2674
    %2676 = vrot.lane.b32.xlu0 %v23, 77
    %v2677 = vpop.permute.xlu0 %2676
    %2678 = vrot.lane.b32.xlu0 %v24, 77
    %v2679 = vpop.permute.xlu0 %2678
    %2680 = vrot.lane.b32.xlu0 %v25, 77
    %v2681 = vpop.permute.xlu0 %2680
    %2682 = vrot.lane.b32.xlu0 %v26, 77
    %v2683 = vpop.permute.xlu0 %2682
    %2684 = vrot.lane.b32.xlu0 %v27, 77
    %v2685 = vpop.permute.xlu0 %2684
    %vm2686 = vcmask 629760
    %v2687 = vsel %vm2686, %v2673, %v2675
    %v2688 = vsel %vm2686, %v2675, %v2677
    %v2689 = vsel %vm2686, %v2677, %v2679
    %v2690 = vsel %vm2686, %v2679, %v2681
    %v2691 = vsel %vm2686, %v2681, %v2683
    %v2692 = vsel %vm2686, %v2683, %v2685
    %v2700 = vsel %vm71, %v2668, 0
    %v2703 = vsel %vm71, %v2669, 0
    %v2706 = vsel %vm71, %v2670, 0
    %v2709 = vsel %vm71, %v2671, 0
    %2711 = vmatprep.subr.mxu0 %v2688
    %2712 = vmatpush1.msra.mxu0 %v2687
    %2713 = vmatprep.subr.mxu0 0.0
    %2714 = vmatpush1.msra.mxu0 0.0
    %2715 = vmatprep.subr.mxu0 0.0
    %2716 = vmatpush1.msra.mxu0 0.0
    %2717 = vmatprep.subr.mxu0 0.0
    %2718 = vmatpush1.msra.mxu0 0.0
    %2719 = vmatprep.subr.mxu0 0.0
    %2720 = vmatpush1.msra.mxu0 0.0
    %2721 = vmatprep.subr.mxu0 0.0
    %2722 = vmatpush1.msra.mxu0 0.0
    %2723 = vmatprep.subr.mxu0 0.0
    %2724 = vmatpush1.msra.mxu0 0.0
    %2725 = vmatprep.subr.mxu0 0.0
    %2726 = vmatpush1.msra.mxu0 0.0
    %2727 = vmatprep.subr.mxu0 0.0
    %2728 = vmatpush1.msra.mxu0 0.0
    %2729 = vmatprep.subr.mxu0 0.0
    %2730 = vmatpush1.msra.mxu0 0.0
    %2731 = vmatprep.subr.mxu0 0.0
    %2732 = vmatpush1.msra.mxu0 0.0
    %2733 = vmatprep.subr.mxu0 0.0
    %2734 = vmatpush1.msra.mxu0 0.0
    %2735 = vmatprep.subr.mxu0 0.0
    %2736 = vmatpush1.msra.mxu0 0.0
    %2737 = vmatprep.subr.mxu0 0.0
    %2738 = vmatpush1.msra.mxu0 0.0
    %2739 = vmatprep.subr.mxu0 0.0
    %2740 = vmatpush1.msra.mxu0 0.0
    %2741 = vmatprep.subr.mxu0 0.0
    %2742 = vmatpush1.msra.mxu0 0.0
    %2743 = vmatprep.subr.mxu0 0.0
    %2744 = vmatpush1.msra.mxu0 0.0
    %2745 = vmatprep.subr.mxu0 0.0
    %2746 = vmatpush1.msra.mxu0 0.0
    %2747 = vmatprep.subr.mxu0 0.0
    %2748 = vmatpush1.msra.mxu0 0.0
    %2749 = vmatprep.subr.mxu0 0.0
    %2750 = vmatpush1.msra.mxu0 0.0
    %2751 = vmatprep.subr.mxu0 0.0
    %2752 = vmatpush1.msra.mxu0 0.0
    %2753 = vmatprep.subr.mxu0 0.0
    %2754 = vmatpush1.msra.mxu0 0.0
    %2755 = vmatprep.subr.mxu0 0.0
    %2756 = vmatpush1.msra.mxu0 0.0
    %2757 = vmatprep.subr.mxu0 0.0
    %2758 = vmatpush1.msra.mxu0 0.0
    %2759 = vmatprep.subr.mxu0 0.0
    %2760 = vmatpush1.msra.mxu0 0.0
    %2761 = vmatprep.subr.mxu0 0.0
    %2762 = vmatpush1.msra.mxu0 0.0
    %2763 = vmatprep.subr.mxu0 0.0
    %2764 = vmatpush1.msra.mxu0 0.0
    %2765 = vmatprep.subr.mxu0 0.0
    %2766 = vmatpush1.msra.mxu0 0.0
    %2767 = vmatprep.subr.mxu0 0.0
    %2768 = vmatpush1.msra.mxu0 0.0
    %2769 = vmatprep.subr.mxu0 0.0
    %2770 = vmatpush1.msra.mxu0 0.0
    %2771 = vmatprep.subr.mxu0 0.0
    %2772 = vmatpush1.msra.mxu0 0.0
    %2773 = vmatprep.subr.mxu0 0.0
    %2774 = vmatpush1.msra.mxu0 0.0
    %2775 = vmatprep.mubr.f32.mxu0 0.0
    %2776 = vmatmul.mubr.f32.gmra.mrb[0].mxu0 %v2700
    %v2777 = vpop.f32.mrb[0].mxu0
    %v2778 = vadd.f32 0.0, %v2777
    %v2779 = vpop.f32.mrb[0].mxu0
    %v2780 = vadd.f32 0.0, %v2779
    %2781 = vmatprep.mubr.f32.mxu0 0.0
    %2782 = vmatmul.mubr.f32.gmra.mrb[0].mxu0 %v2703
    %v2783 = vpop.f32.mrb[0].mxu0
    %v2784 = vadd.f32 0.0, %v2783
    %v2785 = vpop.f32.mrb[0].mxu0
    %v2786 = vadd.f32 0.0, %v2785
    %2787 = vmatprep.mubr.f32.mxu0 0.0
    %2788 = vmatmul.mubr.f32.gmra.mrb[0].mxu0 %v2706
    %v2789 = vpop.f32.mrb[0].mxu0
    %v2790 = vadd.f32 0.0, %v2789
    %v2791 = vpop.f32.mrb[0].mxu0
    %v2792 = vadd.f32 0.0, %v2791
    %2793 = vmatprep.mubr.f32.mxu0 0.0
    %2794 = vmatmul.mubr.f32.gmra.mrb[0].mxu0 %v2709
    %v2795 = vpop.f32.mrb[0].mxu0
    %v2796 = vadd.f32 0.0, %v2795
    %v2797 = vpop.f32.mrb[0].mxu0
    %v2798 = vadd.f32 0.0, %v2797
    %2799 = vdwg.mxu0
    %2800 = vmatprep.subr.mxu0 %v2690
    %2801 = vmatpush1.msra.mxu0 %v2689
    %2802 = vmatprep.subr.mxu0 0.0
    %2803 = vmatpush1.msra.mxu0 0.0
    %2804 = vmatprep.subr.mxu0 0.0
    %2805 = vmatpush1.msra.mxu0 0.0
    %2806 = vmatprep.subr.mxu0 0.0
    %2807 = vmatpush1.msra.mxu0 0.0
    %2808 = vmatprep.subr.mxu0 0.0
    %2809 = vmatpush1.msra.mxu0 0.0
    %2810 = vmatprep.subr.mxu0 0.0
    %2811 = vmatpush1.msra.mxu0 0.0
    %2812 = vmatprep.subr.mxu0 0.0
    %2813 = vmatpush1.msra.mxu0 0.0
    %2814 = vmatprep.subr.mxu0 0.0
    %2815 = vmatpush1.msra.mxu0 0.0
    %2816 = vmatprep.subr.mxu0 0.0
    %2817 = vmatpush1.msra.mxu0 0.0
    %2818 = vmatprep.subr.mxu0 0.0
    %2819 = vmatpush1.msra.mxu0 0.0
    %2820 = vmatprep.subr.mxu0 0.0
    %2821 = vmatpush1.msra.mxu0 0.0
    %2822 = vmatprep.subr.mxu0 0.0
    %2823 = vmatpush1.msra.mxu0 0.0
    %2824 = vmatprep.subr.mxu0 0.0
    %2825 = vmatpush1.msra.mxu0 0.0
    %2826 = vmatprep.subr.mxu0 0.0
    %2827 = vmatpush1.msra.mxu0 0.0
    %2828 = vmatprep.subr.mxu0 0.0
    %2829 = vmatpush1.msra.mxu0 0.0
    %2830 = vmatprep.subr.mxu0 0.0
    %2831 = vmatpush1.msra.mxu0 0.0
    %2832 = vmatprep.subr.mxu0 0.0
    %2833 = vmatpush1.msra.mxu0 0.0
    %2834 = vmatprep.subr.mxu0 0.0
    %2835 = vmatpush1.msra.mxu0 0.0
    %2836 = vmatprep.subr.mxu0 0.0
    %2837 = vmatpush1.msra.mxu0 0.0
    %2838 = vmatprep.subr.mxu0 0.0
    %2839 = vmatpush1.msra.mxu0 0.0
    %2840 = vmatprep.subr.mxu0 0.0
    %2841 = vmatpush1.msra.mxu0 0.0
    %2842 = vmatprep.subr.mxu0 0.0
    %2843 = vmatpush1.msra.mxu0 0.0
    %2844 = vmatprep.subr.mxu0 0.0
    %2845 = vmatpush1.msra.mxu0 0.0
    %2846 = vmatprep.subr.mxu0 0.0
    %2847 = vmatpush1.msra.mxu0 0.0
    %2848 = vmatprep.subr.mxu0 0.0
    %2849 = vmatpush1.msra.mxu0 0.0
    %2850 = vmatprep.subr.mxu0 0.0
    %2851 = vmatpush1.msra.mxu0 0.0
    %2852 = vmatprep.subr.mxu0 0.0
    %2853 = vmatpush1.msra.mxu0 0.0
    %2854 = vmatprep.subr.mxu0 0.0
    %2855 = vmatpush1.msra.mxu0 0.0
    %2856 = vmatprep.subr.mxu0 0.0
    %2857 = vmatpush1.msra.mxu0 0.0
    %2858 = vmatprep.subr.mxu0 0.0
    %2859 = vmatpush1.msra.mxu0 0.0
    %2860 = vmatprep.subr.mxu0 0.0
    %2861 = vmatpush1.msra.mxu0 0.0
    %2862 = vmatprep.subr.mxu0 0.0
    %2863 = vmatpush1.msra.mxu0 0.0
    %2864 = vmatprep.mubr.f32.mxu0 0.0
    %2865 = vmatmul.mubr.f32.gmra.mrb[0].mxu0 %v2700
    %v2866 = vpop.f32.mrb[0].mxu0
    %v2867 = vadd.f32 0.0, %v2866
    %v2868 = vpop.f32.mrb[0].mxu0
    %v2869 = vadd.f32 0.0, %v2868
    %2870 = vmatprep.mubr.f32.mxu0 0.0
    %2871 = vmatmul.mubr.f32.gmra.mrb[0].mxu0 %v2703
    %v2872 = vpop.f32.mrb[0].mxu0
    %v2873 = vadd.f32 0.0, %v2872
    %v2874 = vpop.f32.mrb[0].mxu0
    %v2875 = vadd.f32 0.0, %v2874
    %2876 = vmatprep.mubr.f32.mxu0 0.0
    %2877 = vmatmul.mubr.f32.gmra.mrb[0].mxu0 %v2706
    %v2878 = vpop.f32.mrb[0].mxu0
    %v2879 = vadd.f32 0.0, %v2878
    %v2880 = vpop.f32.mrb[0].mxu0
    %v2881 = vadd.f32 0.0, %v2880
    %2882 = vmatprep.mubr.f32.mxu0 0.0
    %2883 = vmatmul.mubr.f32.gmra.mrb[0].mxu0 %v2709
    %v2884 = vpop.f32.mrb[0].mxu0
    %v2885 = vadd.f32 0.0, %v2884
    %v2886 = vpop.f32.mrb[0].mxu0
    %v2887 = vadd.f32 0.0, %v2886
    %2888 = vdwg.mxu0
    %2889 = vmatprep.subr.mxu0 %v2692
    %2890 = vmatpush1.msra.mxu0 %v2691
    %2891 = vmatprep.subr.mxu0 0.0
    %2892 = vmatpush1.msra.mxu0 0.0
    %2893 = vmatprep.subr.mxu0 0.0
    %2894 = vmatpush1.msra.mxu0 0.0
    %2895 = vmatprep.subr.mxu0 0.0
    %2896 = vmatpush1.msra.mxu0 0.0
    %2897 = vmatprep.subr.mxu0 0.0
    %2898 = vmatpush1.msra.mxu0 0.0
    %2899 = vmatprep.subr.mxu0 0.0
    %2900 = vmatpush1.msra.mxu0 0.0
    %2901 = vmatprep.subr.mxu0 0.0
    %2902 = vmatpush1.msra.mxu0 0.0
    %2903 = vmatprep.subr.mxu0 0.0
    %2904 = vmatpush1.msra.mxu0 0.0
    %2905 = vmatprep.subr.mxu0 0.0
    %2906 = vmatpush1.msra.mxu0 0.0
    %2907 = vmatprep.subr.mxu0 0.0
    %2908 = vmatpush1.msra.mxu0 0.0
    %2909 = vmatprep.subr.mxu0 0.0
    %2910 = vmatpush1.msra.mxu0 0.0
    %2911 = vmatprep.subr.mxu0 0.0
    %2912 = vmatpush1.msra.mxu0 0.0
    %2913 = vmatprep.subr.mxu0 0.0
    %2914 = vmatpush1.msra.mxu0 0.0
    %2915 = vmatprep.subr.mxu0 0.0
    %2916 = vmatpush1.msra.mxu0 0.0
    %2917 = vmatprep.subr.mxu0 0.0
    %2918 = vmatpush1.msra.mxu0 0.0
    %2919 = vmatprep.subr.mxu0 0.0
    %2920 = vmatpush1.msra.mxu0 0.0
    %2921 = vmatprep.subr.mxu0 0.0
    %2922 = vmatpush1.msra.mxu0 0.0
    %2923 = vmatprep.subr.mxu0 0.0
    %2924 = vmatpush1.msra.mxu0 0.0
    %2925 = vmatprep.subr.mxu0 0.0
    %2926 = vmatpush1.msra.mxu0 0.0
    %2927 = vmatprep.subr.mxu0 0.0
    %2928 = vmatpush1.msra.mxu0 0.0
    %2929 = vmatprep.subr.mxu0 0.0
    %2930 = vmatpush1.msra.mxu0 0.0
    %2931 = vmatprep.subr.mxu0 0.0
    %2932 = vmatpush1.msra.mxu0 0.0
    %2933 = vmatprep.subr.mxu0 0.0
    %2934 = vmatpush1.msra.mxu0 0.0
    %2935 = vmatprep.subr.mxu0 0.0
    %2936 = vmatpush1.msra.mxu0 0.0
    %2937 = vmatprep.subr.mxu0 0.0
    %2938 = vmatpush1.msra.mxu0 0.0
    %2939 = vmatprep.subr.mxu0 0.0
    %2940 = vmatpush1.msra.mxu0 0.0
    %2941 = vmatprep.subr.mxu0 0.0
    %2942 = vmatpush1.msra.mxu0 0.0
    %2943 = vmatprep.subr.mxu0 0.0
    %2944 = vmatpush1.msra.mxu0 0.0
    %2945 = vmatprep.subr.mxu0 0.0
    %2946 = vmatpush1.msra.mxu0 0.0
    %2947 = vmatprep.subr.mxu0 0.0
    %2948 = vmatpush1.msra.mxu0 0.0
    %2949 = vmatprep.subr.mxu0 0.0
    %2950 = vmatpush1.msra.mxu0 0.0
    %2951 = vmatprep.subr.mxu0 0.0
    %2952 = vmatpush1.msra.mxu0 0.0
    %2953 = vmatprep.mubr.f32.mxu0 0.0
    %2954 = vmatmul.mubr.f32.gmra.mrb[0].mxu0 %v2700
    %v2955 = vpop.f32.mrb[0].mxu0
    %v2956 = vadd.f32 0.0, %v2955
    %v2957 = vpop.f32.mrb[0].mxu0
    %v2958 = vadd.f32 0.0, %v2957
    %2959 = vmatprep.mubr.f32.mxu0 0.0
    %2960 = vmatmul.mubr.f32.gmra.mrb[0].mxu0 %v2703
    %v2961 = vpop.f32.mrb[0].mxu0
    %v2962 = vadd.f32 0.0, %v2961
    %v2963 = vpop.f32.mrb[0].mxu0
    %v2964 = vadd.f32 0.0, %v2963
    %2965 = vmatprep.mubr.f32.mxu0 0.0
    %2966 = vmatmul.mubr.f32.gmra.mrb[0].mxu0 %v2706
    %v2967 = vpop.f32.mrb[0].mxu0
    %v2968 = vadd.f32 0.0, %v2967
    %v2969 = vpop.f32.mrb[0].mxu0
    %v2970 = vadd.f32 0.0, %v2969
    %2971 = vmatprep.mubr.f32.mxu0 0.0
    %2972 = vmatmul.mubr.f32.gmra.mrb[0].mxu0 %v2709
    %v2973 = vpop.f32.mrb[0].mxu0
    %v2974 = vadd.f32 0.0, %v2973
    %v2975 = vpop.f32.mrb[0].mxu0
    %v2976 = vadd.f32 0.0, %v2975
    %2977 = vdwg.mxu0
    %v2978 = vadd.f32 %v2643, %v2778
    %v2979 = vadd.f32 %v2644, %v2780
    %v2980 = vadd.f32 %v2645, %v2867
    %v2981 = vadd.f32 %v2646, %v2869
    %v2982 = vadd.f32 %v2647, %v2956
    %v2983 = vadd.f32 %v2648, %v2958
    %v2984 = vadd.f32 %v2649, %v2784
    %v2985 = vadd.f32 %v2650, %v2786
    %v2986 = vadd.f32 %v2651, %v2873
    %v2987 = vadd.f32 %v2652, %v2875
    %v2988 = vadd.f32 %v2653, %v2962
    %v2989 = vadd.f32 %v2654, %v2964
    %v2990 = vadd.f32 %v2655, %v2790
    %v2991 = vadd.f32 %v2656, %v2792
    %v2992 = vadd.f32 %v2657, %v2879
    %v2993 = vadd.f32 %v2658, %v2881
    %v2994 = vadd.f32 %v2659, %v2968
    %v2995 = vadd.f32 %v2660, %v2970
    %v2996 = vadd.f32 %v2661, %v2796
    %v2997 = vadd.f32 %v2662, %v2798
    %v2998 = vadd.f32 %v2663, %v2885
    %v2999 = vadd.f32 %v2664, %v2887
    %v3000 = vadd.f32 %v2665, %v2974
    %v3001 = vadd.f32 %v2666, %v2976
    %v3002 = vmax.f32 %v2978, 0.0
    %v3003 = vmax.f32 %v2979, 0.0
    %v3004 = vmax.f32 %v2980, 0.0
    %v3005 = vmax.f32 %v2981, 0.0
    %v3006 = vmax.f32 %v2982, 0.0
    %v3007 = vmax.f32 %v2983, 0.0
    %v3008 = vmax.f32 %v2984, 0.0
    %v3009 = vmax.f32 %v2985, 0.0
    %v3010 = vmax.f32 %v2986, 0.0
    %v3011 = vmax.f32 %v2987, 0.0
    %v3012 = vmax.f32 %v2988, 0.0
    %v3013 = vmax.f32 %v2989, 0.0
    %v3014 = vmax.f32 %v2990, 0.0
    %v3015 = vmax.f32 %v2991, 0.0
    %v3016 = vmax.f32 %v2992, 0.0
    %v3017 = vmax.f32 %v2993, 0.0
    %v3018 = vmax.f32 %v2994, 0.0
    %v3019 = vmax.f32 %v2995, 0.0
    %v3020 = vmax.f32 %v2996, 0.0
    %v3021 = vmax.f32 %v2997, 0.0
    %v3022 = vmax.f32 %v2998, 0.0
    %v3023 = vmax.f32 %v2999, 0.0
    %v3024 = vmax.f32 %v3000, 0.0
    %v3025 = vmax.f32 %v3001, 0.0
    %v3026 = vmax.f32 %v3002, 1e-06
    %v3027 = vmax.f32 %v3003, 1e-06
    %v3028 = vmax.f32 %v3004, 1e-06
    %v3029 = vmax.f32 %v3005, 1e-06
    %v3030 = vmax.f32 %v3006, 1e-06
    %v3031 = vmax.f32 %v3007, 1e-06
    %v3032 = vmax.f32 %v3008, 1e-06
    %v3033 = vmax.f32 %v3009, 1e-06
    %v3034 = vmax.f32 %v3010, 1e-06
    %v3035 = vmax.f32 %v3011, 1e-06
    %v3036 = vmax.f32 %v3012, 1e-06
    %v3037 = vmax.f32 %v3013, 1e-06
    %v3038 = vmax.f32 %v3014, 1e-06
    %v3039 = vmax.f32 %v3015, 1e-06
    %v3040 = vmax.f32 %v3016, 1e-06
    %v3041 = vmax.f32 %v3017, 1e-06
    %v3042 = vmax.f32 %v3018, 1e-06
    %v3043 = vmax.f32 %v3019, 1e-06
    %v3044 = vmax.f32 %v3020, 1e-06
    %v3045 = vmax.f32 %v3021, 1e-06
    %v3046 = vmax.f32 %v3022, 1e-06
    %v3047 = vmax.f32 %v3023, 1e-06
    %v3048 = vmax.f32 %v3024, 1e-06
    %v3049 = vmax.f32 %v3025, 1e-06
    %v3050 = vmul.f32 %v3026, %v3026
    %v3051 = vmul.f32 %v3027, %v3027
    %v3052 = vmul.f32 %v3028, %v3028
    %v3053 = vmul.f32 %v3029, %v3029
    %v3054 = vmul.f32 %v3030, %v3030
    %v3055 = vmul.f32 %v3031, %v3031
    %v3056 = vmul.f32 %v3032, %v3032
    %v3057 = vmul.f32 %v3033, %v3033
    %v3058 = vmul.f32 %v3034, %v3034
    %v3059 = vmul.f32 %v3035, %v3035
    %v3060 = vmul.f32 %v3036, %v3036
    %v3061 = vmul.f32 %v3037, %v3037
    %v3062 = vmul.f32 %v3038, %v3038
    %v3063 = vmul.f32 %v3039, %v3039
    %v3064 = vmul.f32 %v3040, %v3040
    %v3065 = vmul.f32 %v3041, %v3041
    %v3066 = vmul.f32 %v3042, %v3042
    %v3067 = vmul.f32 %v3043, %v3043
    %v3068 = vmul.f32 %v3044, %v3044
    %v3069 = vmul.f32 %v3045, %v3045
    %v3070 = vmul.f32 %v3046, %v3046
    %v3071 = vmul.f32 %v3047, %v3047
    %v3072 = vmul.f32 %v3048, %v3048
    %v3073 = vmul.f32 %v3049, %v3049
    %v3074 = vmul.f32 %v3050, %v3026
    %v3075 = vmul.f32 %v3051, %v3027
    %v3076 = vmul.f32 %v3052, %v3028
    %v3077 = vmul.f32 %v3053, %v3029
    %v3078 = vmul.f32 %v3054, %v3030
    %v3079 = vmul.f32 %v3055, %v3031
    %v3080 = vmul.f32 %v3056, %v3032
    %v3081 = vmul.f32 %v3057, %v3033
    %v3082 = vmul.f32 %v3058, %v3034
    %v3083 = vmul.f32 %v3059, %v3035
    %v3084 = vmul.f32 %v3060, %v3036
    %v3085 = vmul.f32 %v3061, %v3037
    %v3086 = vmul.f32 %v3062, %v3038
    %v3087 = vmul.f32 %v3063, %v3039
    %v3088 = vmul.f32 %v3064, %v3040
    %v3089 = vmul.f32 %v3065, %v3041
    %v3090 = vmul.f32 %v3066, %v3042
    %v3091 = vmul.f32 %v3067, %v3043
    %v3092 = vmul.f32 %v3068, %v3044
    %v3093 = vmul.f32 %v3069, %v3045
    %v3094 = vmul.f32 %v3070, %v3046
    %v3095 = vmul.f32 %v3071, %v3047
    %v3096 = vmul.f32 %v3072, %v3048
    %v3097 = vmul.f32 %v3073, %v3049
    %v3098 = vld [vmem:[%s2] sm:$0x3f]
    %v3100 = vlaneseq
    %v3101 = vshrl.u32 %v3100, 7
    %v3102 = vsub.s32 0, %v3101
    %v3103 = vrot.slane %v3098, %v3102
    %v3104 = vlaneseq
    %v3105 = vshrl.u32 %v3104, 7
    %v3106 = vsub.s32 1, %v3105
    %v3107 = vrot.slane %v3098, %v3106
    %v3108 = vlaneseq
    %v3109 = vshrl.u32 %v3108, 7
    %v3110 = vsub.s32 2, %v3109
    %v3111 = vrot.slane %v3098, %v3110
    %v3112 = vlaneseq
    %v3113 = vshrl.u32 %v3112, 7
    %v3114 = vsub.s32 3, %v3113
    %v3115 = vrot.slane %v3098, %v3114
    %v3116 = vlaneseq
    %v3117 = vshrl.u32 %v3116, 7
    %v3118 = vsub.s32 4, %v3117
    %v3119 = vrot.slane %v3098, %v3118
    %v3120 = vlaneseq
    %v3121 = vshrl.u32 %v3120, 7
    %v3122 = vsub.s32 5, %v3121
    %v3123 = vrot.slane %v3098, %v3122
    %v3130 = vmul.f32 %v3074, %v3103
    %v3131 = vmul.f32 %v3075, %v3107
    %v3132 = vmul.f32 %v3076, %v3111
    %v3133 = vmul.f32 %v3077, %v3115
    %v3134 = vmul.f32 %v3078, %v3119
    %v3135 = vmul.f32 %v3079, %v3123
    %v3136 = vmul.f32 %v3080, %v3103
    %v3137 = vmul.f32 %v3081, %v3107
    %v3138 = vmul.f32 %v3082, %v3111
    %v3139 = vmul.f32 %v3083, %v3115
    %v3140 = vmul.f32 %v3084, %v3119
    %v3141 = vmul.f32 %v3085, %v3123
    %v3142 = vmul.f32 %v3086, %v3103
    %v3143 = vmul.f32 %v3087, %v3107
    %v3144 = vmul.f32 %v3088, %v3111
    %v3145 = vmul.f32 %v3089, %v3115
    %v3146 = vmul.f32 %v3090, %v3119
    %v3147 = vmul.f32 %v3091, %v3123
    %v3148 = vmul.f32 %v3092, %v3103
    %v3149 = vmul.f32 %v3093, %v3107
    %v3150 = vmul.f32 %v3094, %v3111
    %v3151 = vmul.f32 %v3095, %v3115
    %v3152 = vmul.f32 %v3096, %v3119
    %v3153 = vmul.f32 %v3097, %v3123
    %v3154 = vadd.f32 %v3130, %v3131
    %v3155 = vadd.f32 %v3154, %v3132
    %3156 = vadd.xlane.f32.xlu0 %v3155
    %v3157 = vpop.xlane.xlu0 %3156
    %v3158 = vadd.f32 %v3136, %v3137
    %v3159 = vadd.f32 %v3158, %v3138
    %3160 = vadd.xlane.f32.xlu0 %v3159
    %v3161 = vpop.xlane.xlu0 %3160
    %v3162 = vadd.f32 %v3142, %v3143
    %v3163 = vadd.f32 %v3162, %v3144
    %3164 = vadd.xlane.f32.xlu0 %v3163
    %v3165 = vpop.xlane.xlu0 %3164
    %v3166 = vadd.f32 %v3148, %v3149
    %v3167 = vadd.f32 %v3166, %v3150
    %3168 = vadd.xlane.f32.xlu0 %v3167
    %v3169 = vpop.xlane.xlu0 %3168
    %v3170 = vadd.f32 %v3133, %v3134
    %v3171 = vadd.f32 %v3170, %v3135
    %3172 = vadd.xlane.f32.xlu0 %v3171
    %v3173 = vpop.xlane.xlu0 %3172
    %v3174 = vadd.f32 %v3139, %v3140
    %v3175 = vadd.f32 %v3174, %v3141
    %3176 = vadd.xlane.f32.xlu0 %v3175
    %v3177 = vpop.xlane.xlu0 %3176
    %v3178 = vadd.f32 %v3145, %v3146
    %v3179 = vadd.f32 %v3178, %v3147
    %3180 = vadd.xlane.f32.xlu0 %v3179
    %v3181 = vpop.xlane.xlu0 %3180
    %v3182 = vadd.f32 %v3151, %v3152
    %v3183 = vadd.f32 %v3182, %v3153
    %3184 = vadd.xlane.f32.xlu0 %v3183
    %v3185 = vpop.xlane.xlu0 %3184
    %vm3186 = vcmask 7168
    %v3187 = vsel %vm3186, %v3157, %v3173
    %v3188 = vsel %vm3186, %v3161, %v3177
    %v3189 = vsel %vm3186, %v3165, %v3181
    %v3190 = vsel %vm3186, %v3169, %v3185
    %vm3191 = vcmask 15360
    %v3192 = vsel %vm3191, %v3187, 1.0
    %v3193 = vsel %vm3191, %v3188, 1.0
    %v3194 = vsel %vm3191, %v3189, 1.0
    %v3195 = vsel %vm3191, %v3190, 1.0
    %v3196 = vmul.f32 %v3192, 0.00390625
    %v3197 = vmul.f32 %v3193, 0.00390625
    %v3198 = vmul.f32 %v3194, 0.00390625
    %v3199 = vmul.f32 %v3195, 0.00390625
    %v3200 = vlog2.pop %v3196
    %v3201 = vmul.f32 %v3200, 0.6931472
    %v3202 = vlog2.pop %v3197
    %v3203 = vmul.f32 %v3202, 0.6931472
    %v3204 = vlog2.pop %v3198
    %v3205 = vmul.f32 %v3204, 0.6931472
    %v3206 = vlog2.pop %v3199
    %v3207 = vmul.f32 %v3206, 0.6931472
    %v3208 = vmul.f32 %v3201, 0.33333334
    %v3209 = vmul.f32 %v3203, 0.33333334
    %v3210 = vmul.f32 %v3205, 0.33333334
    %v3211 = vmul.f32 %v3207, 0.33333334
    %v3212 = vmul.f32 %v3208, 1.442695
    %v3213 = vpow.pop %v3212
    %v3214 = vmul.f32 %v3209, 1.442695
    %v3215 = vpow.pop %v3214
    %v3216 = vmul.f32 %v3210, 1.442695
    %v3217 = vpow.pop %v3216
    %v3218 = vmul.f32 %v3211, 1.442695
    %v3219 = vpow.pop %v3218
    %3220 = vxpose.xlu0.b32.start [1/16] %v3213, 128
    %3221 = vxpose.xlu0.b32.cont [2/16] %v3215, 128
    %3222 = vxpose.xlu0.b32.cont [3/16] %v3217, 128
    %3223 = vxpose.xlu0.b32.cont [4/16] %v3219, 128
    %3224 = vxpose.xlu0.b32.cont [5/16] 0.0, 128
    %3225 = vxpose.xlu0.b32.cont [6/16] 0.0, 128
    %3226 = vxpose.xlu0.b32.cont [7/16] 0.0, 128
    %3227 = vxpose.xlu0.b32.cont [8/16] 0.0, 128
    %3228 = vxpose.xlu0.b32.cont [9/16] 0.0, 128
    %3229 = vxpose.xlu0.b32.cont [10/16] 0.0, 128
    %3230 = vxpose.xlu0.b32.cont [11/16] 0.0, 128
    %3231 = vxpose.xlu0.b32.cont [12/16] 0.0, 128
    %3232 = vxpose.xlu0.b32.cont [13/16] 0.0, 128
    %3233 = vxpose.xlu0.b32.cont [14/16] 0.0, 128
    %3234 = vxpose.xlu0.b32.cont [15/16] 0.0, 128
    %3235 = vxpose.xlu0.b32.end [16/16] 0.0, 128
    %v3236 = vpop.trf.xlu0
    %v3237 = vpop.trf.xlu0
    %v3238 = vpop.trf.xlu0
    %v3239 = vpop.trf.xlu0
    %v3240 = vpop.trf.xlu0
    %v3241 = vpop.trf.xlu0
    %v3242 = vpop.trf.xlu0
    %v3243 = vpop.trf.xlu0
    %v3244 = vpop.trf.xlu0
    %v3245 = vpop.trf.xlu0
    %v3246 = vpop.trf.xlu0
    %v3247 = vpop.trf.xlu0
    %v3248 = vpop.trf.xlu0
    %v3249 = vpop.trf.xlu0
    %v3250 = vpop.trf.xlu0
    %v3251 = vpop.trf.xlu0
    %v3252 = vmul.f32 %v3236, %v3236
    %vm3253 = vcmask 261120
    %v3254 = vsel %vm3253, %v3252, 0.0
    %3255 = vadd.xlane.f32.xlu0 %v3254
    %v3256 = vpop.xlane.xlu0 %3255
    %v3257 = vmax.f32 %v3256, 1e-24
    %v3258 = vrsqrt.pop %v3257
    %v3259 = vmul.f32 %v3236, %v3258
    %v3260 = vld [vmem:[%s3] sm:$0xff]
    %v3261 = vld [vmem:[%s3 + $0x8] sm:$0xff]
    %v3262 = vld [vmem:[%s3 + $0x10] sm:$0xff]
    %v3263 = vld [vmem:[%s3 + $0x18] sm:$0xff]
    %v3264 = vld [vmem:[%s4] sm:$0x1]
    %v3266 = vlaneseq
    %v3267 = vshrl.u32 %v3266, 7
    %v3268 = vsub.s32 0, %v3267
    %v3269 = vrot.slane %v3264, %v3268
    %v3272 = vsel %vm3253, %v3259, 0
    %3274 = vmatprep.subr.mxu0 0.0
    %3275 = vmatpush1.msra.mxu0 %v3260
    %3276 = vmatprep.subr.mxu0 0.0
    %3277 = vmatpush1.msra.mxu0 %v3261
    %3278 = vmatprep.subr.mxu0 0.0
    %3279 = vmatpush1.msra.mxu0 %v3262
    %3280 = vmatprep.subr.mxu0 0.0
    %3281 = vmatpush1.msra.mxu0 %v3263
    %3282 = vmatprep.subr.mxu0 0.0
    %3283 = vmatpush1.msra.mxu0 0.0
    %3284 = vmatprep.subr.mxu0 0.0
    %3285 = vmatpush1.msra.mxu0 0.0
    %3286 = vmatprep.subr.mxu0 0.0
    %3287 = vmatpush1.msra.mxu0 0.0
    %3288 = vmatprep.subr.mxu0 0.0
    %3289 = vmatpush1.msra.mxu0 0.0
    %3290 = vmatprep.subr.mxu0 0.0
    %3291 = vmatpush1.msra.mxu0 0.0
    %3292 = vmatprep.subr.mxu0 0.0
    %3293 = vmatpush1.msra.mxu0 0.0
    %3294 = vmatprep.subr.mxu0 0.0
    %3295 = vmatpush1.msra.mxu0 0.0
    %3296 = vmatprep.subr.mxu0 0.0
    %3297 = vmatpush1.msra.mxu0 0.0
    %3298 = vmatprep.subr.mxu0 0.0
    %3299 = vmatpush1.msra.mxu0 0.0
    %3300 = vmatprep.subr.mxu0 0.0
    %3301 = vmatpush1.msra.mxu0 0.0
    %3302 = vmatprep.subr.mxu0 0.0
    %3303 = vmatpush1.msra.mxu0 0.0
    %3304 = vmatprep.subr.mxu0 0.0
    %3305 = vmatpush1.msra.mxu0 0.0
    %3306 = vmatprep.subr.mxu0 0.0
    %3307 = vmatpush1.msra.mxu0 0.0
    %3308 = vmatprep.subr.mxu0 0.0
    %3309 = vmatpush1.msra.mxu0 0.0
    %3310 = vmatprep.subr.mxu0 0.0
    %3311 = vmatpush1.msra.mxu0 0.0
    %3312 = vmatprep.subr.mxu0 0.0
    %3313 = vmatpush1.msra.mxu0 0.0
    %3314 = vmatprep.subr.mxu0 0.0
    %3315 = vmatpush1.msra.mxu0 0.0
    %3316 = vmatprep.subr.mxu0 0.0
    %3317 = vmatpush1.msra.mxu0 0.0
    %3318 = vmatprep.subr.mxu0 0.0
    %3319 = vmatpush1.msra.mxu0 0.0
    %3320 = vmatprep.subr.mxu0 0.0
    %3321 = vmatpush1.msra.mxu0 0.0
    %3322 = vmatprep.subr.mxu0 0.0
    %3323 = vmatpush1.msra.mxu0 0.0
    %3324 = vmatprep.subr.mxu0 0.0
    %3325 = vmatpush1.msra.mxu0 0.0
    %3326 = vmatprep.subr.mxu0 0.0
    %3327 = vmatpush1.msra.mxu0 0.0
    %3328 = vmatprep.subr.mxu0 0.0
    %3329 = vmatpush1.msra.mxu0 0.0
    %3330 = vmatprep.subr.mxu0 0.0
    %3331 = vmatpush1.msra.mxu0 0.0
    %3332 = vmatprep.subr.mxu0 0.0
    %3333 = vmatpush1.msra.mxu0 0.0
    %3334 = vmatprep.subr.mxu0 0.0
    %3335 = vmatpush1.msra.mxu0 0.0
    %3336 = vmatprep.subr.mxu0 0.0
    %3337 = vmatpush1.msra.mxu0 0.0
    %3338 = vmatprep.mubr.f32.mxu0 0.0
    %3339 = vmatmul.mubr.f32.gmra.mrb[0].mxu0 %v3272
    %v3340 = vpop.f32.mrb[0].mxu0
    %v3341 = vadd.f32 %v3269, %v3340
    %v3342 = vpop.f32.mrb[0].mxu0
    %3343 = vdwg.mxu0
    %vm3344 = vcmp.ge.f32.partialorder %v3341, 0.0
    %v3345 = vsel %vm3344, 1.0, -1.0
    %3346 = vst [vmem:[#allocation2] sm:$0x3] %v3345
    // Predicated region
    $region22: #{geolocalization_net.1} parent=1 // pred_check
      _
    $region23: #{geolocalization_net.1} parent=1 // pred_check_branch
      %3348 = sbr.rel (0) target = $region25
    $region24: #{geolocalization_net.1} parent=1 // pred_region
      %s3350 = ssub.s32 32, 32
      %3351 = vsyncadd [#allocation3], %s3350
      %s3353 = sshll.u32 [#allocation2], 4
      %s3354 = int_to_ptr.vmem [resolvable:$true] %s3353
      %3356 = dma.vmem_to_hbm [thread:$0]  %s3354, 32, %s5, [#allocation3]
    $region25: #{geolocalization_net.1} parent=1 // pred_fallthru
      _
    // Predicated region
    $region26: #{geolocalization_net.1} parent=1 // pred_check
      _
    $region27: #{geolocalization_net.1} parent=1 // pred_check_branch
      %3358 = sbr.rel (0) target = $region29
    $region28: #{geolocalization_net.1} parent=1 // pred_region
      %3359 = dma.done [#allocation3], 32
    $region29: #{geolocalization_net.1} parent=1 // pred_fallthru
      _
    %3360 = vsyncpa [#allocation3], 1

</llo_original>
